<compile_context>
chip_gen: v7x
topology: tpu7x:2x2x1
jax: 0.10.0
libtpu: 0.0.40
codegen_flags: <defaults>
</compile_context>

<pallas_src>
import functools

import jax
import jax.numpy as jnp
from jax.experimental import pallas as pl
from jax.experimental.pallas import tpu as pltpu

C_IN = 1344
C_OUT = 224
EPS = 1e-3


def _pick_tile_p(p_total: int) -> int:
    for cand in (1024, 512, 256, 128):
        if p_total >= cand:
            return cand
    return p_total  # short spatial extent: whole dim in one block (allowed)


def _conv_stats_kernel(x_ref, w_ref, y_ref, sum_ref, sq_ref, *, tile_p, p_total):
    n = pl.program_id(0)
    p = pl.program_id(1)

    @pl.when((n == 0) & (p == 0))
    def _():
        sum_ref[...] = jnp.zeros_like(sum_ref)
        sq_ref[...] = jnp.zeros_like(sq_ref)

    x = x_ref[0]          # (Cin, tile_p)  bf16
    w = w_ref[...]        # (Cout, Cin)    bf16, VMEM-resident across the grid
    y = jnp.dot(w, x, preferred_element_type=jnp.float32)  # (Cout, tile_p) f32
    y_ref[0] = y

    # Mask columns past the true spatial extent (ragged last tile) before the
    # statistics reduction.  Use where (not multiply) so OOB garbage/NaN can't
    # pollute the sums.
    col = jax.lax.broadcasted_iota(jnp.int32, y.shape, 1) + p * tile_p
    y_m = jnp.where(col < p_total, y, 0.0)
    sum_ref[...] += jnp.sum(y_m, axis=1, keepdims=True)
    sq_ref[...] += jnp.sum(y_m * y_m, axis=1, keepdims=True)


def _bn_apply_kernel(y_ref, sum_ref, sq_ref, gamma_ref, beta_ref, o_ref, *, inv_count):
    mean = sum_ref[...] * inv_count                               # (Cout, 1)
    var = jnp.maximum(sq_ref[...] * inv_count - mean * mean, 0.0)  # clamp >= 0
    scale = gamma_ref[...] * jax.lax.rsqrt(var + EPS)             # (Cout, 1)
    shift = beta_ref[...] - mean * scale
    o_ref[0] = y_ref[0] * scale + shift                           # single FMA/elem


@jax.jit
def conv1x1_bn(x_nchw, weight_oi, gamma, beta):
    """Conv2d(1344->224, 1x1, bias=False) + BatchNorm2d(224, eps=1e-3, training).

    x_nchw:    (N, 1344, H, W) f32
    weight_oi: (224, 1344)     f32
    gamma/beta:(224,)          f32
    returns    (N, 224, H, W)  f32
    """
    n, cin, h, w = x_nchw.shape
    assert cin == C_IN
    p_total = h * w
    tile_p = _pick_tile_p(p_total)
    grid_p = pl.cdiv(p_total, tile_p)
    inv_count = 1.0 / float(n * p_total)

    # Free reshape (HW contiguous in NCHW); MXU operands in bf16, stats in f32.
    x_rows = x_nchw.reshape(n, C_IN, p_total).astype(jnp.bfloat16)
    w_mat = weight_oi.astype(jnp.bfloat16)                  # (Cout, Cin)
    gamma2 = gamma.reshape(C_OUT, 1).astype(jnp.float32)
    beta2 = beta.reshape(C_OUT, 1).astype(jnp.float32)

    # ---- Phase 1: tiled matmul + per-channel sum / sum-of-squares ----
    y, ch_sum, ch_sq = pl.pallas_call(
        functools.partial(_conv_stats_kernel, tile_p=tile_p, p_total=p_total),
        out_shape=(
            jax.ShapeDtypeStruct((n, C_OUT, p_total), jnp.float32),
            jax.ShapeDtypeStruct((C_OUT, 1), jnp.float32),
            jax.ShapeDtypeStruct((C_OUT, 1), jnp.float32),
        ),
        grid=(n, grid_p),
        in_specs=[
            pl.BlockSpec((1, C_IN, tile_p), lambda i, j: (i, 0, j)),
            pl.BlockSpec((C_OUT, C_IN), lambda i, j: (0, 0)),   # weight stays in VMEM
        ],
        out_specs=(
            pl.BlockSpec((1, C_OUT, tile_p), lambda i, j: (i, 0, j)),
            pl.BlockSpec((C_OUT, 1), lambda i, j: (0, 0)),      # sum accumulator
            pl.BlockSpec((C_OUT, 1), lambda i, j: (0, 0)),      # sumsq accumulator
        ),
        compiler_params=pltpu.CompilerParams(
            dimension_semantics=("arbitrary", "arbitrary"),
        ),
    )(x_rows, w_mat)

    # ---- Phase 2: BN folded into per-channel scale/shift, fully parallel ----
    out = pl.pallas_call(
        functools.partial(_bn_apply_kernel, inv_count=inv_count),
        out_shape=jax.ShapeDtypeStruct((n, C_OUT, p_total), jnp.float32),
        grid=(n, grid_p),
        in_specs=[
            pl.BlockSpec((1, C_OUT, tile_p), lambda i, j: (i, 0, j)),
            pl.BlockSpec((C_OUT, 1), lambda i, j: (0, 0)),
            pl.BlockSpec((C_OUT, 1), lambda i, j: (0, 0)),
            pl.BlockSpec((C_OUT, 1), lambda i, j: (0, 0)),
            pl.BlockSpec((C_OUT, 1), lambda i, j: (0, 0)),
        ],
        out_specs=pl.BlockSpec((1, C_OUT, tile_p), lambda i, j: (i, 0, j)),
        compiler_params=pltpu.CompilerParams(
            dimension_semantics=("parallel", "parallel"),
        ),
    )(y, ch_sum, ch_sq, gamma2, beta2)

    return out.reshape(n, C_OUT, h, w)


if __name__ == "__main__":
    key = jax.random.PRNGKey(0)
    k_x, k_w, k_g, k_b = jax.random.split(key, 4)

    # Module shapes: Conv2d(1344, 224, 1x1, bias=False) on a 14x14 feature map.
    N, H, W = 1, 14, 14
    x = jax.random.normal(k_x, (N, C_IN, H, W), dtype=jnp.float32)
    conv_w = jax.random.normal(k_w, (C_OUT, C_IN), dtype=jnp.float32) * 0.02
    # Perturbed affine params (deterministic) so the scale/shift path is tested.
    bn_gamma = 1.0 + 0.1 * jax.random.normal(k_g, (C_OUT,), dtype=jnp.float32)
    bn_beta = 0.1 * jax.random.normal(k_b, (C_OUT,), dtype=jnp.float32)

    out = conv1x1_bn(x, conv_w, bn_gamma, bn_beta)
    out = jax.block_until_ready(out)
    assert out.shape == (N, C_OUT, H, W)

    # Reference at the SAME MXU precision (bf16 operands, f32 accumulation) so
    # the tolerance is tight and cannot hide a bf16-cast regression.
    xr = x.reshape(N, C_IN, H * W).astype(jnp.bfloat16)
    wr = conv_w.astype(jnp.bfloat16)
    y_ref = jnp.einsum("oc,ncp->nop", wr, xr, preferred_element_type=jnp.float32)
    mean = jnp.mean(y_ref, axis=(0, 2), keepdims=True)
    var = jnp.mean((y_ref - mean) ** 2, axis=(0, 2), keepdims=True)
    ref = (y_ref - mean) * jax.lax.rsqrt(var + EPS) * bn_gamma.reshape(1, C_OUT, 1) \
        + bn_beta.reshape(1, C_OUT, 1)
    ref = ref.reshape(N, C_OUT, H, W)

    err = float(jnp.max(jnp.abs(out - ref)))
    assert err < 2e-3, f"max abs err {err}"

    print("KERNEL_OK")
</pallas_src>

<mosaic_0001>
module attributes {stable_mosaic.version = 11 : i64} {
  func.func @_conv_stats_kernel(%arg0: i32, %arg1: i32, %arg2: memref<1x1344x128xbf16, #tpu.memory_space<vmem>>, %arg3: memref<224x1344xbf16, #tpu.memory_space<vmem>>, %arg4: memref<1x224x128xf32, #tpu.memory_space<vmem>>, %arg5: memref<224x1xf32, #tpu.memory_space<vmem>>, %arg6: memref<224x1xf32, #tpu.memory_space<vmem>>) attributes {dimension_semantics = [#tpu.dimension_semantics<arbitrary>, #tpu.dimension_semantics<arbitrary>], iteration_bounds = array<i64: 1, 2>, scalar_prefetch = 0 : i64, scratch_operands = 0 : i64, tpu.core_type = #tpu.core_type<tc>, window_params = [{transform_indices = @transform_0, window_bounds = array<i64: 1, 1344, 128>}, {pipeline_mode = #tpu.pipeline_mode<synchronous>, transform_indices = @transform_1, window_bounds = array<i64: 224, 1344>}, {transform_indices = @transform_2, window_bounds = array<i64: 1, 224, 128>}, {pipeline_mode = #tpu.pipeline_mode<synchronous>, transform_indices = @transform_3, window_bounds = array<i64: 224, 1>}, {pipeline_mode = #tpu.pipeline_mode<synchronous>, transform_indices = @transform_4, window_bounds = array<i64: 224, 1>}]} {
    %c0_i32 = arith.constant 0 : i32
    %0 = arith.cmpi eq, %arg0, %c0_i32 : i32
    %c0_i32_0 = arith.constant 0 : i32
    %1 = arith.cmpi eq, %arg1, %c0_i32_0 : i32
    %2 = arith.andi %0, %1 : i1
    %3 = arith.extui %2 : i1 to i32
    %c0_i32_1 = arith.constant 0 : i32
    %4 = arith.cmpi ne, %3, %c0_i32_1 : i32
    scf.if %4 {
      %cst_20 = arith.constant 0.000000e+00 : f32
      %31 = vector.broadcast %cst_20 : f32 to vector<224x1xf32>
      %c0_21 = arith.constant 0 : index
      %c0_22 = arith.constant 0 : index
      %32 = vector.load %arg5[%c0_21, %c0_22] : memref<224x1xf32, #tpu.memory_space<vmem>>, vector<224x1xf32>
      tpu.vector_store %arg5[%c0_21, %c0_22], %31 {strides = array<i32>} : memref<224x1xf32, #tpu.memory_space<vmem>>, vector<224x1xf32>,
      %cst_23 = arith.constant 0.000000e+00 : f32
      %33 = vector.broadcast %cst_23 : f32 to vector<224x1xf32>
      %c0_24 = arith.constant 0 : index
      %c0_25 = arith.constant 0 : index
      %34 = vector.load %arg6[%c0_24, %c0_25] : memref<224x1xf32, #tpu.memory_space<vmem>>, vector<224x1xf32>
      tpu.vector_store %arg6[%c0_24, %c0_25], %33 {strides = array<i32>} : memref<224x1xf32, #tpu.memory_space<vmem>>, vector<224x1xf32>,
    } else {
    }
    %c0 = arith.constant 0 : index
    %c0_2 = arith.constant 0 : index
    %c0_3 = arith.constant 0 : index
    %5 = vector.load %arg2[%c0, %c0_2, %c0_3] : memref<1x1344x128xbf16, #tpu.memory_space<vmem>>, vector<1x1344x128xbf16>
    %6 = vector.shape_cast %5 : vector<1x1344x128xbf16> to vector<1344x128xbf16>
    %c0_4 = arith.constant 0 : index
    %c0_5 = arith.constant 0 : index
    %7 = vector.load %arg3[%c0_4, %c0_5] : memref<224x1344xbf16, #tpu.memory_space<vmem>>, vector<224x1344xbf16>
    %cst = arith.constant dense<0.000000e+00> : vector<224x128xf32>
    %8 = tpu.matmul %7, %6, %cst {dimension_numbers = #tpu.dot_dimension_numbers<[1], [0], [0], [1], [0, 0, 1, 1], [], []>} : vector<224x1344xbf16>, vector<1344x128xbf16>, vector<224x128xf32> -> vector<224x128xf32>
    %c0_6 = arith.constant 0 : index
    %c0_7 = arith.constant 0 : index
    %c0_8 = arith.constant 0 : index
    %9 = vector.load %arg4[%c0_6, %c0_7, %c0_8] : memref<1x224x128xf32, #tpu.memory_space<vmem>>, vector<1x224x128xf32>
    %10 = vector.shape_cast %9 : vector<1x224x128xf32> to vector<224x128xf32>
    %11 = vector.shape_cast %8 : vector<224x128xf32> to vector<1x224x128xf32>
    tpu.vector_store %arg4[%c0_6, %c0_7, %c0_8], %11 {strides = array<i32>} : memref<1x224x128xf32, #tpu.memory_space<vmem>>, vector<1x224x128xf32>,
    %12 = tpu.iota {dimensions = array<i32: 1>} : vector<224x128xi32>
    %c128_i32 = arith.constant 128 : i32
    %13 = arith.muli %arg1, %c128_i32 : i32
    %14 = vector.broadcast %13 : i32 to vector<224x128xi32>
    %15 = arith.addi %12, %14 : vector<224x128xi32>
    %c196_i32 = arith.constant 196 : i32
    %16 = vector.broadcast %c196_i32 : i32 to vector<224x128xi32>
    %17 = arith.cmpi slt, %15, %16 : vector<224x128xi32>
    %cst_9 = arith.constant 0.000000e+00 : f32
    %18 = vector.broadcast %cst_9 : f32 to vector<224x128xf32>
    %19 = arith.select %17, %8, %18 : vector<224x128xi1>, vector<224x128xf32>
    %c0_10 = arith.constant 0 : index
    %c0_11 = arith.constant 0 : index
    %20 = vector.load %arg5[%c0_10, %c0_11] : memref<224x1xf32, #tpu.memory_space<vmem>>, vector<224x1xf32>
    %cst_12 = arith.constant dense<0.000000e+00> : vector<224xf32>
    %21 = vector.multi_reduction <add>, %19, %cst_12 [1] : vector<224x128xf32> to vector<224xf32>
    %22 = vector.shape_cast %21 : vector<224xf32> to vector<224x1xf32>
    %23 = arith.addf %20, %22 : vector<224x1xf32>
    %c0_13 = arith.constant 0 : index
    %c0_14 = arith.constant 0 : index
    %24 = vector.load %arg5[%c0_13, %c0_14] : memref<224x1xf32, #tpu.memory_space<vmem>>, vector<224x1xf32>
    tpu.vector_store %arg5[%c0_13, %c0_14], %23 {strides = array<i32>} : memref<224x1xf32, #tpu.memory_space<vmem>>, vector<224x1xf32>,
    %c0_15 = arith.constant 0 : index
    %c0_16 = arith.constant 0 : index
    %25 = vector.load %arg6[%c0_15, %c0_16] : memref<224x1xf32, #tpu.memory_space<vmem>>, vector<224x1xf32>
    %26 = arith.mulf %19, %19 : vector<224x128xf32>
    %cst_17 = arith.constant dense<0.000000e+00> : vector<224xf32>
    %27 = vector.multi_reduction <add>, %26, %cst_17 [1] : vector<224x128xf32> to vector<224xf32>
    %28 = vector.shape_cast %27 : vector<224xf32> to vector<224x1xf32>
    %29 = arith.addf %25, %28 : vector<224x1xf32>
    %c0_18 = arith.constant 0 : index
    %c0_19 = arith.constant 0 : index
    %30 = vector.load %arg6[%c0_18, %c0_19] : memref<224x1xf32, #tpu.memory_space<vmem>>, vector<224x1xf32>
    tpu.vector_store %arg6[%c0_18, %c0_19], %29 {strides = array<i32>} : memref<224x1xf32, #tpu.memory_space<vmem>>, vector<224x1xf32>,
    return
  }
  func.func @transform_0(%arg0: i32, %arg1: i32) -> (i32, i32, i32) {
    %c0_i32 = arith.constant 0 : i32
    %c0_i32_0 = arith.constant 0 : i32
    return %arg0, %c0_i32, %arg1 : i32, i32, i32
  }
  func.func @transform_1(%arg0: i32, %arg1: i32) -> (i32, i32) {
    %c0_i32 = arith.constant 0 : i32
    %c0_i32_0 = arith.constant 0 : i32
    %c0_i32_1 = arith.constant 0 : i32
    return %c0_i32, %c0_i32_0 : i32, i32
  }
  func.func @transform_2(%arg0: i32, %arg1: i32) -> (i32, i32, i32) {
    %c0_i32 = arith.constant 0 : i32
    %c0_i32_0 = arith.constant 0 : i32
    return %arg0, %c0_i32, %arg1 : i32, i32, i32
  }
  func.func @transform_3(%arg0: i32, %arg1: i32) -> (i32, i32) {
    %c0_i32 = arith.constant 0 : i32
    %c0_i32_0 = arith.constant 0 : i32
    %c0_i32_1 = arith.constant 0 : i32
    return %c0_i32, %c0_i32_0 : i32, i32
  }
  func.func @transform_4(%arg0: i32, %arg1: i32) -> (i32, i32) {
    %c0_i32 = arith.constant 0 : i32
    %c0_i32_0 = arith.constant 0 : i32
    %c0_i32_1 = arith.constant 0 : i32
    return %c0_i32, %c0_i32_0 : i32, i32
  }
}

module attributes {stable_mosaic.version = 11 : i64} {
  func.func @_bn_apply_kernel(%arg0: i32, %arg1: i32, %arg2: memref<1x224x128xf32, #tpu.memory_space<vmem>>, %arg3: memref<224x1xf32, #tpu.memory_space<vmem>>, %arg4: memref<224x1xf32, #tpu.memory_space<vmem>>, %arg5: memref<224x1xf32, #tpu.memory_space<vmem>>, %arg6: memref<224x1xf32, #tpu.memory_space<vmem>>, %arg7: memref<1x224x128xf32, #tpu.memory_space<vmem>>) attributes {dimension_semantics = [#tpu.dimension_semantics<parallel>, #tpu.dimension_semantics<parallel>], iteration_bounds = array<i64: 1, 2>, scalar_prefetch = 0 : i64, scratch_operands = 0 : i64, tpu.core_type = #tpu.core_type<tc>, window_params = [{transform_indices = @transform_0, window_bounds = array<i64: 1, 224, 128>}, {pipeline_mode = #tpu.pipeline_mode<synchronous>, transform_indices = @transform_1, window_bounds = array<i64: 224, 1>}, {pipeline_mode = #tpu.pipeline_mode<synchronous>, transform_indices = @transform_2, window_bounds = array<i64: 224, 1>}, {pipeline_mode = #tpu.pipeline_mode<synchronous>, transform_indices = @transform_3, window_bounds = array<i64: 224, 1>}, {pipeline_mode = #tpu.pipeline_mode<synchronous>, transform_indices = @transform_4, window_bounds = array<i64: 224, 1>}, {transform_indices = @transform_5, window_bounds = array<i64: 1, 224, 128>}]} {
    %c0 = arith.constant 0 : index
    %c0_0 = arith.constant 0 : index
    %0 = vector.load %arg3[%c0, %c0_0] : memref<224x1xf32, #tpu.memory_space<vmem>>, vector<224x1xf32>
    %cst = arith.constant 0.00510204071 : f32
    %1 = vector.broadcast %cst : f32 to vector<224x1xf32>
    %2 = arith.mulf %0, %1 : vector<224x1xf32>
    %c0_1 = arith.constant 0 : index
    %c0_2 = arith.constant 0 : index
    %3 = vector.load %arg4[%c0_1, %c0_2] : memref<224x1xf32, #tpu.memory_space<vmem>>, vector<224x1xf32>
    %cst_3 = arith.constant 0.00510204071 : f32
    %4 = vector.broadcast %cst_3 : f32 to vector<224x1xf32>
    %5 = arith.mulf %3, %4 : vector<224x1xf32>
    %6 = arith.mulf %2, %2 : vector<224x1xf32>
    %7 = arith.subf %5, %6 : vector<224x1xf32>
    %cst_4 = arith.constant 0.000000e+00 : f32
    %8 = vector.broadcast %cst_4 : f32 to vector<224x1xf32>
    %9 = arith.maximumf %7, %8 : vector<224x1xf32>
    %c0_5 = arith.constant 0 : index
    %c0_6 = arith.constant 0 : index
    %10 = vector.load %arg5[%c0_5, %c0_6] : memref<224x1xf32, #tpu.memory_space<vmem>>, vector<224x1xf32>
    %cst_7 = arith.constant 1.000000e-03 : f32
    %11 = vector.broadcast %cst_7 : f32 to vector<224x1xf32>
    %12 = arith.addf %9, %11 : vector<224x1xf32>
    %13 = math.rsqrt %12 : vector<224x1xf32>
    %14 = arith.mulf %10, %13 : vector<224x1xf32>
    %c0_8 = arith.constant 0 : index
    %c0_9 = arith.constant 0 : index
    %15 = vector.load %arg6[%c0_8, %c0_9] : memref<224x1xf32, #tpu.memory_space<vmem>>, vector<224x1xf32>
    %16 = arith.mulf %2, %14 : vector<224x1xf32>
    %17 = arith.subf %15, %16 : vector<224x1xf32>
    %c0_10 = arith.constant 0 : index
    %c0_11 = arith.constant 0 : index
    %c0_12 = arith.constant 0 : index
    %18 = vector.load %arg2[%c0_10, %c0_11, %c0_12] : memref<1x224x128xf32, #tpu.memory_space<vmem>>, vector<1x224x128xf32>
    %19 = vector.shape_cast %18 : vector<1x224x128xf32> to vector<224x128xf32>
    %20 = vector.broadcast %14 : vector<224x1xf32> to vector<224x128xf32>
    %21 = arith.mulf %19, %20 : vector<224x128xf32>
    %22 = vector.broadcast %17 : vector<224x1xf32> to vector<224x128xf32>
    %23 = arith.addf %21, %22 : vector<224x128xf32>
    %c0_13 = arith.constant 0 : index
    %c0_14 = arith.constant 0 : index
    %c0_15 = arith.constant 0 : index
    %24 = vector.load %arg7[%c0_13, %c0_14, %c0_15] : memref<1x224x128xf32, #tpu.memory_space<vmem>>, vector<1x224x128xf32>
    %25 = vector.shape_cast %24 : vector<1x224x128xf32> to vector<224x128xf32>
    %26 = vector.shape_cast %23 : vector<224x128xf32> to vector<1x224x128xf32>
    tpu.vector_store %arg7[%c0_13, %c0_14, %c0_15], %26 {strides = array<i32>} : memref<1x224x128xf32, #tpu.memory_space<vmem>>, vector<1x224x128xf32>,
    return
  }
  func.func @transform_0(%arg0: i32, %arg1: i32) -> (i32, i32, i32) {
    %c0_i32 = arith.constant 0 : i32
    %c0_i32_0 = arith.constant 0 : i32
    return %arg0, %c0_i32, %arg1 : i32, i32, i32
  }
  func.func @transform_1(%arg0: i32, %arg1: i32) -> (i32, i32) {
    %c0_i32 = arith.constant 0 : i32
    %c0_i32_0 = arith.constant 0 : i32
    %c0_i32_1 = arith.constant 0 : i32
    return %c0_i32, %c0_i32_0 : i32, i32
  }
  func.func @transform_2(%arg0: i32, %arg1: i32) -> (i32, i32) {
    %c0_i32 = arith.constant 0 : i32
    %c0_i32_0 = arith.constant 0 : i32
    %c0_i32_1 = arith.constant 0 : i32
    return %c0_i32, %c0_i32_0 : i32, i32
  }
  func.func @transform_3(%arg0: i32, %arg1: i32) -> (i32, i32) {
    %c0_i32 = arith.constant 0 : i32
    %c0_i32_0 = arith.constant 0 : i32
    %c0_i32_1 = arith.constant 0 : i32
    return %c0_i32, %c0_i32_0 : i32, i32
  }
  func.func @transform_4(%arg0: i32, %arg1: i32) -> (i32, i32) {
    %c0_i32 = arith.constant 0 : i32
    %c0_i32_0 = arith.constant 0 : i32
    %c0_i32_1 = arith.constant 0 : i32
    return %c0_i32, %c0_i32_0 : i32, i32
  }
  func.func @transform_5(%arg0: i32, %arg1: i32) -> (i32, i32, i32) {
    %c0_i32 = arith.constant 0 : i32
    %c0_i32_0 = arith.constant 0 : i32
    return %arg0, %c0_i32, %arg1 : i32, i32, i32
  }
}

</mosaic_0001>

<llo_original>
// kernel: conv1x1_bn.3
$region0: #{conv1x1_bn.3}
  #allocation0 [shape = 'u32[]', space=smem, size = 0x4, offset = 0x4, fixed_abs, tag = 'smem constant byte address 0x4 - core index']
  #allocation1 [shape = 'u32[144,128]{1,0:T(1,128)}', space=vmem, size = 0x12000, scoped, tag = 'internal scratch']
  %s0 = inlined_call_operand.vmem [shape: f32[1,224,196], index: 0, kind: input, shape index: {}]
  %s1 = inlined_call_operand.vmem [shape: f32[224,1], index: 1, kind: input, shape index: {}]
  %s2 = inlined_call_operand.vmem [shape: f32[224,1], index: 2, kind: input, shape index: {}]
  %s3 = inlined_call_operand.vmem [shape: f32[224,1], index: 3, kind: input, shape index: {}]
  %s4 = inlined_call_operand.vmem [shape: f32[224,1], index: 4, kind: input, shape index: {}]
  %s5 = inlined_call_operand.vmem [shape: f32[1,224,196], index: 5, kind: output, shape index: {}]
  %s6 = sld [smem:[#allocation0]]
  $region125: #{conv1x1_bn.3} parent=0
    _
  %s8 = ssub.s32 1, %s6
  %s9 = scalar_select 0, %s8, %s6
  $region1: #{conv1x1_bn.3} parent=0
    #allocation2 [shape = 'u8[229376]{0}', space=vmem, size = 0x38000, scoped, tag = 'input window, operand 0']
    #allocation3 [shape = 'u8[229376]{0}', space=vmem, size = 0x38000, scoped, tag = 'output window, operand 0']
    loop: start=0, step=1, limit=4
    $region2: #{conv1x1_bn.3} parent=1 // loop_pre_header
      _
    $region3: #{conv1x1_bn.3} parent=1 // loop_header
      %s11 = sphi 0, %s15
      %p12 = scmp.ge.s32.totalorder %s11, 4
      %s18 = sphi 0, %s30
      %s19 = sphi 0, %s26
      %s20 = sphi 0, %s18
      %s21 = sphi 0, %s19
      %s22 = sphi 0, %s20
      %s23 = sphi 0, %s21
      %s35 = sphi 0, %s37
      %s38 = sphi 0, %s35
      %s39 = sphi 0, %s38
      %s55 = sphi 0, %s39
      %s59 = sphi 0, %s59
      %s61 = sphi 0, %s59
      %s62 = sphi 0, %s61
      %s76 = sphi 0, %s62
      %s80 = sphi 0, %s80
      %s82 = sphi 0, %s80
      %s83 = sphi 0, %s82
      %s97 = sphi 0, %s83
      %s101 = sphi 0, %s101
      %s103 = sphi 0, %s101
      %s104 = sphi 0, %s103
      %s118 = sphi 0, %s104
      %s122 = sphi 0, %s122
      %s124 = sphi 0, %s122
      %s125 = sphi 0, %s124
      %s139 = sphi 0, %s125
      %s147 = sphi 0, %s149
      %s150 = sphi 0, %s147
      %s151 = sphi 0, %s150
      %s167 = sphi 0, %s151
    $region4: #{conv1x1_bn.3} parent=1 // loop_header_branch
      %14 = sbr.rel (%p12) target = $region8
    $region5: #{conv1x1_bn.3} parent=1 // loop_body
      %s16 = ssub.s32 %s11, 1
      %s17 = ssub.s32 %s11, 2
      %s24 = sadd.s32 1, %s19
      %p25 = scmp.ge.s32.totalorder %s24, 2
      %s26 = scalar_select %p25, 0, %s24
      %s27 = sadd.s32 1, %s18
      %s28 = scalar_select %p25, %s27, %s18
      %p29 = scmp.ge.s32.totalorder %s28, 1
      %s30 = scalar_select %p29, 0, %s28
      %s31 = ssub.s32 %s18, %s30
      %s32 = ssub.s32 %s19, %s26
      %s33 = sor.u32 %s31, %s32
      %p34 = scmp.eq.s32.totalorder %s33, 0
      %s36 = sadd.s32 %s35, 1
      %s37 = scalar_select %p34, %s35, %s36
      %p40 = pneg %p34
      %p41 = scmp.eq.s32.totalorder %s11, 1
      %p42 = por %p40, %p41
      %p43 = scmp.ne.s32.totalorder %s35, %s38
      %p44 = scmp.eq.s32.totalorder %s11, 0
      %p45 = por %p43, %p44
      %p46 = scmp.ne.s32.totalorder %s35, %s38
      %p47 = scmp.eq.s32.totalorder %s16, 1
      %p48 = por %p46, %p47
      %p49 = scmp.ne.s32.totalorder %s38, %s39
      %p50 = scmp.eq.s32.totalorder %s16, 0
      %p51 = por %p49, %p50
      %p52 = scmp.ne.s32.totalorder %s38, %s39
      %p53 = scmp.eq.s32.totalorder %s17, 1
      %p54 = por %p52, %p53
      %p56 = scmp.ne.s32.totalorder %s39, %s55
      %p57 = scmp.eq.s32.totalorder %s17, 0
      %p58 = por %p56, %p57
      %s60 = sadd.s32 %s59, 1
      %p63 = scmp.eq.s32.totalorder %s11, 1
      %p64 = scmp.ne.s32.totalorder %s59, %s61
      %p65 = scmp.eq.s32.totalorder %s11, 0
      %p66 = por %p64, %p65
      %p67 = scmp.ne.s32.totalorder %s59, %s61
      %p68 = scmp.eq.s32.totalorder %s16, 1
      %p69 = por %p67, %p68
      %p70 = scmp.ne.s32.totalorder %s61, %s62
      %p71 = scmp.eq.s32.totalorder %s16, 0
      %p72 = por %p70, %p71
      %p73 = scmp.ne.s32.totalorder %s61, %s62
      %p74 = scmp.eq.s32.totalorder %s17, 1
      %p75 = por %p73, %p74
      %p77 = scmp.ne.s32.totalorder %s62, %s76
      %p78 = scmp.eq.s32.totalorder %s17, 0
      %p79 = por %p77, %p78
      %s81 = sadd.s32 %s80, 1
      %p84 = scmp.eq.s32.totalorder %s11, 1
      %p85 = scmp.ne.s32.totalorder %s80, %s82
      %p86 = scmp.eq.s32.totalorder %s11, 0
      %p87 = por %p85, %p86
      %p88 = scmp.ne.s32.totalorder %s80, %s82
      %p89 = scmp.eq.s32.totalorder %s16, 1
      %p90 = por %p88, %p89
      %p91 = scmp.ne.s32.totalorder %s82, %s83
      %p92 = scmp.eq.s32.totalorder %s16, 0
      %p93 = por %p91, %p92
      %p94 = scmp.ne.s32.totalorder %s82, %s83
      %p95 = scmp.eq.s32.totalorder %s17, 1
      %p96 = por %p94, %p95
      %p98 = scmp.ne.s32.totalorder %s83, %s97
      %p99 = scmp.eq.s32.totalorder %s17, 0
      %p100 = por %p98, %p99
      %s102 = sadd.s32 %s101, 1
      %p105 = scmp.eq.s32.totalorder %s11, 1
      %p106 = scmp.ne.s32.totalorder %s101, %s103
      %p107 = scmp.eq.s32.totalorder %s11, 0
      %p108 = por %p106, %p107
      %p109 = scmp.ne.s32.totalorder %s101, %s103
      %p110 = scmp.eq.s32.totalorder %s16, 1
      %p111 = por %p109, %p110
      %p112 = scmp.ne.s32.totalorder %s103, %s104
      %p113 = scmp.eq.s32.totalorder %s16, 0
      %p114 = por %p112, %p113
      %p115 = scmp.ne.s32.totalorder %s103, %s104
      %p116 = scmp.eq.s32.totalorder %s17, 1
      %p117 = por %p115, %p116
      %p119 = scmp.ne.s32.totalorder %s104, %s118
      %p120 = scmp.eq.s32.totalorder %s17, 0
      %p121 = por %p119, %p120
      %s123 = sadd.s32 %s122, 1
      %p126 = scmp.eq.s32.totalorder %s11, 1
      %p127 = scmp.ne.s32.totalorder %s122, %s124
      %p128 = scmp.eq.s32.totalorder %s11, 0
      %p129 = por %p127, %p128
      %p130 = scmp.ne.s32.totalorder %s122, %s124
      %p131 = scmp.eq.s32.totalorder %s16, 1
      %p132 = por %p130, %p131
      %p133 = scmp.ne.s32.totalorder %s124, %s125
      %p134 = scmp.eq.s32.totalorder %s16, 0
      %p135 = por %p133, %p134
      %p136 = scmp.ne.s32.totalorder %s124, %s125
      %p137 = scmp.eq.s32.totalorder %s17, 1
      %p138 = por %p136, %p137
      %p140 = scmp.ne.s32.totalorder %s125, %s139
      %p141 = scmp.eq.s32.totalorder %s17, 0
      %p142 = por %p140, %p141
      %s143 = ssub.s32 %s18, %s30
      %s144 = ssub.s32 %s19, %s26
      %s145 = sor.u32 %s143, %s144
      %p146 = scmp.eq.s32.totalorder %s145, 0
      %s148 = sadd.s32 %s147, 1
      %s149 = scalar_select %p146, %s147, %s148
      %p152 = pneg %p146
      %p153 = scmp.eq.s32.totalorder %s11, 1
      %p154 = por %p152, %p153
      %p155 = scmp.ne.s32.totalorder %s147, %s150
      %p156 = scmp.eq.s32.totalorder %s11, 0
      %p157 = por %p155, %p156
      %p158 = scmp.ne.s32.totalorder %s147, %s150
      %p159 = scmp.eq.s32.totalorder %s16, 1
      %p160 = por %p158, %p159
      %p161 = scmp.ne.s32.totalorder %s150, %s151
      %p162 = scmp.eq.s32.totalorder %s16, 0
      %p163 = por %p161, %p162
      %p164 = scmp.ne.s32.totalorder %s150, %s151
      %p165 = scmp.eq.s32.totalorder %s17, 1
      %p166 = por %p164, %p165
      %p168 = scmp.ne.s32.totalorder %s151, %s167
      %p169 = scmp.eq.s32.totalorder %s17, 0
      %p170 = por %p168, %p169
      %p171 = scmp.le.s32.totalorder 1, %s11
      %p172 = scmp.lt.s32.totalorder %s11, 3
      %p173 = pnand %p171, %p172
      %p174 = pneg %p173
      // Predicated region
      $region9: #{conv1x1_bn.3} parent=5 // pred_check
        _
      $region10: #{conv1x1_bn.3} parent=5 // pred_check_branch
        %176 = sbr.rel (%p173) target = $region12
      $region11: #{conv1x1_bn.3} parent=5 // pred_region
        %s177 = ssub.s32 %s11, 1
        // Predicated region
        $region13: #{conv1x1_bn.3} parent=11 // pred_check
          %p178 = pneg %p72
        $region14: #{conv1x1_bn.3} parent=11 // pred_check_branch
          %180 = sbr.rel (%p178) target = $region16
        $region15: #{conv1x1_bn.3} parent=11 // pred_region
          _
        $region16: #{conv1x1_bn.3} parent=11 // pred_fallthru
          _
        // Predicated region
        $region17: #{conv1x1_bn.3} parent=11 // pred_check
          %p181 = pneg %p93
        $region18: #{conv1x1_bn.3} parent=11 // pred_check_branch
          %183 = sbr.rel (%p181) target = $region20
        $region19: #{conv1x1_bn.3} parent=11 // pred_region
          _
        $region20: #{conv1x1_bn.3} parent=11 // pred_fallthru
          _
        // Predicated region
        $region21: #{conv1x1_bn.3} parent=11 // pred_check
          %p184 = pneg %p114
        $region22: #{conv1x1_bn.3} parent=11 // pred_check_branch
          %186 = sbr.rel (%p184) target = $region24
        $region23: #{conv1x1_bn.3} parent=11 // pred_region
          _
        $region24: #{conv1x1_bn.3} parent=11 // pred_fallthru
          _
        // Predicated region
        $region25: #{conv1x1_bn.3} parent=11 // pred_check
          %p187 = pneg %p135
        $region26: #{conv1x1_bn.3} parent=11 // pred_check_branch
          %189 = sbr.rel (%p187) target = $region28
        $region27: #{conv1x1_bn.3} parent=11 // pred_region
          _
        $region28: #{conv1x1_bn.3} parent=11 // pred_fallthru
          _
      $region12: #{conv1x1_bn.3} parent=5 // pred_fallthru
        _
      %p190 = scmp.lt.s32.totalorder %s11, 2
      // Predicated region
      $region29: #{conv1x1_bn.3} parent=5 // pred_check
        %p191 = pneg %p190
      $region30: #{conv1x1_bn.3} parent=5 // pred_check_branch
        %193 = sbr.rel (%p191) target = $region32
      $region31: #{conv1x1_bn.3} parent=5 // pred_region
        // Predicated region
        $region33: #{conv1x1_bn.3} parent=31 // pred_check
          %p194 = pneg %p45
        $region34: #{conv1x1_bn.3} parent=31 // pred_check_branch
          %196 = sbr.rel (%p194) target = $region36
        $region35: #{conv1x1_bn.3} parent=31 // pred_region
          %s197 = sand.u32 %s35, 1
          %s198 = sand.u32 %s35, 1
          %s199 = smul.addr %s198, 224
          %s200 = scalar_lea.vmem [#allocation2], %s199
          %s201 = smul.addr %s18, 56
          %s202 = sadd.s32 %s19, %s201
          %s203 = smul.addr %s202, 8
          %s204 = scalar_lea.vmem %s0, %s203
          // Predicated region
          $region37: #{conv1x1_bn.3} parent=35 // pred_check
            _
          $region38: #{conv1x1_bn.3} parent=35 // pred_check_branch
            %206 = sbr.rel (0) target = $region40
          $region39: #{conv1x1_bn.3} parent=35 // pred_region
            // Predicated region
            $region41: #{conv1x1_bn.3} parent=39 // pred_check
              _
            $region42: #{conv1x1_bn.3} parent=39 // pred_check_branch
              %208 = sbr.rel (0) target = $region44
            $region43: #{conv1x1_bn.3} parent=39 // pred_region
              // Predicated region
              $region56: #{conv1x1_bn.3} parent=43 // pred_check
                _
              $region57: #{conv1x1_bn.3} parent=43 // pred_check_branch
                %277 = sbr.rel (0) target = $region59
              $region58: #{conv1x1_bn.3} parent=43 // pred_region
                loop: start=0, step=1, limit=1
                $region60: #{conv1x1_bn.3} parent=58 // loop_pre_header
                  _
                $region61: #{conv1x1_bn.3} parent=58 // loop_header
                  %s279 = sphi 0, %s283
                  %p280 = scmp.ge.s32.totalorder %s279, 1
                  %s284 = sphi %s204, %s204
                  %s285 = sphi %s200, %s200
                $region62: #{conv1x1_bn.3} parent=58 // loop_header_branch
                  %282 = sbr.rel (%p280) target = $region66
                $region63: #{conv1x1_bn.3} parent=58 // loop_body
                  %v286 = vld [vmem:[%s284] sm:$0xff]
                  %287 = vst [vmem:[%s285] sm:$0xff] %v286
                  %v288 = vld [vmem:[%s284 + $0x10] sm:$0xff]
                  %289 = vst [vmem:[%s285 + $0x8] sm:$0xff] %v288
                  %v290 = vld [vmem:[%s284 + $0x20] sm:$0xff]
                  %291 = vst [vmem:[%s285 + $0x10] sm:$0xff] %v290
                  %v292 = vld [vmem:[%s284 + $0x30] sm:$0xff]
                  %293 = vst [vmem:[%s285 + $0x18] sm:$0xff] %v292
                  %v294 = vld [vmem:[%s284 + $0x40] sm:$0xff]
                  %295 = vst [vmem:[%s285 + $0x20] sm:$0xff] %v294
                  %v296 = vld [vmem:[%s284 + $0x50] sm:$0xff]
                  %297 = vst [vmem:[%s285 + $0x28] sm:$0xff] %v296
                  %v298 = vld [vmem:[%s284 + $0x60] sm:$0xff]
                  %299 = vst [vmem:[%s285 + $0x30] sm:$0xff] %v298
                  %v300 = vld [vmem:[%s284 + $0x70] sm:$0xff]
                  %301 = vst [vmem:[%s285 + $0x38] sm:$0xff] %v300
                  %v302 = vld [vmem:[%s284 + $0x80] sm:$0xff]
                  %303 = vst [vmem:[%s285 + $0x40] sm:$0xff] %v302
                  %v304 = vld [vmem:[%s284 + $0x90] sm:$0xff]
                  %305 = vst [vmem:[%s285 + $0x48] sm:$0xff] %v304
                  %v306 = vld [vmem:[%s284 + $0xa0] sm:$0xff]
                  %307 = vst [vmem:[%s285 + $0x50] sm:$0xff] %v306
                  %v308 = vld [vmem:[%s284 + $0xb0] sm:$0xff]
                  %309 = vst [vmem:[%s285 + $0x58] sm:$0xff] %v308
                  %v310 = vld [vmem:[%s284 + $0xc0] sm:$0xff]
                  %311 = vst [vmem:[%s285 + $0x60] sm:$0xff] %v310
                  %v312 = vld [vmem:[%s284 + $0xd0] sm:$0xff]
                  %313 = vst [vmem:[%s285 + $0x68] sm:$0xff] %v312
                  %v314 = vld [vmem:[%s284 + $0xe0] sm:$0xff]
                  %315 = vst [vmem:[%s285 + $0x70] sm:$0xff] %v314
                  %v316 = vld [vmem:[%s284 + $0xf0] sm:$0xff]
                  %317 = vst [vmem:[%s285 + $0x78] sm:$0xff] %v316
                  %v318 = vld [vmem:[%s284 + $0x100] sm:$0xff]
                  %319 = vst [vmem:[%s285 + $0x80] sm:$0xff] %v318
                  %v320 = vld [vmem:[%s284 + $0x110] sm:$0xff]
                  %321 = vst [vmem:[%s285 + $0x88] sm:$0xff] %v320
                  %v322 = vld [vmem:[%s284 + $0x120] sm:$0xff]
                  %323 = vst [vmem:[%s285 + $0x90] sm:$0xff] %v322
                  %v324 = vld [vmem:[%s284 + $0x130] sm:$0xff]
                  %325 = vst [vmem:[%s285 + $0x98] sm:$0xff] %v324
                  %v326 = vld [vmem:[%s284 + $0x140] sm:$0xff]
                  %327 = vst [vmem:[%s285 + $0xa0] sm:$0xff] %v326
                  %v328 = vld [vmem:[%s284 + $0x150] sm:$0xff]
                  %329 = vst [vmem:[%s285 + $0xa8] sm:$0xff] %v328
                  %v330 = vld [vmem:[%s284 + $0x160] sm:$0xff]
                  %331 = vst [vmem:[%s285 + $0xb0] sm:$0xff] %v330
                  %v332 = vld [vmem:[%s284 + $0x170] sm:$0xff]
                  %333 = vst [vmem:[%s285 + $0xb8] sm:$0xff] %v332
                  %v334 = vld [vmem:[%s284 + $0x180] sm:$0xff]
                  %335 = vst [vmem:[%s285 + $0xc0] sm:$0xff] %v334
                  %v336 = vld [vmem:[%s284 + $0x190] sm:$0xff]
                  %337 = vst [vmem:[%s285 + $0xc8] sm:$0xff] %v336
                  %v338 = vld [vmem:[%s284 + $0x1a0] sm:$0xff]
                  %339 = vst [vmem:[%s285 + $0xd0] sm:$0xff] %v338
                  %v340 = vld [vmem:[%s284 + $0x1b0] sm:$0xff]
                  %341 = vst [vmem:[%s285 + $0xd8] sm:$0xff] %v340
                $region64: #{conv1x1_bn.3} parent=58 // loop_footer
                  %s283 = sadd.s32 1, %s279
                $region65: #{conv1x1_bn.3} parent=58 // loop_footer_branch
                  %278 = sbr.rel target = $region61
                $region66: #{conv1x1_bn.3} parent=58 // loop_exit
                  _
              $region59: #{conv1x1_bn.3} parent=43 // pred_fallthru
                _
              // Predicated region
              $region67: #{conv1x1_bn.3} parent=43 // pred_check
                _
              $region68: #{conv1x1_bn.3} parent=43 // pred_check_branch
                %343 = sbr.rel target = $region70
              $region69: #{conv1x1_bn.3} parent=43 // pred_region
                _
              $region70: #{conv1x1_bn.3} parent=43 // pred_fallthru
                _
            $region44: #{conv1x1_bn.3} parent=39 // pred_fallthru
              _
            // Predicated region
            $region45: #{conv1x1_bn.3} parent=39 // pred_check
              _
            $region46: #{conv1x1_bn.3} parent=39 // pred_check_branch
              %210 = sbr.rel target = $region48
            $region47: #{conv1x1_bn.3} parent=39 // pred_region
              loop: start=0, step=1, limit=1
              $region49: #{conv1x1_bn.3} parent=47 // loop_pre_header
                _
              $region50: #{conv1x1_bn.3} parent=47 // loop_header
                %s213 = sphi 0, %s217
                %p214 = scmp.ge.s32.totalorder %s213, 1
                %s218 = sphi %s204, %s204
                %s219 = sphi %s200, %s200
              $region51: #{conv1x1_bn.3} parent=47 // loop_header_branch
                %216 = sbr.rel (%p214) target = $region55
              $region52: #{conv1x1_bn.3} parent=47 // loop_body
                %v220 = vld [vmem:[%s218] sm:$0xff]
                %221 = vst [vmem:[%s219] sm:$0xff] %v220
                %v222 = vld [vmem:[%s218 + $0x10] sm:$0xff]
                %223 = vst [vmem:[%s219 + $0x8] sm:$0xff] %v222
                %v224 = vld [vmem:[%s218 + $0x20] sm:$0xff]
                %225 = vst [vmem:[%s219 + $0x10] sm:$0xff] %v224
                %v226 = vld [vmem:[%s218 + $0x30] sm:$0xff]
                %227 = vst [vmem:[%s219 + $0x18] sm:$0xff] %v226
                %v228 = vld [vmem:[%s218 + $0x40] sm:$0xff]
                %229 = vst [vmem:[%s219 + $0x20] sm:$0xff] %v228
                %v230 = vld [vmem:[%s218 + $0x50] sm:$0xff]
                %231 = vst [vmem:[%s219 + $0x28] sm:$0xff] %v230
                %v232 = vld [vmem:[%s218 + $0x60] sm:$0xff]
                %233 = vst [vmem:[%s219 + $0x30] sm:$0xff] %v232
                %v234 = vld [vmem:[%s218 + $0x70] sm:$0xff]
                %235 = vst [vmem:[%s219 + $0x38] sm:$0xff] %v234
                %v236 = vld [vmem:[%s218 + $0x80] sm:$0xff]
                %237 = vst [vmem:[%s219 + $0x40] sm:$0xff] %v236
                %v238 = vld [vmem:[%s218 + $0x90] sm:$0xff]
                %239 = vst [vmem:[%s219 + $0x48] sm:$0xff] %v238
                %v240 = vld [vmem:[%s218 + $0xa0] sm:$0xff]
                %241 = vst [vmem:[%s219 + $0x50] sm:$0xff] %v240
                %v242 = vld [vmem:[%s218 + $0xb0] sm:$0xff]
                %243 = vst [vmem:[%s219 + $0x58] sm:$0xff] %v242
                %v244 = vld [vmem:[%s218 + $0xc0] sm:$0xff]
                %245 = vst [vmem:[%s219 + $0x60] sm:$0xff] %v244
                %v246 = vld [vmem:[%s218 + $0xd0] sm:$0xff]
                %247 = vst [vmem:[%s219 + $0x68] sm:$0xff] %v246
                %v248 = vld [vmem:[%s218 + $0xe0] sm:$0xff]
                %249 = vst [vmem:[%s219 + $0x70] sm:$0xff] %v248
                %v250 = vld [vmem:[%s218 + $0xf0] sm:$0xff]
                %251 = vst [vmem:[%s219 + $0x78] sm:$0xff] %v250
                %v252 = vld [vmem:[%s218 + $0x100] sm:$0xff]
                %253 = vst [vmem:[%s219 + $0x80] sm:$0xff] %v252
                %v254 = vld [vmem:[%s218 + $0x110] sm:$0xff]
                %255 = vst [vmem:[%s219 + $0x88] sm:$0xff] %v254
                %v256 = vld [vmem:[%s218 + $0x120] sm:$0xff]
                %257 = vst [vmem:[%s219 + $0x90] sm:$0xff] %v256
                %v258 = vld [vmem:[%s218 + $0x130] sm:$0xff]
                %259 = vst [vmem:[%s219 + $0x98] sm:$0xff] %v258
                %v260 = vld [vmem:[%s218 + $0x140] sm:$0xff]
                %261 = vst [vmem:[%s219 + $0xa0] sm:$0xff] %v260
                %v262 = vld [vmem:[%s218 + $0x150] sm:$0xff]
                %263 = vst [vmem:[%s219 + $0xa8] sm:$0xff] %v262
                %v264 = vld [vmem:[%s218 + $0x160] sm:$0xff]
                %265 = vst [vmem:[%s219 + $0xb0] sm:$0xff] %v264
                %v266 = vld [vmem:[%s218 + $0x170] sm:$0xff]
                %267 = vst [vmem:[%s219 + $0xb8] sm:$0xff] %v266
                %v268 = vld [vmem:[%s218 + $0x180] sm:$0xff]
                %269 = vst [vmem:[%s219 + $0xc0] sm:$0xff] %v268
                %v270 = vld [vmem:[%s218 + $0x190] sm:$0xff]
                %271 = vst [vmem:[%s219 + $0xc8] sm:$0xff] %v270
                %v272 = vld [vmem:[%s218 + $0x1a0] sm:$0xff]
                %273 = vst [vmem:[%s219 + $0xd0] sm:$0xff] %v272
                %v274 = vld [vmem:[%s218 + $0x1b0] sm:$0xff]
                %275 = vst [vmem:[%s219 + $0xd8] sm:$0xff] %v274
              $region53: #{conv1x1_bn.3} parent=47 // loop_footer
                %s217 = sadd.s32 1, %s213
              $region54: #{conv1x1_bn.3} parent=47 // loop_footer_branch
                %212 = sbr.rel target = $region50
              $region55: #{conv1x1_bn.3} parent=47 // loop_exit
                _
            $region48: #{conv1x1_bn.3} parent=39 // pred_fallthru
              _
          $region40: #{conv1x1_bn.3} parent=35 // pred_fallthru
            _
          %344 = vnop
        $region36: #{conv1x1_bn.3} parent=31 // pred_fallthru
          _
      $region32: #{conv1x1_bn.3} parent=5 // pred_fallthru
        _
      %p345 = scmp.le.s32.totalorder 1, %s11
      %p346 = scmp.lt.s32.totalorder %s11, 3
      %p347 = pnand %p345, %p346
      %p348 = pneg %p347
      // Predicated region
      $region71: #{conv1x1_bn.3} parent=5 // pred_check
        _
      $region72: #{conv1x1_bn.3} parent=5 // pred_check_branch
        %350 = sbr.rel (%p347) target = $region74
      $region73: #{conv1x1_bn.3} parent=5 // pred_region
        %s351 = ssub.s32 %s11, 1
        %s352 = sand.u32 %s38, 1
        %s353 = sand.u32 %s38, 1
        %s354 = smul.addr %s353, 224
        %s355 = scalar_lea.vmem [#allocation2], %s354
        // Predicated region
        $region75: #{conv1x1_bn.3} parent=73 // pred_check
          %p356 = pneg %p51
        $region76: #{conv1x1_bn.3} parent=73 // pred_check_branch
          %358 = sbr.rel (%p356) target = $region78
        $region77: #{conv1x1_bn.3} parent=73 // pred_region
          _
        $region78: #{conv1x1_bn.3} parent=73 // pred_fallthru
          _
        %s359 = sand.u32 %s38, 1
        %s360 = sand.u32 %s38, 1
        %s361 = smul.addr %s360, 224
        %s362 = scalar_lea.vmem [#allocation2], %s361
        %p363 = pneg %p51
        %p364 = pneg %p48
        %p365 = pneg %p72
        %p366 = pneg %p69
        %p367 = pneg %p93
        %p368 = pneg %p90
        %p369 = pneg %p114
        %p370 = pneg %p111
        %p371 = pneg %p135
        %p372 = pneg %p132
        %p373 = pneg %p163
        %p374 = pneg %p160
        %s375 = sand.u32 %s150, 1
        %s376 = sand.u32 %s150, 1
        %s377 = smul.addr %s376, 224
        %s378 = scalar_lea.vmem [#allocation3], %s377
        %v379 = vld [vmem:[%s1] sm:$0xff]
        %v380 = vld [vmem:[%s1 + $0x8] sm:$0xff]
        %v381 = vld [vmem:[%s1 + $0x10] sm:$0xff]
        %v382 = vld [vmem:[%s1 + $0x18] sm:$0xff]
        %v383 = vld [vmem:[%s1 + $0x20] sm:$0xff]
        %v384 = vld [vmem:[%s1 + $0x28] sm:$0xff]
        %v385 = vld [vmem:[%s1 + $0x30] sm:$0xff]
        %v386 = vld [vmem:[%s1 + $0x38] sm:$0xff]
        %v387 = vld [vmem:[%s1 + $0x40] sm:$0xff]
        %v388 = vld [vmem:[%s1 + $0x48] sm:$0xff]
        %v389 = vld [vmem:[%s1 + $0x50] sm:$0xff]
        %v390 = vld [vmem:[%s1 + $0x58] sm:$0xff]
        %v391 = vld [vmem:[%s1 + $0x60] sm:$0xff]
        %v392 = vld [vmem:[%s1 + $0x68] sm:$0xff]
        %v393 = vld [vmem:[%s1 + $0x70] sm:$0xff]
        %v394 = vld [vmem:[%s1 + $0x78] sm:$0xff]
        %v395 = vld [vmem:[%s1 + $0x80] sm:$0xff]
        %v396 = vld [vmem:[%s1 + $0x88] sm:$0xff]
        %v397 = vld [vmem:[%s1 + $0x90] sm:$0xff]
        %v398 = vld [vmem:[%s1 + $0x98] sm:$0xff]
        %v399 = vld [vmem:[%s1 + $0xa0] sm:$0xff]
        %v400 = vld [vmem:[%s1 + $0xa8] sm:$0xff]
        %v401 = vld [vmem:[%s1 + $0xb0] sm:$0xff]
        %v402 = vld [vmem:[%s1 + $0xb8] sm:$0xff]
        %v403 = vld [vmem:[%s1 + $0xc0] sm:$0xff]
        %v404 = vld [vmem:[%s1 + $0xc8] sm:$0xff]
        %v405 = vld [vmem:[%s1 + $0xd0] sm:$0xff]
        %v406 = vld [vmem:[%s1 + $0xd8] sm:$0xff]
        %v407 = vmul.f32 %v379, 0.0051020407
        %v408 = vmul.f32 %v380, 0.0051020407
        %v409 = vmul.f32 %v381, 0.0051020407
        %v410 = vmul.f32 %v382, 0.0051020407
        %v411 = vmul.f32 %v383, 0.0051020407
        %v412 = vmul.f32 %v384, 0.0051020407
        %v413 = vmul.f32 %v385, 0.0051020407
        %v414 = vmul.f32 %v386, 0.0051020407
        %v415 = vmul.f32 %v387, 0.0051020407
        %v416 = vmul.f32 %v388, 0.0051020407
        %v417 = vmul.f32 %v389, 0.0051020407
        %v418 = vmul.f32 %v390, 0.0051020407
        %v419 = vmul.f32 %v391, 0.0051020407
        %v420 = vmul.f32 %v392, 0.0051020407
        %v421 = vmul.f32 %v393, 0.0051020407
        %v422 = vmul.f32 %v394, 0.0051020407
        %v423 = vmul.f32 %v395, 0.0051020407
        %v424 = vmul.f32 %v396, 0.0051020407
        %v425 = vmul.f32 %v397, 0.0051020407
        %v426 = vmul.f32 %v398, 0.0051020407
        %v427 = vmul.f32 %v399, 0.0051020407
        %v428 = vmul.f32 %v400, 0.0051020407
        %v429 = vmul.f32 %v401, 0.0051020407
        %v430 = vmul.f32 %v402, 0.0051020407
        %v431 = vmul.f32 %v403, 0.0051020407
        %v432 = vmul.f32 %v404, 0.0051020407
        %v433 = vmul.f32 %v405, 0.0051020407
        %v434 = vmul.f32 %v406, 0.0051020407
        %v435 = vld [vmem:[%s2] sm:$0xff]
        %v436 = vld [vmem:[%s2 + $0x8] sm:$0xff]
        %v437 = vld [vmem:[%s2 + $0x10] sm:$0xff]
        %v438 = vld [vmem:[%s2 + $0x18] sm:$0xff]
        %v439 = vld [vmem:[%s2 + $0x20] sm:$0xff]
        %v440 = vld [vmem:[%s2 + $0x28] sm:$0xff]
        %v441 = vld [vmem:[%s2 + $0x30] sm:$0xff]
        %v442 = vld [vmem:[%s2 + $0x38] sm:$0xff]
        %v443 = vld [vmem:[%s2 + $0x40] sm:$0xff]
        %v444 = vld [vmem:[%s2 + $0x48] sm:$0xff]
        %v445 = vld [vmem:[%s2 + $0x50] sm:$0xff]
        %v446 = vld [vmem:[%s2 + $0x58] sm:$0xff]
        %v447 = vld [vmem:[%s2 + $0x60] sm:$0xff]
        %v448 = vld [vmem:[%s2 + $0x68] sm:$0xff]
        %v449 = vld [vmem:[%s2 + $0x70] sm:$0xff]
        %v450 = vld [vmem:[%s2 + $0x78] sm:$0xff]
        %v451 = vld [vmem:[%s2 + $0x80] sm:$0xff]
        %v452 = vld [vmem:[%s2 + $0x88] sm:$0xff]
        %v453 = vld [vmem:[%s2 + $0x90] sm:$0xff]
        %v454 = vld [vmem:[%s2 + $0x98] sm:$0xff]
        %v455 = vld [vmem:[%s2 + $0xa0] sm:$0xff]
        %v456 = vld [vmem:[%s2 + $0xa8] sm:$0xff]
        %v457 = vld [vmem:[%s2 + $0xb0] sm:$0xff]
        %v458 = vld [vmem:[%s2 + $0xb8] sm:$0xff]
        %v459 = vld [vmem:[%s2 + $0xc0] sm:$0xff]
        %v460 = vld [vmem:[%s2 + $0xc8] sm:$0xff]
        %v461 = vld [vmem:[%s2 + $0xd0] sm:$0xff]
        %v462 = vld [vmem:[%s2 + $0xd8] sm:$0xff]
        %v463 = vmul.f32 %v435, 0.0051020407
        %v464 = vmul.f32 %v436, 0.0051020407
        %v465 = vmul.f32 %v437, 0.0051020407
        %v466 = vmul.f32 %v438, 0.0051020407
        %v467 = vmul.f32 %v439, 0.0051020407
        %v468 = vmul.f32 %v440, 0.0051020407
        %v469 = vmul.f32 %v441, 0.0051020407
        %v470 = vmul.f32 %v442, 0.0051020407
        %v471 = vmul.f32 %v443, 0.0051020407
        %v472 = vmul.f32 %v444, 0.0051020407
        %v473 = vmul.f32 %v445, 0.0051020407
        %v474 = vmul.f32 %v446, 0.0051020407
        %v475 = vmul.f32 %v447, 0.0051020407
        %v476 = vmul.f32 %v448, 0.0051020407
        %v477 = vmul.f32 %v449, 0.0051020407
        %v478 = vmul.f32 %v450, 0.0051020407
        %v479 = vmul.f32 %v451, 0.0051020407
        %v480 = vmul.f32 %v452, 0.0051020407
        %v481 = vmul.f32 %v453, 0.0051020407
        %v482 = vmul.f32 %v454, 0.0051020407
        %v483 = vmul.f32 %v455, 0.0051020407
        %v484 = vmul.f32 %v456, 0.0051020407
        %v485 = vmul.f32 %v457, 0.0051020407
        %v486 = vmul.f32 %v458, 0.0051020407
        %v487 = vmul.f32 %v459, 0.0051020407
        %v488 = vmul.f32 %v460, 0.0051020407
        %v489 = vmul.f32 %v461, 0.0051020407
        %v490 = vmul.f32 %v462, 0.0051020407
        %v491 = vmul.f32 %v407, %v407
        %v492 = vmul.f32 %v408, %v408
        %v493 = vmul.f32 %v409, %v409
        %v494 = vmul.f32 %v410, %v410
        %v495 = vmul.f32 %v411, %v411
        %v496 = vmul.f32 %v412, %v412
        %v497 = vmul.f32 %v413, %v413
        %v498 = vmul.f32 %v414, %v414
        %v499 = vmul.f32 %v415, %v415
        %v500 = vmul.f32 %v416, %v416
        %v501 = vmul.f32 %v417, %v417
        %v502 = vmul.f32 %v418, %v418
        %v503 = vmul.f32 %v419, %v419
        %v504 = vmul.f32 %v420, %v420
        %v505 = vmul.f32 %v421, %v421
        %v506 = vmul.f32 %v422, %v422
        %v507 = vmul.f32 %v423, %v423
        %v508 = vmul.f32 %v424, %v424
        %v509 = vmul.f32 %v425, %v425
        %v510 = vmul.f32 %v426, %v426
        %v511 = vmul.f32 %v427, %v427
        %v512 = vmul.f32 %v428, %v428
        %v513 = vmul.f32 %v429, %v429
        %v514 = vmul.f32 %v430, %v430
        %v515 = vmul.f32 %v431, %v431
        %v516 = vmul.f32 %v432, %v432
        %v517 = vmul.f32 %v433, %v433
        %v518 = vmul.f32 %v434, %v434
        %v519 = vsub.f32 %v463, %v491
        %v520 = vsub.f32 %v464, %v492
        %v521 = vsub.f32 %v465, %v493
        %v522 = vsub.f32 %v466, %v494
        %v523 = vsub.f32 %v467, %v495
        %v524 = vsub.f32 %v468, %v496
        %v525 = vsub.f32 %v469, %v497
        %v526 = vsub.f32 %v470, %v498
        %v527 = vsub.f32 %v471, %v499
        %v528 = vsub.f32 %v472, %v500
        %v529 = vsub.f32 %v473, %v501
        %v530 = vsub.f32 %v474, %v502
        %v531 = vsub.f32 %v475, %v503
        %v532 = vsub.f32 %v476, %v504
        %v533 = vsub.f32 %v477, %v505
        %v534 = vsub.f32 %v478, %v506
        %v535 = vsub.f32 %v479, %v507
        %v536 = vsub.f32 %v480, %v508
        %v537 = vsub.f32 %v481, %v509
        %v538 = vsub.f32 %v482, %v510
        %v539 = vsub.f32 %v483, %v511
        %v540 = vsub.f32 %v484, %v512
        %v541 = vsub.f32 %v485, %v513
        %v542 = vsub.f32 %v486, %v514
        %v543 = vsub.f32 %v487, %v515
        %v544 = vsub.f32 %v488, %v516
        %v545 = vsub.f32 %v489, %v517
        %v546 = vsub.f32 %v490, %v518
        %v547 = vmax.f32 %v519, 0.0
        %v548 = vmax.f32 %v520, 0.0
        %v549 = vmax.f32 %v521, 0.0
        %v550 = vmax.f32 %v522, 0.0
        %v551 = vmax.f32 %v523, 0.0
        %v552 = vmax.f32 %v524, 0.0
        %v553 = vmax.f32 %v525, 0.0
        %v554 = vmax.f32 %v526, 0.0
        %v555 = vmax.f32 %v527, 0.0
        %v556 = vmax.f32 %v528, 0.0
        %v557 = vmax.f32 %v529, 0.0
        %v558 = vmax.f32 %v530, 0.0
        %v559 = vmax.f32 %v531, 0.0
        %v560 = vmax.f32 %v532, 0.0
        %v561 = vmax.f32 %v533, 0.0
        %v562 = vmax.f32 %v534, 0.0
        %v563 = vmax.f32 %v535, 0.0
        %v564 = vmax.f32 %v536, 0.0
        %v565 = vmax.f32 %v537, 0.0
        %v566 = vmax.f32 %v538, 0.0
        %v567 = vmax.f32 %v539, 0.0
        %v568 = vmax.f32 %v540, 0.0
        %v569 = vmax.f32 %v541, 0.0
        %v570 = vmax.f32 %v542, 0.0
        %v571 = vmax.f32 %v543, 0.0
        %v572 = vmax.f32 %v544, 0.0
        %v573 = vmax.f32 %v545, 0.0
        %v574 = vmax.f32 %v546, 0.0
        %v575 = vld [vmem:[%s3] sm:$0xff]
        %v576 = vld [vmem:[%s3 + $0x8] sm:$0xff]
        %v577 = vld [vmem:[%s3 + $0x10] sm:$0xff]
        %v578 = vld [vmem:[%s3 + $0x18] sm:$0xff]
        %v579 = vld [vmem:[%s3 + $0x20] sm:$0xff]
        %v580 = vld [vmem:[%s3 + $0x28] sm:$0xff]
        %v581 = vld [vmem:[%s3 + $0x30] sm:$0xff]
        %v582 = vld [vmem:[%s3 + $0x38] sm:$0xff]
        %v583 = vld [vmem:[%s3 + $0x40] sm:$0xff]
        %v584 = vld [vmem:[%s3 + $0x48] sm:$0xff]
        %v585 = vld [vmem:[%s3 + $0x50] sm:$0xff]
        %v586 = vld [vmem:[%s3 + $0x58] sm:$0xff]
        %v587 = vld [vmem:[%s3 + $0x60] sm:$0xff]
        %v588 = vld [vmem:[%s3 + $0x68] sm:$0xff]
        %v589 = vld [vmem:[%s3 + $0x70] sm:$0xff]
        %v590 = vld [vmem:[%s3 + $0x78] sm:$0xff]
        %v591 = vld [vmem:[%s3 + $0x80] sm:$0xff]
        %v592 = vld [vmem:[%s3 + $0x88] sm:$0xff]
        %v593 = vld [vmem:[%s3 + $0x90] sm:$0xff]
        %v594 = vld [vmem:[%s3 + $0x98] sm:$0xff]
        %v595 = vld [vmem:[%s3 + $0xa0] sm:$0xff]
        %v596 = vld [vmem:[%s3 + $0xa8] sm:$0xff]
        %v597 = vld [vmem:[%s3 + $0xb0] sm:$0xff]
        %v598 = vld [vmem:[%s3 + $0xb8] sm:$0xff]
        %v599 = vld [vmem:[%s3 + $0xc0] sm:$0xff]
        %v600 = vld [vmem:[%s3 + $0xc8] sm:$0xff]
        %v601 = vld [vmem:[%s3 + $0xd0] sm:$0xff]
        %v602 = vld [vmem:[%s3 + $0xd8] sm:$0xff]
        %v603 = vadd.f32 %v547, 0.001
        %v604 = vadd.f32 %v548, 0.001
        %v605 = vadd.f32 %v549, 0.001
        %v606 = vadd.f32 %v550, 0.001
        %v607 = vadd.f32 %v551, 0.001
        %v608 = vadd.f32 %v552, 0.001
        %v609 = vadd.f32 %v553, 0.001
        %v610 = vadd.f32 %v554, 0.001
        %v611 = vadd.f32 %v555, 0.001
        %v612 = vadd.f32 %v556, 0.001
        %v613 = vadd.f32 %v557, 0.001
        %v614 = vadd.f32 %v558, 0.001
        %v615 = vadd.f32 %v559, 0.001
        %v616 = vadd.f32 %v560, 0.001
        %v617 = vadd.f32 %v561, 0.001
        %v618 = vadd.f32 %v562, 0.001
        %v619 = vadd.f32 %v563, 0.001
        %v620 = vadd.f32 %v564, 0.001
        %v621 = vadd.f32 %v565, 0.001
        %v622 = vadd.f32 %v566, 0.001
        %v623 = vadd.f32 %v567, 0.001
        %v624 = vadd.f32 %v568, 0.001
        %v625 = vadd.f32 %v569, 0.001
        %v626 = vadd.f32 %v570, 0.001
        %v627 = vadd.f32 %v571, 0.001
        %v628 = vadd.f32 %v572, 0.001
        %v629 = vadd.f32 %v573, 0.001
        %v630 = vadd.f32 %v574, 0.001
        %v631 = vrsqrt.pop %v603
        %v632 = vrsqrt.pop %v604
        %v633 = vrsqrt.pop %v605
        %v634 = vrsqrt.pop %v606
        %v635 = vrsqrt.pop %v607
        %v636 = vrsqrt.pop %v608
        %v637 = vrsqrt.pop %v609
        %v638 = vrsqrt.pop %v610
        %v639 = vrsqrt.pop %v611
        %v640 = vrsqrt.pop %v612
        %v641 = vrsqrt.pop %v613
        %v642 = vrsqrt.pop %v614
        %v643 = vrsqrt.pop %v615
        %v644 = vrsqrt.pop %v616
        %v645 = vrsqrt.pop %v617
        %v646 = vrsqrt.pop %v618
        %v647 = vrsqrt.pop %v619
        %v648 = vrsqrt.pop %v620
        %v649 = vrsqrt.pop %v621
        %v650 = vrsqrt.pop %v622
        %v651 = vrsqrt.pop %v623
        %v652 = vrsqrt.pop %v624
        %v653 = vrsqrt.pop %v625
        %v654 = vrsqrt.pop %v626
        %v655 = vrsqrt.pop %v627
        %v656 = vrsqrt.pop %v628
        %v657 = vrsqrt.pop %v629
        %v658 = vrsqrt.pop %v630
        %v659 = vmul.f32 %v575, %v631
        %v660 = vmul.f32 %v576, %v632
        %v661 = vmul.f32 %v577, %v633
        %v662 = vmul.f32 %v578, %v634
        %v663 = vmul.f32 %v579, %v635
        %v664 = vmul.f32 %v580, %v636
        %v665 = vmul.f32 %v581, %v637
        %v666 = vmul.f32 %v582, %v638
        %v667 = vmul.f32 %v583, %v639
        %v668 = vmul.f32 %v584, %v640
        %v669 = vmul.f32 %v585, %v641
        %v670 = vmul.f32 %v586, %v642
        %v671 = vmul.f32 %v587, %v643
        %v672 = vmul.f32 %v588, %v644
        %v673 = vmul.f32 %v589, %v645
        %v674 = vmul.f32 %v590, %v646
        %v675 = vmul.f32 %v591, %v647
        %v676 = vmul.f32 %v592, %v648
        %v677 = vmul.f32 %v593, %v649
        %v678 = vmul.f32 %v594, %v650
        %v679 = vmul.f32 %v595, %v651
        %v680 = vmul.f32 %v596, %v652
        %v681 = vmul.f32 %v597, %v653
        %v682 = vmul.f32 %v598, %v654
        %v683 = vmul.f32 %v599, %v655
        %v684 = vmul.f32 %v600, %v656
        %v685 = vmul.f32 %v601, %v657
        %v686 = vmul.f32 %v602, %v658
        %v687 = vld [vmem:[%s4] sm:$0xff]
        %v688 = vld [vmem:[%s4 + $0x8] sm:$0xff]
        %v689 = vld [vmem:[%s4 + $0x10] sm:$0xff]
        %v690 = vld [vmem:[%s4 + $0x18] sm:$0xff]
        %v691 = vld [vmem:[%s4 + $0x20] sm:$0xff]
        %v692 = vld [vmem:[%s4 + $0x28] sm:$0xff]
        %v693 = vld [vmem:[%s4 + $0x30] sm:$0xff]
        %v694 = vld [vmem:[%s4 + $0x38] sm:$0xff]
        %v695 = vld [vmem:[%s4 + $0x40] sm:$0xff]
        %v696 = vld [vmem:[%s4 + $0x48] sm:$0xff]
        %v697 = vld [vmem:[%s4 + $0x50] sm:$0xff]
        %v698 = vld [vmem:[%s4 + $0x58] sm:$0xff]
        %v699 = vld [vmem:[%s4 + $0x60] sm:$0xff]
        %v700 = vld [vmem:[%s4 + $0x68] sm:$0xff]
        %v701 = vld [vmem:[%s4 + $0x70] sm:$0xff]
        %v702 = vld [vmem:[%s4 + $0x78] sm:$0xff]
        %v703 = vld [vmem:[%s4 + $0x80] sm:$0xff]
        %v704 = vld [vmem:[%s4 + $0x88] sm:$0xff]
        %v705 = vld [vmem:[%s4 + $0x90] sm:$0xff]
        %v706 = vld [vmem:[%s4 + $0x98] sm:$0xff]
        %v707 = vld [vmem:[%s4 + $0xa0] sm:$0xff]
        %v708 = vld [vmem:[%s4 + $0xa8] sm:$0xff]
        %v709 = vld [vmem:[%s4 + $0xb0] sm:$0xff]
        %v710 = vld [vmem:[%s4 + $0xb8] sm:$0xff]
        %v711 = vld [vmem:[%s4 + $0xc0] sm:$0xff]
        %v712 = vld [vmem:[%s4 + $0xc8] sm:$0xff]
        %v713 = vld [vmem:[%s4 + $0xd0] sm:$0xff]
        %v714 = vld [vmem:[%s4 + $0xd8] sm:$0xff]
        %v715 = vmul.f32 %v407, %v659
        %v716 = vmul.f32 %v408, %v660
        %v717 = vmul.f32 %v409, %v661
        %v718 = vmul.f32 %v410, %v662
        %v719 = vmul.f32 %v411, %v663
        %v720 = vmul.f32 %v412, %v664
        %v721 = vmul.f32 %v413, %v665
        %v722 = vmul.f32 %v414, %v666
        %v723 = vmul.f32 %v415, %v667
        %v724 = vmul.f32 %v416, %v668
        %v725 = vmul.f32 %v417, %v669
        %v726 = vmul.f32 %v418, %v670
        %v727 = vmul.f32 %v419, %v671
        %v728 = vmul.f32 %v420, %v672
        %v729 = vmul.f32 %v421, %v673
        %v730 = vmul.f32 %v422, %v674
        %v731 = vmul.f32 %v423, %v675
        %v732 = vmul.f32 %v424, %v676
        %v733 = vmul.f32 %v425, %v677
        %v734 = vmul.f32 %v426, %v678
        %v735 = vmul.f32 %v427, %v679
        %v736 = vmul.f32 %v428, %v680
        %v737 = vmul.f32 %v429, %v681
        %v738 = vmul.f32 %v430, %v682
        %v739 = vmul.f32 %v431, %v683
        %v740 = vmul.f32 %v432, %v684
        %v741 = vmul.f32 %v433, %v685
        %v742 = vmul.f32 %v434, %v686
        %v743 = vsub.f32 %v687, %v715
        %v744 = vsub.f32 %v688, %v716
        %v745 = vsub.f32 %v689, %v717
        %v746 = vsub.f32 %v690, %v718
        %v747 = vsub.f32 %v691, %v719
        %v748 = vsub.f32 %v692, %v720
        %v749 = vsub.f32 %v693, %v721
        %v750 = vsub.f32 %v694, %v722
        %v751 = vsub.f32 %v695, %v723
        %v752 = vsub.f32 %v696, %v724
        %v753 = vsub.f32 %v697, %v725
        %v754 = vsub.f32 %v698, %v726
        %v755 = vsub.f32 %v699, %v727
        %v756 = vsub.f32 %v700, %v728
        %v757 = vsub.f32 %v701, %v729
        %v758 = vsub.f32 %v702, %v730
        %v759 = vsub.f32 %v703, %v731
        %v760 = vsub.f32 %v704, %v732
        %v761 = vsub.f32 %v705, %v733
        %v762 = vsub.f32 %v706, %v734
        %v763 = vsub.f32 %v707, %v735
        %v764 = vsub.f32 %v708, %v736
        %v765 = vsub.f32 %v709, %v737
        %v766 = vsub.f32 %v710, %v738
        %v767 = vsub.f32 %v711, %v739
        %v768 = vsub.f32 %v712, %v740
        %v769 = vsub.f32 %v713, %v741
        %v770 = vsub.f32 %v714, %v742
        %v771 = vld [vmem:[%s355] sm:$0xff]
        %v772 = vld [vmem:[%s355 + $0x8] sm:$0xff]
        %v773 = vld [vmem:[%s355 + $0x10] sm:$0xff]
        %v774 = vld [vmem:[%s355 + $0x18] sm:$0xff]
        %v775 = vld [vmem:[%s355 + $0x20] sm:$0xff]
        %v776 = vld [vmem:[%s355 + $0x28] sm:$0xff]
        %v777 = vld [vmem:[%s355 + $0x30] sm:$0xff]
        %v778 = vld [vmem:[%s355 + $0x38] sm:$0xff]
        %v779 = vld [vmem:[%s355 + $0x40] sm:$0xff]
        %v780 = vld [vmem:[%s355 + $0x48] sm:$0xff]
        %v781 = vld [vmem:[%s355 + $0x50] sm:$0xff]
        %v782 = vld [vmem:[%s355 + $0x58] sm:$0xff]
        %v783 = vld [vmem:[%s355 + $0x60] sm:$0xff]
        %v784 = vld [vmem:[%s355 + $0x68] sm:$0xff]
        %v785 = vld [vmem:[%s355 + $0x70] sm:$0xff]
        %v786 = vld [vmem:[%s355 + $0x78] sm:$0xff]
        %v787 = vld [vmem:[%s355 + $0x80] sm:$0xff]
        %v788 = vld [vmem:[%s355 + $0x88] sm:$0xff]
        %v789 = vld [vmem:[%s355 + $0x90] sm:$0xff]
        %v790 = vld [vmem:[%s355 + $0x98] sm:$0xff]
        %v791 = vld [vmem:[%s355 + $0xa0] sm:$0xff]
        %v792 = vld [vmem:[%s355 + $0xa8] sm:$0xff]
        %v793 = vld [vmem:[%s355 + $0xb0] sm:$0xff]
        %v794 = vld [vmem:[%s355 + $0xb8] sm:$0xff]
        %v795 = vld [vmem:[%s355 + $0xc0] sm:$0xff]
        %v796 = vld [vmem:[%s355 + $0xc8] sm:$0xff]
        %v797 = vld [vmem:[%s355 + $0xd0] sm:$0xff]
        %v798 = vld [vmem:[%s355 + $0xd8] sm:$0xff]
        %800 = vset.pattern.permute.xlu0 0
        %801 = vperm.xlu0 %800, %v659
        %v802 = vpop.permute.xlu0 %801
        %805 = vset.pattern.permute.xlu0 0
        %806 = vperm.xlu0 %805, %v660
        %v807 = vpop.permute.xlu0 %806
        %810 = vset.pattern.permute.xlu0 0
        %811 = vperm.xlu0 %810, %v661
        %v812 = vpop.permute.xlu0 %811
        %815 = vset.pattern.permute.xlu0 0
        %816 = vperm.xlu0 %815, %v662
        %v817 = vpop.permute.xlu0 %816
        %820 = vset.pattern.permute.xlu0 0
        %821 = vperm.xlu0 %820, %v663
        %v822 = vpop.permute.xlu0 %821
        %825 = vset.pattern.permute.xlu0 0
        %826 = vperm.xlu0 %825, %v664
        %v827 = vpop.permute.xlu0 %826
        %830 = vset.pattern.permute.xlu0 0
        %831 = vperm.xlu0 %830, %v665
        %v832 = vpop.permute.xlu0 %831
        %835 = vset.pattern.permute.xlu0 0
        %836 = vperm.xlu0 %835, %v666
        %v837 = vpop.permute.xlu0 %836
        %840 = vset.pattern.permute.xlu0 0
        %841 = vperm.xlu0 %840, %v667
        %v842 = vpop.permute.xlu0 %841
        %845 = vset.pattern.permute.xlu0 0
        %846 = vperm.xlu0 %845, %v668
        %v847 = vpop.permute.xlu0 %846
        %850 = vset.pattern.permute.xlu0 0
        %851 = vperm.xlu0 %850, %v669
        %v852 = vpop.permute.xlu0 %851
        %855 = vset.pattern.permute.xlu0 0
        %856 = vperm.xlu0 %855, %v670
        %v857 = vpop.permute.xlu0 %856
        %860 = vset.pattern.permute.xlu0 0
        %861 = vperm.xlu0 %860, %v671
        %v862 = vpop.permute.xlu0 %861
        %865 = vset.pattern.permute.xlu0 0
        %866 = vperm.xlu0 %865, %v672
        %v867 = vpop.permute.xlu0 %866
        %870 = vset.pattern.permute.xlu0 0
        %871 = vperm.xlu0 %870, %v673
        %v872 = vpop.permute.xlu0 %871
        %875 = vset.pattern.permute.xlu0 0
        %876 = vperm.xlu0 %875, %v674
        %v877 = vpop.permute.xlu0 %876
        %880 = vset.pattern.permute.xlu0 0
        %881 = vperm.xlu0 %880, %v675
        %v882 = vpop.permute.xlu0 %881
        %885 = vset.pattern.permute.xlu0 0
        %886 = vperm.xlu0 %885, %v676
        %v887 = vpop.permute.xlu0 %886
        %890 = vset.pattern.permute.xlu0 0
        %891 = vperm.xlu0 %890, %v677
        %v892 = vpop.permute.xlu0 %891
        %895 = vset.pattern.permute.xlu0 0
        %896 = vperm.xlu0 %895, %v678
        %v897 = vpop.permute.xlu0 %896
        %900 = vset.pattern.permute.xlu0 0
        %901 = vperm.xlu0 %900, %v679
        %v902 = vpop.permute.xlu0 %901
        %905 = vset.pattern.permute.xlu0 0
        %906 = vperm.xlu0 %905, %v680
        %v907 = vpop.permute.xlu0 %906
        %910 = vset.pattern.permute.xlu0 0
        %911 = vperm.xlu0 %910, %v681
        %v912 = vpop.permute.xlu0 %911
        %915 = vset.pattern.permute.xlu0 0
        %916 = vperm.xlu0 %915, %v682
        %v917 = vpop.permute.xlu0 %916
        %920 = vset.pattern.permute.xlu0 0
        %921 = vperm.xlu0 %920, %v683
        %v922 = vpop.permute.xlu0 %921
        %925 = vset.pattern.permute.xlu0 0
        %926 = vperm.xlu0 %925, %v684
        %v927 = vpop.permute.xlu0 %926
        %930 = vset.pattern.permute.xlu0 0
        %931 = vperm.xlu0 %930, %v685
        %v932 = vpop.permute.xlu0 %931
        %935 = vset.pattern.permute.xlu0 0
        %936 = vperm.xlu0 %935, %v686
        %v937 = vpop.permute.xlu0 %936
        %v939 = vmul.f32 %v771, %v802
        %v940 = vmul.f32 %v772, %v807
        %v941 = vmul.f32 %v773, %v812
        %v942 = vmul.f32 %v774, %v817
        %v943 = vmul.f32 %v775, %v822
        %v944 = vmul.f32 %v776, %v827
        %v945 = vmul.f32 %v777, %v832
        %v946 = vmul.f32 %v778, %v837
        %v947 = vmul.f32 %v779, %v842
        %v948 = vmul.f32 %v780, %v847
        %v949 = vmul.f32 %v781, %v852
        %v950 = vmul.f32 %v782, %v857
        %v951 = vmul.f32 %v783, %v862
        %v952 = vmul.f32 %v784, %v867
        %v953 = vmul.f32 %v785, %v872
        %v954 = vmul.f32 %v786, %v877
        %v955 = vmul.f32 %v787, %v882
        %v956 = vmul.f32 %v788, %v887
        %v957 = vmul.f32 %v789, %v892
        %v958 = vmul.f32 %v790, %v897
        %v959 = vmul.f32 %v791, %v902
        %v960 = vmul.f32 %v792, %v907
        %v961 = vmul.f32 %v793, %v912
        %v962 = vmul.f32 %v794, %v917
        %v963 = vmul.f32 %v795, %v922
        %v964 = vmul.f32 %v796, %v927
        %v965 = vmul.f32 %v797, %v932
        %v966 = vmul.f32 %v798, %v937
        %968 = vset.pattern.permute.xlu0 0
        %969 = vperm.xlu0 %968, %v743
        %v970 = vpop.permute.xlu0 %969
        %973 = vset.pattern.permute.xlu0 0
        %974 = vperm.xlu0 %973, %v744
        %v975 = vpop.permute.xlu0 %974
        %978 = vset.pattern.permute.xlu0 0
        %979 = vperm.xlu0 %978, %v745
        %v980 = vpop.permute.xlu0 %979
        %983 = vset.pattern.permute.xlu0 0
        %984 = vperm.xlu0 %983, %v746
        %v985 = vpop.permute.xlu0 %984
        %988 = vset.pattern.permute.xlu0 0
        %989 = vperm.xlu0 %988, %v747
        %v990 = vpop.permute.xlu0 %989
        %993 = vset.pattern.permute.xlu0 0
        %994 = vperm.xlu0 %993, %v748
        %v995 = vpop.permute.xlu0 %994
        %998 = vset.pattern.permute.xlu0 0
        %999 = vperm.xlu0 %998, %v749
        %v1000 = vpop.permute.xlu0 %999
        %1003 = vset.pattern.permute.xlu0 0
        %1004 = vperm.xlu0 %1003, %v750
        %v1005 = vpop.permute.xlu0 %1004
        %1008 = vset.pattern.permute.xlu0 0
        %1009 = vperm.xlu0 %1008, %v751
        %v1010 = vpop.permute.xlu0 %1009
        %1013 = vset.pattern.permute.xlu0 0
        %1014 = vperm.xlu0 %1013, %v752
        %v1015 = vpop.permute.xlu0 %1014
        %1018 = vset.pattern.permute.xlu0 0
        %1019 = vperm.xlu0 %1018, %v753
        %v1020 = vpop.permute.xlu0 %1019
        %1023 = vset.pattern.permute.xlu0 0
        %1024 = vperm.xlu0 %1023, %v754
        %v1025 = vpop.permute.xlu0 %1024
        %1028 = vset.pattern.permute.xlu0 0
        %1029 = vperm.xlu0 %1028, %v755
        %v1030 = vpop.permute.xlu0 %1029
        %1033 = vset.pattern.permute.xlu0 0
        %1034 = vperm.xlu0 %1033, %v756
        %v1035 = vpop.permute.xlu0 %1034
        %1038 = vset.pattern.permute.xlu0 0
        %1039 = vperm.xlu0 %1038, %v757
        %v1040 = vpop.permute.xlu0 %1039
        %1043 = vset.pattern.permute.xlu0 0
        %1044 = vperm.xlu0 %1043, %v758
        %v1045 = vpop.permute.xlu0 %1044
        %1048 = vset.pattern.permute.xlu0 0
        %1049 = vperm.xlu0 %1048, %v759
        %v1050 = vpop.permute.xlu0 %1049
        %1053 = vset.pattern.permute.xlu0 0
        %1054 = vperm.xlu0 %1053, %v760
        %v1055 = vpop.permute.xlu0 %1054
        %1058 = vset.pattern.permute.xlu0 0
        %1059 = vperm.xlu0 %1058, %v761
        %v1060 = vpop.permute.xlu0 %1059
        %1063 = vset.pattern.permute.xlu0 0
        %1064 = vperm.xlu0 %1063, %v762
        %v1065 = vpop.permute.xlu0 %1064
        %1068 = vset.pattern.permute.xlu0 0
        %1069 = vperm.xlu0 %1068, %v763
        %v1070 = vpop.permute.xlu0 %1069
        %1073 = vset.pattern.permute.xlu0 0
        %1074 = vperm.xlu0 %1073, %v764
        %v1075 = vpop.permute.xlu0 %1074
        %1078 = vset.pattern.permute.xlu0 0
        %1079 = vperm.xlu0 %1078, %v765
        %v1080 = vpop.permute.xlu0 %1079
        %1083 = vset.pattern.permute.xlu0 0
        %1084 = vperm.xlu0 %1083, %v766
        %v1085 = vpop.permute.xlu0 %1084
        %1088 = vset.pattern.permute.xlu0 0
        %1089 = vperm.xlu0 %1088, %v767
        %v1090 = vpop.permute.xlu0 %1089
        %1093 = vset.pattern.permute.xlu0 0
        %1094 = vperm.xlu0 %1093, %v768
        %v1095 = vpop.permute.xlu0 %1094
        %1098 = vset.pattern.permute.xlu0 0
        %1099 = vperm.xlu0 %1098, %v769
        %v1100 = vpop.permute.xlu0 %1099
        %1103 = vset.pattern.permute.xlu0 0
        %1104 = vperm.xlu0 %1103, %v770
        %v1105 = vpop.permute.xlu0 %1104
        %v1107 = vadd.f32 %v939, %v970
        %v1108 = vadd.f32 %v940, %v975
        %v1109 = vadd.f32 %v941, %v980
        %v1110 = vadd.f32 %v942, %v985
        %v1111 = vadd.f32 %v943, %v990
        %v1112 = vadd.f32 %v944, %v995
        %v1113 = vadd.f32 %v945, %v1000
        %v1114 = vadd.f32 %v946, %v1005
        %v1115 = vadd.f32 %v947, %v1010
        %v1116 = vadd.f32 %v948, %v1015
        %v1117 = vadd.f32 %v949, %v1020
        %v1118 = vadd.f32 %v950, %v1025
        %v1119 = vadd.f32 %v951, %v1030
        %v1120 = vadd.f32 %v952, %v1035
        %v1121 = vadd.f32 %v953, %v1040
        %v1122 = vadd.f32 %v954, %v1045
        %v1123 = vadd.f32 %v955, %v1050
        %v1124 = vadd.f32 %v956, %v1055
        %v1125 = vadd.f32 %v957, %v1060
        %v1126 = vadd.f32 %v958, %v1065
        %v1127 = vadd.f32 %v959, %v1070
        %v1128 = vadd.f32 %v960, %v1075
        %v1129 = vadd.f32 %v961, %v1080
        %v1130 = vadd.f32 %v962, %v1085
        %v1131 = vadd.f32 %v963, %v1090
        %v1132 = vadd.f32 %v964, %v1095
        %v1133 = vadd.f32 %v965, %v1100
        %v1134 = vadd.f32 %v966, %v1105
        %1135 = vst [vmem:[%s378] sm:$0xff] %v1107
        %1136 = vst [vmem:[%s378 + $0x8] sm:$0xff] %v1108
        %1137 = vst [vmem:[%s378 + $0x10] sm:$0xff] %v1109
        %1138 = vst [vmem:[%s378 + $0x18] sm:$0xff] %v1110
        %1139 = vst [vmem:[%s378 + $0x20] sm:$0xff] %v1111
        %1140 = vst [vmem:[%s378 + $0x28] sm:$0xff] %v1112
        %1141 = vst [vmem:[%s378 + $0x30] sm:$0xff] %v1113
        %1142 = vst [vmem:[%s378 + $0x38] sm:$0xff] %v1114
        %1143 = vst [vmem:[%s378 + $0x40] sm:$0xff] %v1115
        %1144 = vst [vmem:[%s378 + $0x48] sm:$0xff] %v1116
        %1145 = vst [vmem:[%s378 + $0x50] sm:$0xff] %v1117
        %1146 = vst [vmem:[%s378 + $0x58] sm:$0xff] %v1118
        %1147 = vst [vmem:[%s378 + $0x60] sm:$0xff] %v1119
        %1148 = vst [vmem:[%s378 + $0x68] sm:$0xff] %v1120
        %1149 = vst [vmem:[%s378 + $0x70] sm:$0xff] %v1121
        %1150 = vst [vmem:[%s378 + $0x78] sm:$0xff] %v1122
        %1151 = vst [vmem:[%s378 + $0x80] sm:$0xff] %v1123
        %1152 = vst [vmem:[%s378 + $0x88] sm:$0xff] %v1124
        %1153 = vst [vmem:[%s378 + $0x90] sm:$0xff] %v1125
        %1154 = vst [vmem:[%s378 + $0x98] sm:$0xff] %v1126
        %1155 = vst [vmem:[%s378 + $0xa0] sm:$0xff] %v1127
        %1156 = vst [vmem:[%s378 + $0xa8] sm:$0xff] %v1128
        %1157 = vst [vmem:[%s378 + $0xb0] sm:$0xff] %v1129
        %1158 = vst [vmem:[%s378 + $0xb8] sm:$0xff] %v1130
        %1159 = vst [vmem:[%s378 + $0xc0] sm:$0xff] %v1131
        %1160 = vst [vmem:[%s378 + $0xc8] sm:$0xff] %v1132
        %1161 = vst [vmem:[%s378 + $0xd0] sm:$0xff] %v1133
        %1162 = vst [vmem:[%s378 + $0xd8] sm:$0xff] %v1134
        %s1163 = sand.u32 %s150, 1
        %s1164 = sand.u32 %s150, 1
        %s1165 = smul.addr %s1164, 224
        %s1166 = scalar_lea.vmem [#allocation3], %s1165
        // Predicated region
        $region79: #{conv1x1_bn.3} parent=73 // pred_check
          %p1167 = pneg %p160
        $region80: #{conv1x1_bn.3} parent=73 // pred_check_branch
          %1169 = sbr.rel (%p1167) target = $region82
        $region81: #{conv1x1_bn.3} parent=73 // pred_region
          %s1170 = smul.addr %s20, 56
          %s1171 = sadd.s32 %s21, %s1170
          %s1172 = smul.addr %s1171, 8
          %s1173 = scalar_lea.vmem %s5, %s1172
          // Predicated region
          $region83: #{conv1x1_bn.3} parent=81 // pred_check
            _
          $region84: #{conv1x1_bn.3} parent=81 // pred_check_branch
            %1175 = sbr.rel (0) target = $region86
          $region85: #{conv1x1_bn.3} parent=81 // pred_region
            // Predicated region
            $region87: #{conv1x1_bn.3} parent=85 // pred_check
              _
            $region88: #{conv1x1_bn.3} parent=85 // pred_check_branch
              %1177 = sbr.rel (0) target = $region90
            $region89: #{conv1x1_bn.3} parent=85 // pred_region
              // Predicated region
              $region102: #{conv1x1_bn.3} parent=89 // pred_check
                _
              $region103: #{conv1x1_bn.3} parent=89 // pred_check_branch
                %1246 = sbr.rel (0) target = $region105
              $region104: #{conv1x1_bn.3} parent=89 // pred_region
                loop: start=0, step=1, limit=1
                $region106: #{conv1x1_bn.3} parent=104 // loop_pre_header
                  _
                $region107: #{conv1x1_bn.3} parent=104 // loop_header
                  %s1248 = sphi 0, %s1252
                  %p1249 = scmp.ge.s32.totalorder %s1248, 1
                  %s1253 = sphi %s1166, %s1166
                  %s1254 = sphi %s1173, %s1173
                $region108: #{conv1x1_bn.3} parent=104 // loop_header_branch
                  %1251 = sbr.rel (%p1249) target = $region112
                $region109: #{conv1x1_bn.3} parent=104 // loop_body
                  %v1255 = vld [vmem:[%s1253] sm:$0xff]
                  %1256 = vst [vmem:[%s1254] sm:$0xff] %v1255
                  %v1257 = vld [vmem:[%s1253 + $0x8] sm:$0xff]
                  %1258 = vst [vmem:[%s1254 + $0x10] sm:$0xff] %v1257
                  %v1259 = vld [vmem:[%s1253 + $0x10] sm:$0xff]
                  %1260 = vst [vmem:[%s1254 + $0x20] sm:$0xff] %v1259
                  %v1261 = vld [vmem:[%s1253 + $0x18] sm:$0xff]
                  %1262 = vst [vmem:[%s1254 + $0x30] sm:$0xff] %v1261
                  %v1263 = vld [vmem:[%s1253 + $0x20] sm:$0xff]
                  %1264 = vst [vmem:[%s1254 + $0x40] sm:$0xff] %v1263
                  %v1265 = vld [vmem:[%s1253 + $0x28] sm:$0xff]
                  %1266 = vst [vmem:[%s1254 + $0x50] sm:$0xff] %v1265
                  %v1267 = vld [vmem:[%s1253 + $0x30] sm:$0xff]
                  %1268 = vst [vmem:[%s1254 + $0x60] sm:$0xff] %v1267
                  %v1269 = vld [vmem:[%s1253 + $0x38] sm:$0xff]
                  %1270 = vst [vmem:[%s1254 + $0x70] sm:$0xff] %v1269
                  %v1271 = vld [vmem:[%s1253 + $0x40] sm:$0xff]
                  %1272 = vst [vmem:[%s1254 + $0x80] sm:$0xff] %v1271
                  %v1273 = vld [vmem:[%s1253 + $0x48] sm:$0xff]
                  %1274 = vst [vmem:[%s1254 + $0x90] sm:$0xff] %v1273
                  %v1275 = vld [vmem:[%s1253 + $0x50] sm:$0xff]
                  %1276 = vst [vmem:[%s1254 + $0xa0] sm:$0xff] %v1275
                  %v1277 = vld [vmem:[%s1253 + $0x58] sm:$0xff]
                  %1278 = vst [vmem:[%s1254 + $0xb0] sm:$0xff] %v1277
                  %v1279 = vld [vmem:[%s1253 + $0x60] sm:$0xff]
                  %1280 = vst [vmem:[%s1254 + $0xc0] sm:$0xff] %v1279
                  %v1281 = vld [vmem:[%s1253 + $0x68] sm:$0xff]
                  %1282 = vst [vmem:[%s1254 + $0xd0] sm:$0xff] %v1281
                  %v1283 = vld [vmem:[%s1253 + $0x70] sm:$0xff]
                  %1284 = vst [vmem:[%s1254 + $0xe0] sm:$0xff] %v1283
                  %v1285 = vld [vmem:[%s1253 + $0x78] sm:$0xff]
                  %1286 = vst [vmem:[%s1254 + $0xf0] sm:$0xff] %v1285
                  %v1287 = vld [vmem:[%s1253 + $0x80] sm:$0xff]
                  %1288 = vst [vmem:[%s1254 + $0x100] sm:$0xff] %v1287
                  %v1289 = vld [vmem:[%s1253 + $0x88] sm:$0xff]
                  %1290 = vst [vmem:[%s1254 + $0x110] sm:$0xff] %v1289
                  %v1291 = vld [vmem:[%s1253 + $0x90] sm:$0xff]
                  %1292 = vst [vmem:[%s1254 + $0x120] sm:$0xff] %v1291
                  %v1293 = vld [vmem:[%s1253 + $0x98] sm:$0xff]
                  %1294 = vst [vmem:[%s1254 + $0x130] sm:$0xff] %v1293
                  %v1295 = vld [vmem:[%s1253 + $0xa0] sm:$0xff]
                  %1296 = vst [vmem:[%s1254 + $0x140] sm:$0xff] %v1295
                  %v1297 = vld [vmem:[%s1253 + $0xa8] sm:$0xff]
                  %1298 = vst [vmem:[%s1254 + $0x150] sm:$0xff] %v1297
                  %v1299 = vld [vmem:[%s1253 + $0xb0] sm:$0xff]
                  %1300 = vst [vmem:[%s1254 + $0x160] sm:$0xff] %v1299
                  %v1301 = vld [vmem:[%s1253 + $0xb8] sm:$0xff]
                  %1302 = vst [vmem:[%s1254 + $0x170] sm:$0xff] %v1301
                  %v1303 = vld [vmem:[%s1253 + $0xc0] sm:$0xff]
                  %1304 = vst [vmem:[%s1254 + $0x180] sm:$0xff] %v1303
                  %v1305 = vld [vmem:[%s1253 + $0xc8] sm:$0xff]
                  %1306 = vst [vmem:[%s1254 + $0x190] sm:$0xff] %v1305
                  %v1307 = vld [vmem:[%s1253 + $0xd0] sm:$0xff]
                  %1308 = vst [vmem:[%s1254 + $0x1a0] sm:$0xff] %v1307
                  %v1309 = vld [vmem:[%s1253 + $0xd8] sm:$0xff]
                  %1310 = vst [vmem:[%s1254 + $0x1b0] sm:$0xff] %v1309
                $region110: #{conv1x1_bn.3} parent=104 // loop_footer
                  %s1252 = sadd.s32 1, %s1248
                $region111: #{conv1x1_bn.3} parent=104 // loop_footer_branch
                  %1247 = sbr.rel target = $region107
                $region112: #{conv1x1_bn.3} parent=104 // loop_exit
                  _
              $region105: #{conv1x1_bn.3} parent=89 // pred_fallthru
                _
              // Predicated region
              $region113: #{conv1x1_bn.3} parent=89 // pred_check
                _
              $region114: #{conv1x1_bn.3} parent=89 // pred_check_branch
                %1312 = sbr.rel target = $region116
              $region115: #{conv1x1_bn.3} parent=89 // pred_region
                _
              $region116: #{conv1x1_bn.3} parent=89 // pred_fallthru
                _
            $region90: #{conv1x1_bn.3} parent=85 // pred_fallthru
              _
            // Predicated region
            $region91: #{conv1x1_bn.3} parent=85 // pred_check
              _
            $region92: #{conv1x1_bn.3} parent=85 // pred_check_branch
              %1179 = sbr.rel target = $region94
            $region93: #{conv1x1_bn.3} parent=85 // pred_region
              loop: start=0, step=1, limit=1
              $region95: #{conv1x1_bn.3} parent=93 // loop_pre_header
                _
              $region96: #{conv1x1_bn.3} parent=93 // loop_header
                %s1182 = sphi 0, %s1186
                %p1183 = scmp.ge.s32.totalorder %s1182, 1
                %s1187 = sphi %s1166, %s1166
                %s1188 = sphi %s1173, %s1173
              $region97: #{conv1x1_bn.3} parent=93 // loop_header_branch
                %1185 = sbr.rel (%p1183) target = $region101
              $region98: #{conv1x1_bn.3} parent=93 // loop_body
                %v1189 = vld [vmem:[%s1187] sm:$0xff]
                %1190 = vst [vmem:[%s1188] sm:$0xff] %v1189
                %v1191 = vld [vmem:[%s1187 + $0x8] sm:$0xff]
                %1192 = vst [vmem:[%s1188 + $0x10] sm:$0xff] %v1191
                %v1193 = vld [vmem:[%s1187 + $0x10] sm:$0xff]
                %1194 = vst [vmem:[%s1188 + $0x20] sm:$0xff] %v1193
                %v1195 = vld [vmem:[%s1187 + $0x18] sm:$0xff]
                %1196 = vst [vmem:[%s1188 + $0x30] sm:$0xff] %v1195
                %v1197 = vld [vmem:[%s1187 + $0x20] sm:$0xff]
                %1198 = vst [vmem:[%s1188 + $0x40] sm:$0xff] %v1197
                %v1199 = vld [vmem:[%s1187 + $0x28] sm:$0xff]
                %1200 = vst [vmem:[%s1188 + $0x50] sm:$0xff] %v1199
                %v1201 = vld [vmem:[%s1187 + $0x30] sm:$0xff]
                %1202 = vst [vmem:[%s1188 + $0x60] sm:$0xff] %v1201
                %v1203 = vld [vmem:[%s1187 + $0x38] sm:$0xff]
                %1204 = vst [vmem:[%s1188 + $0x70] sm:$0xff] %v1203
                %v1205 = vld [vmem:[%s1187 + $0x40] sm:$0xff]
                %1206 = vst [vmem:[%s1188 + $0x80] sm:$0xff] %v1205
                %v1207 = vld [vmem:[%s1187 + $0x48] sm:$0xff]
                %1208 = vst [vmem:[%s1188 + $0x90] sm:$0xff] %v1207
                %v1209 = vld [vmem:[%s1187 + $0x50] sm:$0xff]
                %1210 = vst [vmem:[%s1188 + $0xa0] sm:$0xff] %v1209
                %v1211 = vld [vmem:[%s1187 + $0x58] sm:$0xff]
                %1212 = vst [vmem:[%s1188 + $0xb0] sm:$0xff] %v1211
                %v1213 = vld [vmem:[%s1187 + $0x60] sm:$0xff]
                %1214 = vst [vmem:[%s1188 + $0xc0] sm:$0xff] %v1213
                %v1215 = vld [vmem:[%s1187 + $0x68] sm:$0xff]
                %1216 = vst [vmem:[%s1188 + $0xd0] sm:$0xff] %v1215
                %v1217 = vld [vmem:[%s1187 + $0x70] sm:$0xff]
                %1218 = vst [vmem:[%s1188 + $0xe0] sm:$0xff] %v1217
                %v1219 = vld [vmem:[%s1187 + $0x78] sm:$0xff]
                %1220 = vst [vmem:[%s1188 + $0xf0] sm:$0xff] %v1219
                %v1221 = vld [vmem:[%s1187 + $0x80] sm:$0xff]
                %1222 = vst [vmem:[%s1188 + $0x100] sm:$0xff] %v1221
                %v1223 = vld [vmem:[%s1187 + $0x88] sm:$0xff]
                %1224 = vst [vmem:[%s1188 + $0x110] sm:$0xff] %v1223
                %v1225 = vld [vmem:[%s1187 + $0x90] sm:$0xff]
                %1226 = vst [vmem:[%s1188 + $0x120] sm:$0xff] %v1225
                %v1227 = vld [vmem:[%s1187 + $0x98] sm:$0xff]
                %1228 = vst [vmem:[%s1188 + $0x130] sm:$0xff] %v1227
                %v1229 = vld [vmem:[%s1187 + $0xa0] sm:$0xff]
                %1230 = vst [vmem:[%s1188 + $0x140] sm:$0xff] %v1229
                %v1231 = vld [vmem:[%s1187 + $0xa8] sm:$0xff]
                %1232 = vst [vmem:[%s1188 + $0x150] sm:$0xff] %v1231
                %v1233 = vld [vmem:[%s1187 + $0xb0] sm:$0xff]
                %1234 = vst [vmem:[%s1188 + $0x160] sm:$0xff] %v1233
                %v1235 = vld [vmem:[%s1187 + $0xb8] sm:$0xff]
                %1236 = vst [vmem:[%s1188 + $0x170] sm:$0xff] %v1235
                %v1237 = vld [vmem:[%s1187 + $0xc0] sm:$0xff]
                %1238 = vst [vmem:[%s1188 + $0x180] sm:$0xff] %v1237
                %v1239 = vld [vmem:[%s1187 + $0xc8] sm:$0xff]
                %1240 = vst [vmem:[%s1188 + $0x190] sm:$0xff] %v1239
                %v1241 = vld [vmem:[%s1187 + $0xd0] sm:$0xff]
                %1242 = vst [vmem:[%s1188 + $0x1a0] sm:$0xff] %v1241
                %v1243 = vld [vmem:[%s1187 + $0xd8] sm:$0xff]
                %1244 = vst [vmem:[%s1188 + $0x1b0] sm:$0xff] %v1243
              $region99: #{conv1x1_bn.3} parent=93 // loop_footer
                %s1186 = sadd.s32 1, %s1182
              $region100: #{conv1x1_bn.3} parent=93 // loop_footer_branch
                %1181 = sbr.rel target = $region96
              $region101: #{conv1x1_bn.3} parent=93 // loop_exit
                _
            $region94: #{conv1x1_bn.3} parent=85 // pred_fallthru
              _
          $region86: #{conv1x1_bn.3} parent=81 // pred_fallthru
            _
          %1313 = vnop
        $region82: #{conv1x1_bn.3} parent=73 // pred_fallthru
          _
      $region74: #{conv1x1_bn.3} parent=5 // pred_fallthru
        _
      %p1314 = scmp.le.s32.totalorder 2, %s11
      // Predicated region
      $region117: #{conv1x1_bn.3} parent=5 // pred_check
        %p1315 = pneg %p1314
      $region118: #{conv1x1_bn.3} parent=5 // pred_check_branch
        %1317 = sbr.rel (%p1315) target = $region120
      $region119: #{conv1x1_bn.3} parent=5 // pred_region
        %s1318 = ssub.s32 %s11, 2
        // Predicated region
        $region121: #{conv1x1_bn.3} parent=119 // pred_check
          %p1319 = pneg %p166
        $region122: #{conv1x1_bn.3} parent=119 // pred_check_branch
          %1321 = sbr.rel (%p1319) target = $region124
        $region123: #{conv1x1_bn.3} parent=119 // pred_region
          %s1322 = sand.u32 %s151, 1
          %s1323 = sand.u32 %s151, 1
          %s1324 = smul.addr %s1323, 224
          %s1325 = scalar_lea.vmem [#allocation3], %s1324
        $region124: #{conv1x1_bn.3} parent=119 // pred_fallthru
          _
      $region120: #{conv1x1_bn.3} parent=5 // pred_fallthru
        _
    $region6: #{conv1x1_bn.3} parent=1 // loop_footer
      %s15 = sadd.s32 1, %s11
    $region7: #{conv1x1_bn.3} parent=1 // loop_footer_branch
      %10 = sbr.rel target = $region3
    $region8: #{conv1x1_bn.3} parent=1 // loop_exit
      _

// kernel: conv1x1_bn.2
$region0: #{conv1x1_bn.2}
  #allocation0 [shape = 'u32[]', space=smem, size = 0x4, offset = 0x4, fixed_abs, tag = 'smem constant byte address 0x4 - core index']
  #allocation1 [shape = 'u32[144,128]{1,0:T(1,128)}', space=vmem, size = 0x12000, scoped, tag = 'internal scratch']
  %s0 = inlined_call_operand.vmem [shape: bf16[1,1344,196], index: 0, kind: input, shape index: {}]
  %s1 = inlined_call_operand.vmem [shape: bf16[224,1344], index: 1, kind: input, shape index: {}]
  %s2 = inlined_call_operand.vmem [shape: f32[1,224,196], index: 2, kind: output, shape index: {0}]
  %s3 = inlined_call_operand.vmem [shape: f32[224,1], index: 3, kind: output, shape index: {1}]
  %s4 = inlined_call_operand.vmem [shape: f32[224,1], index: 4, kind: output, shape index: {2}]
  %5 = xla_tuple %s2, %s3, %s4
  %s6 = sld [smem:[#allocation0]]
  $region136: #{conv1x1_bn.2} parent=0
    _
  %s8 = ssub.s32 1, %s6
  %s9 = scalar_select 0, %s8, %s6
  $region1: #{conv1x1_bn.2} parent=0
    #allocation2 [shape = 'u8[688128]{0}', space=vmem, size = 0xa8000, scoped, tag = 'input window, operand 0']
    #allocation3 [shape = 'u8[229376]{0}', space=vmem, size = 0x38000, scoped, tag = 'output window, operand 0']
    loop: start=0, step=1, limit=4
    $region2: #{conv1x1_bn.2} parent=1 // loop_pre_header
      _
    $region3: #{conv1x1_bn.2} parent=1 // loop_header
      %s11 = sphi 0, %s15
      %p12 = scmp.ge.s32.totalorder %s11, 4
      %s18 = sphi 0, %s30
      %s19 = sphi 0, %s26
      %s20 = sphi 0, %s18
      %s21 = sphi 0, %s19
      %s22 = sphi 0, %s20
      %s23 = sphi 0, %s21
      %s35 = sphi 0, %s37
      %s38 = sphi 0, %s35
      %s39 = sphi 0, %s38
      %s55 = sphi 0, %s39
      %s59 = sphi 0, %s59
      %s61 = sphi 0, %s59
      %s62 = sphi 0, %s61
      %s76 = sphi 0, %s62
      %s84 = sphi 0, %s86
      %s87 = sphi 0, %s84
      %s88 = sphi 0, %s87
      %s104 = sphi 0, %s88
      %s108 = sphi 0, %s108
      %s110 = sphi 0, %s108
      %s111 = sphi 0, %s110
      %s125 = sphi 0, %s111
      %s129 = sphi 0, %s129
      %s131 = sphi 0, %s129
      %s132 = sphi 0, %s131
      %s146 = sphi 0, %s132
    $region4: #{conv1x1_bn.2} parent=1 // loop_header_branch
      %14 = sbr.rel (%p12) target = $region8
    $region5: #{conv1x1_bn.2} parent=1 // loop_body
      %s16 = ssub.s32 %s11, 1
      %s17 = ssub.s32 %s11, 2
      %s24 = sadd.s32 1, %s19
      %p25 = scmp.ge.s32.totalorder %s24, 2
      %s26 = scalar_select %p25, 0, %s24
      %s27 = sadd.s32 1, %s18
      %s28 = scalar_select %p25, %s27, %s18
      %p29 = scmp.ge.s32.totalorder %s28, 1
      %s30 = scalar_select %p29, 0, %s28
      %s31 = ssub.s32 %s18, %s30
      %s32 = ssub.s32 %s19, %s26
      %s33 = sor.u32 %s31, %s32
      %p34 = scmp.eq.s32.totalorder %s33, 0
      %s36 = sadd.s32 %s35, 1
      %s37 = scalar_select %p34, %s35, %s36
      %p40 = pneg %p34
      %p41 = scmp.eq.s32.totalorder %s11, 1
      %p42 = por %p40, %p41
      %p43 = scmp.ne.s32.totalorder %s35, %s38
      %p44 = scmp.eq.s32.totalorder %s11, 0
      %p45 = por %p43, %p44
      %p46 = scmp.ne.s32.totalorder %s35, %s38
      %p47 = scmp.eq.s32.totalorder %s16, 1
      %p48 = por %p46, %p47
      %p49 = scmp.ne.s32.totalorder %s38, %s39
      %p50 = scmp.eq.s32.totalorder %s16, 0
      %p51 = por %p49, %p50
      %p52 = scmp.ne.s32.totalorder %s38, %s39
      %p53 = scmp.eq.s32.totalorder %s17, 1
      %p54 = por %p52, %p53
      %p56 = scmp.ne.s32.totalorder %s39, %s55
      %p57 = scmp.eq.s32.totalorder %s17, 0
      %p58 = por %p56, %p57
      %s60 = sadd.s32 %s59, 1
      %p63 = scmp.eq.s32.totalorder %s11, 1
      %p64 = scmp.ne.s32.totalorder %s59, %s61
      %p65 = scmp.eq.s32.totalorder %s11, 0
      %p66 = por %p64, %p65
      %p67 = scmp.ne.s32.totalorder %s59, %s61
      %p68 = scmp.eq.s32.totalorder %s16, 1
      %p69 = por %p67, %p68
      %p70 = scmp.ne.s32.totalorder %s61, %s62
      %p71 = scmp.eq.s32.totalorder %s16, 0
      %p72 = por %p70, %p71
      %p73 = scmp.ne.s32.totalorder %s61, %s62
      %p74 = scmp.eq.s32.totalorder %s17, 1
      %p75 = por %p73, %p74
      %p77 = scmp.ne.s32.totalorder %s62, %s76
      %p78 = scmp.eq.s32.totalorder %s17, 0
      %p79 = por %p77, %p78
      %s80 = ssub.s32 %s18, %s30
      %s81 = ssub.s32 %s19, %s26
      %s82 = sor.u32 %s80, %s81
      %p83 = scmp.eq.s32.totalorder %s82, 0
      %s85 = sadd.s32 %s84, 1
      %s86 = scalar_select %p83, %s84, %s85
      %p89 = pneg %p83
      %p90 = scmp.eq.s32.totalorder %s11, 1
      %p91 = por %p89, %p90
      %p92 = scmp.ne.s32.totalorder %s84, %s87
      %p93 = scmp.eq.s32.totalorder %s11, 0
      %p94 = por %p92, %p93
      %p95 = scmp.ne.s32.totalorder %s84, %s87
      %p96 = scmp.eq.s32.totalorder %s16, 1
      %p97 = por %p95, %p96
      %p98 = scmp.ne.s32.totalorder %s87, %s88
      %p99 = scmp.eq.s32.totalorder %s16, 0
      %p100 = por %p98, %p99
      %p101 = scmp.ne.s32.totalorder %s87, %s88
      %p102 = scmp.eq.s32.totalorder %s17, 1
      %p103 = por %p101, %p102
      %p105 = scmp.ne.s32.totalorder %s88, %s104
      %p106 = scmp.eq.s32.totalorder %s17, 0
      %p107 = por %p105, %p106
      %s109 = sadd.s32 %s108, 1
      %p112 = scmp.eq.s32.totalorder %s11, 1
      %p113 = scmp.ne.s32.totalorder %s108, %s110
      %p114 = scmp.eq.s32.totalorder %s11, 0
      %p115 = por %p113, %p114
      %p116 = scmp.ne.s32.totalorder %s108, %s110
      %p117 = scmp.eq.s32.totalorder %s16, 1
      %p118 = por %p116, %p117
      %p119 = scmp.ne.s32.totalorder %s110, %s111
      %p120 = scmp.eq.s32.totalorder %s16, 0
      %p121 = por %p119, %p120
      %p122 = scmp.ne.s32.totalorder %s110, %s111
      %p123 = scmp.eq.s32.totalorder %s17, 1
      %p124 = por %p122, %p123
      %p126 = scmp.ne.s32.totalorder %s111, %s125
      %p127 = scmp.eq.s32.totalorder %s17, 0
      %p128 = por %p126, %p127
      %s130 = sadd.s32 %s129, 1
      %p133 = scmp.eq.s32.totalorder %s11, 1
      %p134 = scmp.ne.s32.totalorder %s129, %s131
      %p135 = scmp.eq.s32.totalorder %s11, 0
      %p136 = por %p134, %p135
      %p137 = scmp.ne.s32.totalorder %s129, %s131
      %p138 = scmp.eq.s32.totalorder %s16, 1
      %p139 = por %p137, %p138
      %p140 = scmp.ne.s32.totalorder %s131, %s132
      %p141 = scmp.eq.s32.totalorder %s16, 0
      %p142 = por %p140, %p141
      %p143 = scmp.ne.s32.totalorder %s131, %s132
      %p144 = scmp.eq.s32.totalorder %s17, 1
      %p145 = por %p143, %p144
      %p147 = scmp.ne.s32.totalorder %s132, %s146
      %p148 = scmp.eq.s32.totalorder %s17, 0
      %p149 = por %p147, %p148
      %p150 = scmp.le.s32.totalorder 1, %s11
      %p151 = scmp.lt.s32.totalorder %s11, 3
      %p152 = pnand %p150, %p151
      %p153 = pneg %p152
      // Predicated region
      $region9: #{conv1x1_bn.2} parent=5 // pred_check
        _
      $region10: #{conv1x1_bn.2} parent=5 // pred_check_branch
        %155 = sbr.rel (%p152) target = $region12
      $region11: #{conv1x1_bn.2} parent=5 // pred_region
        %s156 = ssub.s32 %s11, 1
        // Predicated region
        $region13: #{conv1x1_bn.2} parent=11 // pred_check
          %p157 = pneg %p72
        $region14: #{conv1x1_bn.2} parent=11 // pred_check_branch
          %159 = sbr.rel (%p157) target = $region16
        $region15: #{conv1x1_bn.2} parent=11 // pred_region
          _
        $region16: #{conv1x1_bn.2} parent=11 // pred_fallthru
          _
      $region12: #{conv1x1_bn.2} parent=5 // pred_fallthru
        _
      %p160 = scmp.lt.s32.totalorder %s11, 2
      // Predicated region
      $region17: #{conv1x1_bn.2} parent=5 // pred_check
        %p161 = pneg %p160
      $region18: #{conv1x1_bn.2} parent=5 // pred_check_branch
        %163 = sbr.rel (%p161) target = $region20
      $region19: #{conv1x1_bn.2} parent=5 // pred_region
        // Predicated region
        $region21: #{conv1x1_bn.2} parent=19 // pred_check
          %p164 = pneg %p45
        $region22: #{conv1x1_bn.2} parent=19 // pred_check_branch
          %166 = sbr.rel (%p164) target = $region24
        $region23: #{conv1x1_bn.2} parent=19 // pred_region
          %s167 = sand.u32 %s35, 1
          %s168 = sand.u32 %s35, 1
          %s169 = smul.addr %s168, 672
          %s170 = scalar_lea.vmem [#allocation2], %s169
          %s171 = smul.addr %s18, 336
          %s172 = sadd.s32 %s19, %s171
          %s173 = smul.addr %s172, 4
          %s174 = scalar_lea.vmem %s0, %s173
          // Predicated region
          $region25: #{conv1x1_bn.2} parent=23 // pred_check
            _
          $region26: #{conv1x1_bn.2} parent=23 // pred_check_branch
            %176 = sbr.rel (0) target = $region28
          $region27: #{conv1x1_bn.2} parent=23 // pred_region
            // Predicated region
            $region29: #{conv1x1_bn.2} parent=27 // pred_check
              _
            $region30: #{conv1x1_bn.2} parent=27 // pred_check_branch
              %178 = sbr.rel target = $region32
            $region31: #{conv1x1_bn.2} parent=27 // pred_region
              // Predicated region
              $region44: #{conv1x1_bn.2} parent=31 // pred_check
                _
              $region45: #{conv1x1_bn.2} parent=31 // pred_check_branch
                %527 = sbr.rel (0) target = $region47
              $region46: #{conv1x1_bn.2} parent=31 // pred_region
                loop: start=0, step=1, limit=1
                $region48: #{conv1x1_bn.2} parent=46 // loop_pre_header
                  _
                $region49: #{conv1x1_bn.2} parent=46 // loop_header
                  %s529 = sphi 0, %s533
                  %p530 = scmp.ge.s32.totalorder %s529, 1
                  %s534 = sphi %s174, %s174
                  %s535 = sphi %s170, %s170
                $region50: #{conv1x1_bn.2} parent=46 // loop_header_branch
                  %532 = sbr.rel (%p530) target = $region54
                $region51: #{conv1x1_bn.2} parent=46 // loop_body
                  _
                $region52: #{conv1x1_bn.2} parent=46 // loop_footer
                  %s533 = sadd.s32 1, %s529
                $region53: #{conv1x1_bn.2} parent=46 // loop_footer_branch
                  %528 = sbr.rel target = $region49
                $region54: #{conv1x1_bn.2} parent=46 // loop_exit
                  _
                loop: start=0, step=1, limit=1
                $region55: #{conv1x1_bn.2} parent=46 // loop_pre_header
                  _
                $region56: #{conv1x1_bn.2} parent=46 // loop_header
                  %s538 = sphi 0, %s542
                  %p539 = scmp.ge.s32.totalorder %s538, 1
                  %s543 = sphi %s174, %s174
                  %s544 = sphi %s170, %s170
                $region57: #{conv1x1_bn.2} parent=46 // loop_header_branch
                  %541 = sbr.rel (%p539) target = $region61
                $region58: #{conv1x1_bn.2} parent=46 // loop_body
                  %v545 = vld [vmem:[%s543] sm:$0xf]
                  %546 = vst [vmem:[%s544] sm:$0xf] %v545
                  %v547 = vld [vmem:[%s543 + $0x8] sm:$0xf]
                  %548 = vst [vmem:[%s544 + $0x4] sm:$0xf] %v547
                  %v549 = vld [vmem:[%s543 + $0x10] sm:$0xf]
                  %550 = vst [vmem:[%s544 + $0x8] sm:$0xf] %v549
                  %v551 = vld [vmem:[%s543 + $0x18] sm:$0xf]
                  %552 = vst [vmem:[%s544 + $0xc] sm:$0xf] %v551
                  %v553 = vld [vmem:[%s543 + $0x20] sm:$0xf]
                  %554 = vst [vmem:[%s544 + $0x10] sm:$0xf] %v553
                  %v555 = vld [vmem:[%s543 + $0x28] sm:$0xf]
                  %556 = vst [vmem:[%s544 + $0x14] sm:$0xf] %v555
                  %v557 = vld [vmem:[%s543 + $0x30] sm:$0xf]
                  %558 = vst [vmem:[%s544 + $0x18] sm:$0xf] %v557
                  %v559 = vld [vmem:[%s543 + $0x38] sm:$0xf]
                  %560 = vst [vmem:[%s544 + $0x1c] sm:$0xf] %v559
                  %v561 = vld [vmem:[%s543 + $0x40] sm:$0xf]
                  %562 = vst [vmem:[%s544 + $0x20] sm:$0xf] %v561
                  %v563 = vld [vmem:[%s543 + $0x48] sm:$0xf]
                  %564 = vst [vmem:[%s544 + $0x24] sm:$0xf] %v563
                  %v565 = vld [vmem:[%s543 + $0x50] sm:$0xf]
                  %566 = vst [vmem:[%s544 + $0x28] sm:$0xf] %v565
                  %v567 = vld [vmem:[%s543 + $0x58] sm:$0xf]
                  %568 = vst [vmem:[%s544 + $0x2c] sm:$0xf] %v567
                  %v569 = vld [vmem:[%s543 + $0x60] sm:$0xf]
                  %570 = vst [vmem:[%s544 + $0x30] sm:$0xf] %v569
                  %v571 = vld [vmem:[%s543 + $0x68] sm:$0xf]
                  %572 = vst [vmem:[%s544 + $0x34] sm:$0xf] %v571
                  %v573 = vld [vmem:[%s543 + $0x70] sm:$0xf]
                  %574 = vst [vmem:[%s544 + $0x38] sm:$0xf] %v573
                  %v575 = vld [vmem:[%s543 + $0x78] sm:$0xf]
                  %576 = vst [vmem:[%s544 + $0x3c] sm:$0xf] %v575
                  %v577 = vld [vmem:[%s543 + $0x80] sm:$0xf]
                  %578 = vst [vmem:[%s544 + $0x40] sm:$0xf] %v577
                  %v579 = vld [vmem:[%s543 + $0x88] sm:$0xf]
                  %580 = vst [vmem:[%s544 + $0x44] sm:$0xf] %v579
                  %v581 = vld [vmem:[%s543 + $0x90] sm:$0xf]
                  %582 = vst [vmem:[%s544 + $0x48] sm:$0xf] %v581
                  %v583 = vld [vmem:[%s543 + $0x98] sm:$0xf]
                  %584 = vst [vmem:[%s544 + $0x4c] sm:$0xf] %v583
                  %v585 = vld [vmem:[%s543 + $0xa0] sm:$0xf]
                  %586 = vst [vmem:[%s544 + $0x50] sm:$0xf] %v585
                  %v587 = vld [vmem:[%s543 + $0xa8] sm:$0xf]
                  %588 = vst [vmem:[%s544 + $0x54] sm:$0xf] %v587
                  %v589 = vld [vmem:[%s543 + $0xb0] sm:$0xf]
                  %590 = vst [vmem:[%s544 + $0x58] sm:$0xf] %v589
                  %v591 = vld [vmem:[%s543 + $0xb8] sm:$0xf]
                  %592 = vst [vmem:[%s544 + $0x5c] sm:$0xf] %v591
                  %v593 = vld [vmem:[%s543 + $0xc0] sm:$0xf]
                  %594 = vst [vmem:[%s544 + $0x60] sm:$0xf] %v593
                  %v595 = vld [vmem:[%s543 + $0xc8] sm:$0xf]
                  %596 = vst [vmem:[%s544 + $0x64] sm:$0xf] %v595
                  %v597 = vld [vmem:[%s543 + $0xd0] sm:$0xf]
                  %598 = vst [vmem:[%s544 + $0x68] sm:$0xf] %v597
                  %v599 = vld [vmem:[%s543 + $0xd8] sm:$0xf]
                  %600 = vst [vmem:[%s544 + $0x6c] sm:$0xf] %v599
                  %v601 = vld [vmem:[%s543 + $0xe0] sm:$0xf]
                  %602 = vst [vmem:[%s544 + $0x70] sm:$0xf] %v601
                  %v603 = vld [vmem:[%s543 + $0xe8] sm:$0xf]
                  %604 = vst [vmem:[%s544 + $0x74] sm:$0xf] %v603
                  %v605 = vld [vmem:[%s543 + $0xf0] sm:$0xf]
                  %606 = vst [vmem:[%s544 + $0x78] sm:$0xf] %v605
                  %v607 = vld [vmem:[%s543 + $0xf8] sm:$0xf]
                  %608 = vst [vmem:[%s544 + $0x7c] sm:$0xf] %v607
                  %v609 = vld [vmem:[%s543 + $0x100] sm:$0xf]
                  %610 = vst [vmem:[%s544 + $0x80] sm:$0xf] %v609
                  %v611 = vld [vmem:[%s543 + $0x108] sm:$0xf]
                  %612 = vst [vmem:[%s544 + $0x84] sm:$0xf] %v611
                  %v613 = vld [vmem:[%s543 + $0x110] sm:$0xf]
                  %614 = vst [vmem:[%s544 + $0x88] sm:$0xf] %v613
                  %v615 = vld [vmem:[%s543 + $0x118] sm:$0xf]
                  %616 = vst [vmem:[%s544 + $0x8c] sm:$0xf] %v615
                  %v617 = vld [vmem:[%s543 + $0x120] sm:$0xf]
                  %618 = vst [vmem:[%s544 + $0x90] sm:$0xf] %v617
                  %v619 = vld [vmem:[%s543 + $0x128] sm:$0xf]
                  %620 = vst [vmem:[%s544 + $0x94] sm:$0xf] %v619
                  %v621 = vld [vmem:[%s543 + $0x130] sm:$0xf]
                  %622 = vst [vmem:[%s544 + $0x98] sm:$0xf] %v621
                  %v623 = vld [vmem:[%s543 + $0x138] sm:$0xf]
                  %624 = vst [vmem:[%s544 + $0x9c] sm:$0xf] %v623
                  %v625 = vld [vmem:[%s543 + $0x140] sm:$0xf]
                  %626 = vst [vmem:[%s544 + $0xa0] sm:$0xf] %v625
                  %v627 = vld [vmem:[%s543 + $0x148] sm:$0xf]
                  %628 = vst [vmem:[%s544 + $0xa4] sm:$0xf] %v627
                  %v629 = vld [vmem:[%s543 + $0x150] sm:$0xf]
                  %630 = vst [vmem:[%s544 + $0xa8] sm:$0xf] %v629
                  %v631 = vld [vmem:[%s543 + $0x158] sm:$0xf]
                  %632 = vst [vmem:[%s544 + $0xac] sm:$0xf] %v631
                  %v633 = vld [vmem:[%s543 + $0x160] sm:$0xf]
                  %634 = vst [vmem:[%s544 + $0xb0] sm:$0xf] %v633
                  %v635 = vld [vmem:[%s543 + $0x168] sm:$0xf]
                  %636 = vst [vmem:[%s544 + $0xb4] sm:$0xf] %v635
                  %v637 = vld [vmem:[%s543 + $0x170] sm:$0xf]
                  %638 = vst [vmem:[%s544 + $0xb8] sm:$0xf] %v637
                  %v639 = vld [vmem:[%s543 + $0x178] sm:$0xf]
                  %640 = vst [vmem:[%s544 + $0xbc] sm:$0xf] %v639
                  %v641 = vld [vmem:[%s543 + $0x180] sm:$0xf]
                  %642 = vst [vmem:[%s544 + $0xc0] sm:$0xf] %v641
                  %v643 = vld [vmem:[%s543 + $0x188] sm:$0xf]
                  %644 = vst [vmem:[%s544 + $0xc4] sm:$0xf] %v643
                  %v645 = vld [vmem:[%s543 + $0x190] sm:$0xf]
                  %646 = vst [vmem:[%s544 + $0xc8] sm:$0xf] %v645
                  %v647 = vld [vmem:[%s543 + $0x198] sm:$0xf]
                  %648 = vst [vmem:[%s544 + $0xcc] sm:$0xf] %v647
                  %v649 = vld [vmem:[%s543 + $0x1a0] sm:$0xf]
                  %650 = vst [vmem:[%s544 + $0xd0] sm:$0xf] %v649
                  %v651 = vld [vmem:[%s543 + $0x1a8] sm:$0xf]
                  %652 = vst [vmem:[%s544 + $0xd4] sm:$0xf] %v651
                  %v653 = vld [vmem:[%s543 + $0x1b0] sm:$0xf]
                  %654 = vst [vmem:[%s544 + $0xd8] sm:$0xf] %v653
                  %v655 = vld [vmem:[%s543 + $0x1b8] sm:$0xf]
                  %656 = vst [vmem:[%s544 + $0xdc] sm:$0xf] %v655
                  %v657 = vld [vmem:[%s543 + $0x1c0] sm:$0xf]
                  %658 = vst [vmem:[%s544 + $0xe0] sm:$0xf] %v657
                  %v659 = vld [vmem:[%s543 + $0x1c8] sm:$0xf]
                  %660 = vst [vmem:[%s544 + $0xe4] sm:$0xf] %v659
                  %v661 = vld [vmem:[%s543 + $0x1d0] sm:$0xf]
                  %662 = vst [vmem:[%s544 + $0xe8] sm:$0xf] %v661
                  %v663 = vld [vmem:[%s543 + $0x1d8] sm:$0xf]
                  %664 = vst [vmem:[%s544 + $0xec] sm:$0xf] %v663
                  %v665 = vld [vmem:[%s543 + $0x1e0] sm:$0xf]
                  %666 = vst [vmem:[%s544 + $0xf0] sm:$0xf] %v665
                  %v667 = vld [vmem:[%s543 + $0x1e8] sm:$0xf]
                  %668 = vst [vmem:[%s544 + $0xf4] sm:$0xf] %v667
                  %v669 = vld [vmem:[%s543 + $0x1f0] sm:$0xf]
                  %670 = vst [vmem:[%s544 + $0xf8] sm:$0xf] %v669
                  %v671 = vld [vmem:[%s543 + $0x1f8] sm:$0xf]
                  %672 = vst [vmem:[%s544 + $0xfc] sm:$0xf] %v671
                  %v673 = vld [vmem:[%s543 + $0x200] sm:$0xf]
                  %674 = vst [vmem:[%s544 + $0x100] sm:$0xf] %v673
                  %v675 = vld [vmem:[%s543 + $0x208] sm:$0xf]
                  %676 = vst [vmem:[%s544 + $0x104] sm:$0xf] %v675
                  %v677 = vld [vmem:[%s543 + $0x210] sm:$0xf]
                  %678 = vst [vmem:[%s544 + $0x108] sm:$0xf] %v677
                  %v679 = vld [vmem:[%s543 + $0x218] sm:$0xf]
                  %680 = vst [vmem:[%s544 + $0x10c] sm:$0xf] %v679
                  %v681 = vld [vmem:[%s543 + $0x220] sm:$0xf]
                  %682 = vst [vmem:[%s544 + $0x110] sm:$0xf] %v681
                  %v683 = vld [vmem:[%s543 + $0x228] sm:$0xf]
                  %684 = vst [vmem:[%s544 + $0x114] sm:$0xf] %v683
                  %v685 = vld [vmem:[%s543 + $0x230] sm:$0xf]
                  %686 = vst [vmem:[%s544 + $0x118] sm:$0xf] %v685
                  %v687 = vld [vmem:[%s543 + $0x238] sm:$0xf]
                  %688 = vst [vmem:[%s544 + $0x11c] sm:$0xf] %v687
                  %v689 = vld [vmem:[%s543 + $0x240] sm:$0xf]
                  %690 = vst [vmem:[%s544 + $0x120] sm:$0xf] %v689
                  %v691 = vld [vmem:[%s543 + $0x248] sm:$0xf]
                  %692 = vst [vmem:[%s544 + $0x124] sm:$0xf] %v691
                  %v693 = vld [vmem:[%s543 + $0x250] sm:$0xf]
                  %694 = vst [vmem:[%s544 + $0x128] sm:$0xf] %v693
                  %v695 = vld [vmem:[%s543 + $0x258] sm:$0xf]
                  %696 = vst [vmem:[%s544 + $0x12c] sm:$0xf] %v695
                  %v697 = vld [vmem:[%s543 + $0x260] sm:$0xf]
                  %698 = vst [vmem:[%s544 + $0x130] sm:$0xf] %v697
                  %v699 = vld [vmem:[%s543 + $0x268] sm:$0xf]
                  %700 = vst [vmem:[%s544 + $0x134] sm:$0xf] %v699
                  %v701 = vld [vmem:[%s543 + $0x270] sm:$0xf]
                  %702 = vst [vmem:[%s544 + $0x138] sm:$0xf] %v701
                  %v703 = vld [vmem:[%s543 + $0x278] sm:$0xf]
                  %704 = vst [vmem:[%s544 + $0x13c] sm:$0xf] %v703
                  %v705 = vld [vmem:[%s543 + $0x280] sm:$0xf]
                  %706 = vst [vmem:[%s544 + $0x140] sm:$0xf] %v705
                  %v707 = vld [vmem:[%s543 + $0x288] sm:$0xf]
                  %708 = vst [vmem:[%s544 + $0x144] sm:$0xf] %v707
                  %v709 = vld [vmem:[%s543 + $0x290] sm:$0xf]
                  %710 = vst [vmem:[%s544 + $0x148] sm:$0xf] %v709
                  %v711 = vld [vmem:[%s543 + $0x298] sm:$0xf]
                  %712 = vst [vmem:[%s544 + $0x14c] sm:$0xf] %v711
                  %v713 = vld [vmem:[%s543 + $0x2a0] sm:$0xf]
                  %714 = vst [vmem:[%s544 + $0x150] sm:$0xf] %v713
                  %v715 = vld [vmem:[%s543 + $0x2a8] sm:$0xf]
                  %716 = vst [vmem:[%s544 + $0x154] sm:$0xf] %v715
                  %v717 = vld [vmem:[%s543 + $0x2b0] sm:$0xf]
                  %718 = vst [vmem:[%s544 + $0x158] sm:$0xf] %v717
                  %v719 = vld [vmem:[%s543 + $0x2b8] sm:$0xf]
                  %720 = vst [vmem:[%s544 + $0x15c] sm:$0xf] %v719
                  %v721 = vld [vmem:[%s543 + $0x2c0] sm:$0xf]
                  %722 = vst [vmem:[%s544 + $0x160] sm:$0xf] %v721
                  %v723 = vld [vmem:[%s543 + $0x2c8] sm:$0xf]
                  %724 = vst [vmem:[%s544 + $0x164] sm:$0xf] %v723
                  %v725 = vld [vmem:[%s543 + $0x2d0] sm:$0xf]
                  %726 = vst [vmem:[%s544 + $0x168] sm:$0xf] %v725
                  %v727 = vld [vmem:[%s543 + $0x2d8] sm:$0xf]
                  %728 = vst [vmem:[%s544 + $0x16c] sm:$0xf] %v727
                  %v729 = vld [vmem:[%s543 + $0x2e0] sm:$0xf]
                  %730 = vst [vmem:[%s544 + $0x170] sm:$0xf] %v729
                  %v731 = vld [vmem:[%s543 + $0x2e8] sm:$0xf]
                  %732 = vst [vmem:[%s544 + $0x174] sm:$0xf] %v731
                  %v733 = vld [vmem:[%s543 + $0x2f0] sm:$0xf]
                  %734 = vst [vmem:[%s544 + $0x178] sm:$0xf] %v733
                  %v735 = vld [vmem:[%s543 + $0x2f8] sm:$0xf]
                  %736 = vst [vmem:[%s544 + $0x17c] sm:$0xf] %v735
                  %v737 = vld [vmem:[%s543 + $0x300] sm:$0xf]
                  %738 = vst [vmem:[%s544 + $0x180] sm:$0xf] %v737
                  %v739 = vld [vmem:[%s543 + $0x308] sm:$0xf]
                  %740 = vst [vmem:[%s544 + $0x184] sm:$0xf] %v739
                  %v741 = vld [vmem:[%s543 + $0x310] sm:$0xf]
                  %742 = vst [vmem:[%s544 + $0x188] sm:$0xf] %v741
                  %v743 = vld [vmem:[%s543 + $0x318] sm:$0xf]
                  %744 = vst [vmem:[%s544 + $0x18c] sm:$0xf] %v743
                  %v745 = vld [vmem:[%s543 + $0x320] sm:$0xf]
                  %746 = vst [vmem:[%s544 + $0x190] sm:$0xf] %v745
                  %v747 = vld [vmem:[%s543 + $0x328] sm:$0xf]
                  %748 = vst [vmem:[%s544 + $0x194] sm:$0xf] %v747
                  %v749 = vld [vmem:[%s543 + $0x330] sm:$0xf]
                  %750 = vst [vmem:[%s544 + $0x198] sm:$0xf] %v749
                  %v751 = vld [vmem:[%s543 + $0x338] sm:$0xf]
                  %752 = vst [vmem:[%s544 + $0x19c] sm:$0xf] %v751
                  %v753 = vld [vmem:[%s543 + $0x340] sm:$0xf]
                  %754 = vst [vmem:[%s544 + $0x1a0] sm:$0xf] %v753
                  %v755 = vld [vmem:[%s543 + $0x348] sm:$0xf]
                  %756 = vst [vmem:[%s544 + $0x1a4] sm:$0xf] %v755
                  %v757 = vld [vmem:[%s543 + $0x350] sm:$0xf]
                  %758 = vst [vmem:[%s544 + $0x1a8] sm:$0xf] %v757
                  %v759 = vld [vmem:[%s543 + $0x358] sm:$0xf]
                  %760 = vst [vmem:[%s544 + $0x1ac] sm:$0xf] %v759
                  %v761 = vld [vmem:[%s543 + $0x360] sm:$0xf]
                  %762 = vst [vmem:[%s544 + $0x1b0] sm:$0xf] %v761
                  %v763 = vld [vmem:[%s543 + $0x368] sm:$0xf]
                  %764 = vst [vmem:[%s544 + $0x1b4] sm:$0xf] %v763
                  %v765 = vld [vmem:[%s543 + $0x370] sm:$0xf]
                  %766 = vst [vmem:[%s544 + $0x1b8] sm:$0xf] %v765
                  %v767 = vld [vmem:[%s543 + $0x378] sm:$0xf]
                  %768 = vst [vmem:[%s544 + $0x1bc] sm:$0xf] %v767
                  %v769 = vld [vmem:[%s543 + $0x380] sm:$0xf]
                  %770 = vst [vmem:[%s544 + $0x1c0] sm:$0xf] %v769
                  %v771 = vld [vmem:[%s543 + $0x388] sm:$0xf]
                  %772 = vst [vmem:[%s544 + $0x1c4] sm:$0xf] %v771
                  %v773 = vld [vmem:[%s543 + $0x390] sm:$0xf]
                  %774 = vst [vmem:[%s544 + $0x1c8] sm:$0xf] %v773
                  %v775 = vld [vmem:[%s543 + $0x398] sm:$0xf]
                  %776 = vst [vmem:[%s544 + $0x1cc] sm:$0xf] %v775
                  %v777 = vld [vmem:[%s543 + $0x3a0] sm:$0xf]
                  %778 = vst [vmem:[%s544 + $0x1d0] sm:$0xf] %v777
                  %v779 = vld [vmem:[%s543 + $0x3a8] sm:$0xf]
                  %780 = vst [vmem:[%s544 + $0x1d4] sm:$0xf] %v779
                  %v781 = vld [vmem:[%s543 + $0x3b0] sm:$0xf]
                  %782 = vst [vmem:[%s544 + $0x1d8] sm:$0xf] %v781
                  %v783 = vld [vmem:[%s543 + $0x3b8] sm:$0xf]
                  %784 = vst [vmem:[%s544 + $0x1dc] sm:$0xf] %v783
                  %v785 = vld [vmem:[%s543 + $0x3c0] sm:$0xf]
                  %786 = vst [vmem:[%s544 + $0x1e0] sm:$0xf] %v785
                  %v787 = vld [vmem:[%s543 + $0x3c8] sm:$0xf]
                  %788 = vst [vmem:[%s544 + $0x1e4] sm:$0xf] %v787
                  %v789 = vld [vmem:[%s543 + $0x3d0] sm:$0xf]
                  %790 = vst [vmem:[%s544 + $0x1e8] sm:$0xf] %v789
                  %v791 = vld [vmem:[%s543 + $0x3d8] sm:$0xf]
                  %792 = vst [vmem:[%s544 + $0x1ec] sm:$0xf] %v791
                  %v793 = vld [vmem:[%s543 + $0x3e0] sm:$0xf]
                  %794 = vst [vmem:[%s544 + $0x1f0] sm:$0xf] %v793
                  %v795 = vld [vmem:[%s543 + $0x3e8] sm:$0xf]
                  %796 = vst [vmem:[%s544 + $0x1f4] sm:$0xf] %v795
                  %v797 = vld [vmem:[%s543 + $0x3f0] sm:$0xf]
                  %798 = vst [vmem:[%s544 + $0x1f8] sm:$0xf] %v797
                  %v799 = vld [vmem:[%s543 + $0x3f8] sm:$0xf]
                  %800 = vst [vmem:[%s544 + $0x1fc] sm:$0xf] %v799
                  %v801 = vld [vmem:[%s543 + $0x400] sm:$0xf]
                  %802 = vst [vmem:[%s544 + $0x200] sm:$0xf] %v801
                  %v803 = vld [vmem:[%s543 + $0x408] sm:$0xf]
                  %804 = vst [vmem:[%s544 + $0x204] sm:$0xf] %v803
                  %v805 = vld [vmem:[%s543 + $0x410] sm:$0xf]
                  %806 = vst [vmem:[%s544 + $0x208] sm:$0xf] %v805
                  %v807 = vld [vmem:[%s543 + $0x418] sm:$0xf]
                  %808 = vst [vmem:[%s544 + $0x20c] sm:$0xf] %v807
                  %v809 = vld [vmem:[%s543 + $0x420] sm:$0xf]
                  %810 = vst [vmem:[%s544 + $0x210] sm:$0xf] %v809
                  %v811 = vld [vmem:[%s543 + $0x428] sm:$0xf]
                  %812 = vst [vmem:[%s544 + $0x214] sm:$0xf] %v811
                  %v813 = vld [vmem:[%s543 + $0x430] sm:$0xf]
                  %814 = vst [vmem:[%s544 + $0x218] sm:$0xf] %v813
                  %v815 = vld [vmem:[%s543 + $0x438] sm:$0xf]
                  %816 = vst [vmem:[%s544 + $0x21c] sm:$0xf] %v815
                  %v817 = vld [vmem:[%s543 + $0x440] sm:$0xf]
                  %818 = vst [vmem:[%s544 + $0x220] sm:$0xf] %v817
                  %v819 = vld [vmem:[%s543 + $0x448] sm:$0xf]
                  %820 = vst [vmem:[%s544 + $0x224] sm:$0xf] %v819
                  %v821 = vld [vmem:[%s543 + $0x450] sm:$0xf]
                  %822 = vst [vmem:[%s544 + $0x228] sm:$0xf] %v821
                  %v823 = vld [vmem:[%s543 + $0x458] sm:$0xf]
                  %824 = vst [vmem:[%s544 + $0x22c] sm:$0xf] %v823
                  %v825 = vld [vmem:[%s543 + $0x460] sm:$0xf]
                  %826 = vst [vmem:[%s544 + $0x230] sm:$0xf] %v825
                  %v827 = vld [vmem:[%s543 + $0x468] sm:$0xf]
                  %828 = vst [vmem:[%s544 + $0x234] sm:$0xf] %v827
                  %v829 = vld [vmem:[%s543 + $0x470] sm:$0xf]
                  %830 = vst [vmem:[%s544 + $0x238] sm:$0xf] %v829
                  %v831 = vld [vmem:[%s543 + $0x478] sm:$0xf]
                  %832 = vst [vmem:[%s544 + $0x23c] sm:$0xf] %v831
                  %v833 = vld [vmem:[%s543 + $0x480] sm:$0xf]
                  %834 = vst [vmem:[%s544 + $0x240] sm:$0xf] %v833
                  %v835 = vld [vmem:[%s543 + $0x488] sm:$0xf]
                  %836 = vst [vmem:[%s544 + $0x244] sm:$0xf] %v835
                  %v837 = vld [vmem:[%s543 + $0x490] sm:$0xf]
                  %838 = vst [vmem:[%s544 + $0x248] sm:$0xf] %v837
                  %v839 = vld [vmem:[%s543 + $0x498] sm:$0xf]
                  %840 = vst [vmem:[%s544 + $0x24c] sm:$0xf] %v839
                  %v841 = vld [vmem:[%s543 + $0x4a0] sm:$0xf]
                  %842 = vst [vmem:[%s544 + $0x250] sm:$0xf] %v841
                  %v843 = vld [vmem:[%s543 + $0x4a8] sm:$0xf]
                  %844 = vst [vmem:[%s544 + $0x254] sm:$0xf] %v843
                  %v845 = vld [vmem:[%s543 + $0x4b0] sm:$0xf]
                  %846 = vst [vmem:[%s544 + $0x258] sm:$0xf] %v845
                  %v847 = vld [vmem:[%s543 + $0x4b8] sm:$0xf]
                  %848 = vst [vmem:[%s544 + $0x25c] sm:$0xf] %v847
                  %v849 = vld [vmem:[%s543 + $0x4c0] sm:$0xf]
                  %850 = vst [vmem:[%s544 + $0x260] sm:$0xf] %v849
                  %v851 = vld [vmem:[%s543 + $0x4c8] sm:$0xf]
                  %852 = vst [vmem:[%s544 + $0x264] sm:$0xf] %v851
                  %v853 = vld [vmem:[%s543 + $0x4d0] sm:$0xf]
                  %854 = vst [vmem:[%s544 + $0x268] sm:$0xf] %v853
                  %v855 = vld [vmem:[%s543 + $0x4d8] sm:$0xf]
                  %856 = vst [vmem:[%s544 + $0x26c] sm:$0xf] %v855
                  %v857 = vld [vmem:[%s543 + $0x4e0] sm:$0xf]
                  %858 = vst [vmem:[%s544 + $0x270] sm:$0xf] %v857
                  %v859 = vld [vmem:[%s543 + $0x4e8] sm:$0xf]
                  %860 = vst [vmem:[%s544 + $0x274] sm:$0xf] %v859
                  %v861 = vld [vmem:[%s543 + $0x4f0] sm:$0xf]
                  %862 = vst [vmem:[%s544 + $0x278] sm:$0xf] %v861
                  %v863 = vld [vmem:[%s543 + $0x4f8] sm:$0xf]
                  %864 = vst [vmem:[%s544 + $0x27c] sm:$0xf] %v863
                  %v865 = vld [vmem:[%s543 + $0x500] sm:$0xf]
                  %866 = vst [vmem:[%s544 + $0x280] sm:$0xf] %v865
                  %v867 = vld [vmem:[%s543 + $0x508] sm:$0xf]
                  %868 = vst [vmem:[%s544 + $0x284] sm:$0xf] %v867
                  %v869 = vld [vmem:[%s543 + $0x510] sm:$0xf]
                  %870 = vst [vmem:[%s544 + $0x288] sm:$0xf] %v869
                  %v871 = vld [vmem:[%s543 + $0x518] sm:$0xf]
                  %872 = vst [vmem:[%s544 + $0x28c] sm:$0xf] %v871
                  %v873 = vld [vmem:[%s543 + $0x520] sm:$0xf]
                  %874 = vst [vmem:[%s544 + $0x290] sm:$0xf] %v873
                  %v875 = vld [vmem:[%s543 + $0x528] sm:$0xf]
                  %876 = vst [vmem:[%s544 + $0x294] sm:$0xf] %v875
                  %v877 = vld [vmem:[%s543 + $0x530] sm:$0xf]
                  %878 = vst [vmem:[%s544 + $0x298] sm:$0xf] %v877
                  %v879 = vld [vmem:[%s543 + $0x538] sm:$0xf]
                  %880 = vst [vmem:[%s544 + $0x29c] sm:$0xf] %v879
                $region59: #{conv1x1_bn.2} parent=46 // loop_footer
                  %s542 = sadd.s32 1, %s538
                $region60: #{conv1x1_bn.2} parent=46 // loop_footer_branch
                  %537 = sbr.rel target = $region56
                $region61: #{conv1x1_bn.2} parent=46 // loop_exit
                  _
              $region47: #{conv1x1_bn.2} parent=31 // pred_fallthru
                _
            $region32: #{conv1x1_bn.2} parent=27 // pred_fallthru
              _
            // Predicated region
            $region33: #{conv1x1_bn.2} parent=27 // pred_check
              _
            $region34: #{conv1x1_bn.2} parent=27 // pred_check_branch
              %180 = sbr.rel (0) target = $region36
            $region35: #{conv1x1_bn.2} parent=27 // pred_region
              loop: start=0, step=1, limit=1
              $region37: #{conv1x1_bn.2} parent=35 // loop_pre_header
                _
              $region38: #{conv1x1_bn.2} parent=35 // loop_header
                %s183 = sphi 0, %s187
                %p184 = scmp.ge.s32.totalorder %s183, 1
                %s188 = sphi %s174, %s174
                %s189 = sphi %s170, %s170
              $region39: #{conv1x1_bn.2} parent=35 // loop_header_branch
                %186 = sbr.rel (%p184) target = $region43
              $region40: #{conv1x1_bn.2} parent=35 // loop_body
                %v190 = vld [vmem:[%s188] sm:$0xf]
                %191 = vst [vmem:[%s189] sm:$0xf] %v190
                %v192 = vld [vmem:[%s188 + $0x8] sm:$0xf]
                %193 = vst [vmem:[%s189 + $0x4] sm:$0xf] %v192
                %v194 = vld [vmem:[%s188 + $0x10] sm:$0xf]
                %195 = vst [vmem:[%s189 + $0x8] sm:$0xf] %v194
                %v196 = vld [vmem:[%s188 + $0x18] sm:$0xf]
                %197 = vst [vmem:[%s189 + $0xc] sm:$0xf] %v196
                %v198 = vld [vmem:[%s188 + $0x20] sm:$0xf]
                %199 = vst [vmem:[%s189 + $0x10] sm:$0xf] %v198
                %v200 = vld [vmem:[%s188 + $0x28] sm:$0xf]
                %201 = vst [vmem:[%s189 + $0x14] sm:$0xf] %v200
                %v202 = vld [vmem:[%s188 + $0x30] sm:$0xf]
                %203 = vst [vmem:[%s189 + $0x18] sm:$0xf] %v202
                %v204 = vld [vmem:[%s188 + $0x38] sm:$0xf]
                %205 = vst [vmem:[%s189 + $0x1c] sm:$0xf] %v204
                %v206 = vld [vmem:[%s188 + $0x40] sm:$0xf]
                %207 = vst [vmem:[%s189 + $0x20] sm:$0xf] %v206
                %v208 = vld [vmem:[%s188 + $0x48] sm:$0xf]
                %209 = vst [vmem:[%s189 + $0x24] sm:$0xf] %v208
                %v210 = vld [vmem:[%s188 + $0x50] sm:$0xf]
                %211 = vst [vmem:[%s189 + $0x28] sm:$0xf] %v210
                %v212 = vld [vmem:[%s188 + $0x58] sm:$0xf]
                %213 = vst [vmem:[%s189 + $0x2c] sm:$0xf] %v212
                %v214 = vld [vmem:[%s188 + $0x60] sm:$0xf]
                %215 = vst [vmem:[%s189 + $0x30] sm:$0xf] %v214
                %v216 = vld [vmem:[%s188 + $0x68] sm:$0xf]
                %217 = vst [vmem:[%s189 + $0x34] sm:$0xf] %v216
                %v218 = vld [vmem:[%s188 + $0x70] sm:$0xf]
                %219 = vst [vmem:[%s189 + $0x38] sm:$0xf] %v218
                %v220 = vld [vmem:[%s188 + $0x78] sm:$0xf]
                %221 = vst [vmem:[%s189 + $0x3c] sm:$0xf] %v220
                %v222 = vld [vmem:[%s188 + $0x80] sm:$0xf]
                %223 = vst [vmem:[%s189 + $0x40] sm:$0xf] %v222
                %v224 = vld [vmem:[%s188 + $0x88] sm:$0xf]
                %225 = vst [vmem:[%s189 + $0x44] sm:$0xf] %v224
                %v226 = vld [vmem:[%s188 + $0x90] sm:$0xf]
                %227 = vst [vmem:[%s189 + $0x48] sm:$0xf] %v226
                %v228 = vld [vmem:[%s188 + $0x98] sm:$0xf]
                %229 = vst [vmem:[%s189 + $0x4c] sm:$0xf] %v228
                %v230 = vld [vmem:[%s188 + $0xa0] sm:$0xf]
                %231 = vst [vmem:[%s189 + $0x50] sm:$0xf] %v230
                %v232 = vld [vmem:[%s188 + $0xa8] sm:$0xf]
                %233 = vst [vmem:[%s189 + $0x54] sm:$0xf] %v232
                %v234 = vld [vmem:[%s188 + $0xb0] sm:$0xf]
                %235 = vst [vmem:[%s189 + $0x58] sm:$0xf] %v234
                %v236 = vld [vmem:[%s188 + $0xb8] sm:$0xf]
                %237 = vst [vmem:[%s189 + $0x5c] sm:$0xf] %v236
                %v238 = vld [vmem:[%s188 + $0xc0] sm:$0xf]
                %239 = vst [vmem:[%s189 + $0x60] sm:$0xf] %v238
                %v240 = vld [vmem:[%s188 + $0xc8] sm:$0xf]
                %241 = vst [vmem:[%s189 + $0x64] sm:$0xf] %v240
                %v242 = vld [vmem:[%s188 + $0xd0] sm:$0xf]
                %243 = vst [vmem:[%s189 + $0x68] sm:$0xf] %v242
                %v244 = vld [vmem:[%s188 + $0xd8] sm:$0xf]
                %245 = vst [vmem:[%s189 + $0x6c] sm:$0xf] %v244
                %v246 = vld [vmem:[%s188 + $0xe0] sm:$0xf]
                %247 = vst [vmem:[%s189 + $0x70] sm:$0xf] %v246
                %v248 = vld [vmem:[%s188 + $0xe8] sm:$0xf]
                %249 = vst [vmem:[%s189 + $0x74] sm:$0xf] %v248
                %v250 = vld [vmem:[%s188 + $0xf0] sm:$0xf]
                %251 = vst [vmem:[%s189 + $0x78] sm:$0xf] %v250
                %v252 = vld [vmem:[%s188 + $0xf8] sm:$0xf]
                %253 = vst [vmem:[%s189 + $0x7c] sm:$0xf] %v252
                %v254 = vld [vmem:[%s188 + $0x100] sm:$0xf]
                %255 = vst [vmem:[%s189 + $0x80] sm:$0xf] %v254
                %v256 = vld [vmem:[%s188 + $0x108] sm:$0xf]
                %257 = vst [vmem:[%s189 + $0x84] sm:$0xf] %v256
                %v258 = vld [vmem:[%s188 + $0x110] sm:$0xf]
                %259 = vst [vmem:[%s189 + $0x88] sm:$0xf] %v258
                %v260 = vld [vmem:[%s188 + $0x118] sm:$0xf]
                %261 = vst [vmem:[%s189 + $0x8c] sm:$0xf] %v260
                %v262 = vld [vmem:[%s188 + $0x120] sm:$0xf]
                %263 = vst [vmem:[%s189 + $0x90] sm:$0xf] %v262
                %v264 = vld [vmem:[%s188 + $0x128] sm:$0xf]
                %265 = vst [vmem:[%s189 + $0x94] sm:$0xf] %v264
                %v266 = vld [vmem:[%s188 + $0x130] sm:$0xf]
                %267 = vst [vmem:[%s189 + $0x98] sm:$0xf] %v266
                %v268 = vld [vmem:[%s188 + $0x138] sm:$0xf]
                %269 = vst [vmem:[%s189 + $0x9c] sm:$0xf] %v268
                %v270 = vld [vmem:[%s188 + $0x140] sm:$0xf]
                %271 = vst [vmem:[%s189 + $0xa0] sm:$0xf] %v270
                %v272 = vld [vmem:[%s188 + $0x148] sm:$0xf]
                %273 = vst [vmem:[%s189 + $0xa4] sm:$0xf] %v272
                %v274 = vld [vmem:[%s188 + $0x150] sm:$0xf]
                %275 = vst [vmem:[%s189 + $0xa8] sm:$0xf] %v274
                %v276 = vld [vmem:[%s188 + $0x158] sm:$0xf]
                %277 = vst [vmem:[%s189 + $0xac] sm:$0xf] %v276
                %v278 = vld [vmem:[%s188 + $0x160] sm:$0xf]
                %279 = vst [vmem:[%s189 + $0xb0] sm:$0xf] %v278
                %v280 = vld [vmem:[%s188 + $0x168] sm:$0xf]
                %281 = vst [vmem:[%s189 + $0xb4] sm:$0xf] %v280
                %v282 = vld [vmem:[%s188 + $0x170] sm:$0xf]
                %283 = vst [vmem:[%s189 + $0xb8] sm:$0xf] %v282
                %v284 = vld [vmem:[%s188 + $0x178] sm:$0xf]
                %285 = vst [vmem:[%s189 + $0xbc] sm:$0xf] %v284
                %v286 = vld [vmem:[%s188 + $0x180] sm:$0xf]
                %287 = vst [vmem:[%s189 + $0xc0] sm:$0xf] %v286
                %v288 = vld [vmem:[%s188 + $0x188] sm:$0xf]
                %289 = vst [vmem:[%s189 + $0xc4] sm:$0xf] %v288
                %v290 = vld [vmem:[%s188 + $0x190] sm:$0xf]
                %291 = vst [vmem:[%s189 + $0xc8] sm:$0xf] %v290
                %v292 = vld [vmem:[%s188 + $0x198] sm:$0xf]
                %293 = vst [vmem:[%s189 + $0xcc] sm:$0xf] %v292
                %v294 = vld [vmem:[%s188 + $0x1a0] sm:$0xf]
                %295 = vst [vmem:[%s189 + $0xd0] sm:$0xf] %v294
                %v296 = vld [vmem:[%s188 + $0x1a8] sm:$0xf]
                %297 = vst [vmem:[%s189 + $0xd4] sm:$0xf] %v296
                %v298 = vld [vmem:[%s188 + $0x1b0] sm:$0xf]
                %299 = vst [vmem:[%s189 + $0xd8] sm:$0xf] %v298
                %v300 = vld [vmem:[%s188 + $0x1b8] sm:$0xf]
                %301 = vst [vmem:[%s189 + $0xdc] sm:$0xf] %v300
                %v302 = vld [vmem:[%s188 + $0x1c0] sm:$0xf]
                %303 = vst [vmem:[%s189 + $0xe0] sm:$0xf] %v302
                %v304 = vld [vmem:[%s188 + $0x1c8] sm:$0xf]
                %305 = vst [vmem:[%s189 + $0xe4] sm:$0xf] %v304
                %v306 = vld [vmem:[%s188 + $0x1d0] sm:$0xf]
                %307 = vst [vmem:[%s189 + $0xe8] sm:$0xf] %v306
                %v308 = vld [vmem:[%s188 + $0x1d8] sm:$0xf]
                %309 = vst [vmem:[%s189 + $0xec] sm:$0xf] %v308
                %v310 = vld [vmem:[%s188 + $0x1e0] sm:$0xf]
                %311 = vst [vmem:[%s189 + $0xf0] sm:$0xf] %v310
                %v312 = vld [vmem:[%s188 + $0x1e8] sm:$0xf]
                %313 = vst [vmem:[%s189 + $0xf4] sm:$0xf] %v312
                %v314 = vld [vmem:[%s188 + $0x1f0] sm:$0xf]
                %315 = vst [vmem:[%s189 + $0xf8] sm:$0xf] %v314
                %v316 = vld [vmem:[%s188 + $0x1f8] sm:$0xf]
                %317 = vst [vmem:[%s189 + $0xfc] sm:$0xf] %v316
                %v318 = vld [vmem:[%s188 + $0x200] sm:$0xf]
                %319 = vst [vmem:[%s189 + $0x100] sm:$0xf] %v318
                %v320 = vld [vmem:[%s188 + $0x208] sm:$0xf]
                %321 = vst [vmem:[%s189 + $0x104] sm:$0xf] %v320
                %v322 = vld [vmem:[%s188 + $0x210] sm:$0xf]
                %323 = vst [vmem:[%s189 + $0x108] sm:$0xf] %v322
                %v324 = vld [vmem:[%s188 + $0x218] sm:$0xf]
                %325 = vst [vmem:[%s189 + $0x10c] sm:$0xf] %v324
                %v326 = vld [vmem:[%s188 + $0x220] sm:$0xf]
                %327 = vst [vmem:[%s189 + $0x110] sm:$0xf] %v326
                %v328 = vld [vmem:[%s188 + $0x228] sm:$0xf]
                %329 = vst [vmem:[%s189 + $0x114] sm:$0xf] %v328
                %v330 = vld [vmem:[%s188 + $0x230] sm:$0xf]
                %331 = vst [vmem:[%s189 + $0x118] sm:$0xf] %v330
                %v332 = vld [vmem:[%s188 + $0x238] sm:$0xf]
                %333 = vst [vmem:[%s189 + $0x11c] sm:$0xf] %v332
                %v334 = vld [vmem:[%s188 + $0x240] sm:$0xf]
                %335 = vst [vmem:[%s189 + $0x120] sm:$0xf] %v334
                %v336 = vld [vmem:[%s188 + $0x248] sm:$0xf]
                %337 = vst [vmem:[%s189 + $0x124] sm:$0xf] %v336
                %v338 = vld [vmem:[%s188 + $0x250] sm:$0xf]
                %339 = vst [vmem:[%s189 + $0x128] sm:$0xf] %v338
                %v340 = vld [vmem:[%s188 + $0x258] sm:$0xf]
                %341 = vst [vmem:[%s189 + $0x12c] sm:$0xf] %v340
                %v342 = vld [vmem:[%s188 + $0x260] sm:$0xf]
                %343 = vst [vmem:[%s189 + $0x130] sm:$0xf] %v342
                %v344 = vld [vmem:[%s188 + $0x268] sm:$0xf]
                %345 = vst [vmem:[%s189 + $0x134] sm:$0xf] %v344
                %v346 = vld [vmem:[%s188 + $0x270] sm:$0xf]
                %347 = vst [vmem:[%s189 + $0x138] sm:$0xf] %v346
                %v348 = vld [vmem:[%s188 + $0x278] sm:$0xf]
                %349 = vst [vmem:[%s189 + $0x13c] sm:$0xf] %v348
                %v350 = vld [vmem:[%s188 + $0x280] sm:$0xf]
                %351 = vst [vmem:[%s189 + $0x140] sm:$0xf] %v350
                %v352 = vld [vmem:[%s188 + $0x288] sm:$0xf]
                %353 = vst [vmem:[%s189 + $0x144] sm:$0xf] %v352
                %v354 = vld [vmem:[%s188 + $0x290] sm:$0xf]
                %355 = vst [vmem:[%s189 + $0x148] sm:$0xf] %v354
                %v356 = vld [vmem:[%s188 + $0x298] sm:$0xf]
                %357 = vst [vmem:[%s189 + $0x14c] sm:$0xf] %v356
                %v358 = vld [vmem:[%s188 + $0x2a0] sm:$0xf]
                %359 = vst [vmem:[%s189 + $0x150] sm:$0xf] %v358
                %v360 = vld [vmem:[%s188 + $0x2a8] sm:$0xf]
                %361 = vst [vmem:[%s189 + $0x154] sm:$0xf] %v360
                %v362 = vld [vmem:[%s188 + $0x2b0] sm:$0xf]
                %363 = vst [vmem:[%s189 + $0x158] sm:$0xf] %v362
                %v364 = vld [vmem:[%s188 + $0x2b8] sm:$0xf]
                %365 = vst [vmem:[%s189 + $0x15c] sm:$0xf] %v364
                %v366 = vld [vmem:[%s188 + $0x2c0] sm:$0xf]
                %367 = vst [vmem:[%s189 + $0x160] sm:$0xf] %v366
                %v368 = vld [vmem:[%s188 + $0x2c8] sm:$0xf]
                %369 = vst [vmem:[%s189 + $0x164] sm:$0xf] %v368
                %v370 = vld [vmem:[%s188 + $0x2d0] sm:$0xf]
                %371 = vst [vmem:[%s189 + $0x168] sm:$0xf] %v370
                %v372 = vld [vmem:[%s188 + $0x2d8] sm:$0xf]
                %373 = vst [vmem:[%s189 + $0x16c] sm:$0xf] %v372
                %v374 = vld [vmem:[%s188 + $0x2e0] sm:$0xf]
                %375 = vst [vmem:[%s189 + $0x170] sm:$0xf] %v374
                %v376 = vld [vmem:[%s188 + $0x2e8] sm:$0xf]
                %377 = vst [vmem:[%s189 + $0x174] sm:$0xf] %v376
                %v378 = vld [vmem:[%s188 + $0x2f0] sm:$0xf]
                %379 = vst [vmem:[%s189 + $0x178] sm:$0xf] %v378
                %v380 = vld [vmem:[%s188 + $0x2f8] sm:$0xf]
                %381 = vst [vmem:[%s189 + $0x17c] sm:$0xf] %v380
                %v382 = vld [vmem:[%s188 + $0x300] sm:$0xf]
                %383 = vst [vmem:[%s189 + $0x180] sm:$0xf] %v382
                %v384 = vld [vmem:[%s188 + $0x308] sm:$0xf]
                %385 = vst [vmem:[%s189 + $0x184] sm:$0xf] %v384
                %v386 = vld [vmem:[%s188 + $0x310] sm:$0xf]
                %387 = vst [vmem:[%s189 + $0x188] sm:$0xf] %v386
                %v388 = vld [vmem:[%s188 + $0x318] sm:$0xf]
                %389 = vst [vmem:[%s189 + $0x18c] sm:$0xf] %v388
                %v390 = vld [vmem:[%s188 + $0x320] sm:$0xf]
                %391 = vst [vmem:[%s189 + $0x190] sm:$0xf] %v390
                %v392 = vld [vmem:[%s188 + $0x328] sm:$0xf]
                %393 = vst [vmem:[%s189 + $0x194] sm:$0xf] %v392
                %v394 = vld [vmem:[%s188 + $0x330] sm:$0xf]
                %395 = vst [vmem:[%s189 + $0x198] sm:$0xf] %v394
                %v396 = vld [vmem:[%s188 + $0x338] sm:$0xf]
                %397 = vst [vmem:[%s189 + $0x19c] sm:$0xf] %v396
                %v398 = vld [vmem:[%s188 + $0x340] sm:$0xf]
                %399 = vst [vmem:[%s189 + $0x1a0] sm:$0xf] %v398
                %v400 = vld [vmem:[%s188 + $0x348] sm:$0xf]
                %401 = vst [vmem:[%s189 + $0x1a4] sm:$0xf] %v400
                %v402 = vld [vmem:[%s188 + $0x350] sm:$0xf]
                %403 = vst [vmem:[%s189 + $0x1a8] sm:$0xf] %v402
                %v404 = vld [vmem:[%s188 + $0x358] sm:$0xf]
                %405 = vst [vmem:[%s189 + $0x1ac] sm:$0xf] %v404
                %v406 = vld [vmem:[%s188 + $0x360] sm:$0xf]
                %407 = vst [vmem:[%s189 + $0x1b0] sm:$0xf] %v406
                %v408 = vld [vmem:[%s188 + $0x368] sm:$0xf]
                %409 = vst [vmem:[%s189 + $0x1b4] sm:$0xf] %v408
                %v410 = vld [vmem:[%s188 + $0x370] sm:$0xf]
                %411 = vst [vmem:[%s189 + $0x1b8] sm:$0xf] %v410
                %v412 = vld [vmem:[%s188 + $0x378] sm:$0xf]
                %413 = vst [vmem:[%s189 + $0x1bc] sm:$0xf] %v412
                %v414 = vld [vmem:[%s188 + $0x380] sm:$0xf]
                %415 = vst [vmem:[%s189 + $0x1c0] sm:$0xf] %v414
                %v416 = vld [vmem:[%s188 + $0x388] sm:$0xf]
                %417 = vst [vmem:[%s189 + $0x1c4] sm:$0xf] %v416
                %v418 = vld [vmem:[%s188 + $0x390] sm:$0xf]
                %419 = vst [vmem:[%s189 + $0x1c8] sm:$0xf] %v418
                %v420 = vld [vmem:[%s188 + $0x398] sm:$0xf]
                %421 = vst [vmem:[%s189 + $0x1cc] sm:$0xf] %v420
                %v422 = vld [vmem:[%s188 + $0x3a0] sm:$0xf]
                %423 = vst [vmem:[%s189 + $0x1d0] sm:$0xf] %v422
                %v424 = vld [vmem:[%s188 + $0x3a8] sm:$0xf]
                %425 = vst [vmem:[%s189 + $0x1d4] sm:$0xf] %v424
                %v426 = vld [vmem:[%s188 + $0x3b0] sm:$0xf]
                %427 = vst [vmem:[%s189 + $0x1d8] sm:$0xf] %v426
                %v428 = vld [vmem:[%s188 + $0x3b8] sm:$0xf]
                %429 = vst [vmem:[%s189 + $0x1dc] sm:$0xf] %v428
                %v430 = vld [vmem:[%s188 + $0x3c0] sm:$0xf]
                %431 = vst [vmem:[%s189 + $0x1e0] sm:$0xf] %v430
                %v432 = vld [vmem:[%s188 + $0x3c8] sm:$0xf]
                %433 = vst [vmem:[%s189 + $0x1e4] sm:$0xf] %v432
                %v434 = vld [vmem:[%s188 + $0x3d0] sm:$0xf]
                %435 = vst [vmem:[%s189 + $0x1e8] sm:$0xf] %v434
                %v436 = vld [vmem:[%s188 + $0x3d8] sm:$0xf]
                %437 = vst [vmem:[%s189 + $0x1ec] sm:$0xf] %v436
                %v438 = vld [vmem:[%s188 + $0x3e0] sm:$0xf]
                %439 = vst [vmem:[%s189 + $0x1f0] sm:$0xf] %v438
                %v440 = vld [vmem:[%s188 + $0x3e8] sm:$0xf]
                %441 = vst [vmem:[%s189 + $0x1f4] sm:$0xf] %v440
                %v442 = vld [vmem:[%s188 + $0x3f0] sm:$0xf]
                %443 = vst [vmem:[%s189 + $0x1f8] sm:$0xf] %v442
                %v444 = vld [vmem:[%s188 + $0x3f8] sm:$0xf]
                %445 = vst [vmem:[%s189 + $0x1fc] sm:$0xf] %v444
                %v446 = vld [vmem:[%s188 + $0x400] sm:$0xf]
                %447 = vst [vmem:[%s189 + $0x200] sm:$0xf] %v446
                %v448 = vld [vmem:[%s188 + $0x408] sm:$0xf]
                %449 = vst [vmem:[%s189 + $0x204] sm:$0xf] %v448
                %v450 = vld [vmem:[%s188 + $0x410] sm:$0xf]
                %451 = vst [vmem:[%s189 + $0x208] sm:$0xf] %v450
                %v452 = vld [vmem:[%s188 + $0x418] sm:$0xf]
                %453 = vst [vmem:[%s189 + $0x20c] sm:$0xf] %v452
                %v454 = vld [vmem:[%s188 + $0x420] sm:$0xf]
                %455 = vst [vmem:[%s189 + $0x210] sm:$0xf] %v454
                %v456 = vld [vmem:[%s188 + $0x428] sm:$0xf]
                %457 = vst [vmem:[%s189 + $0x214] sm:$0xf] %v456
                %v458 = vld [vmem:[%s188 + $0x430] sm:$0xf]
                %459 = vst [vmem:[%s189 + $0x218] sm:$0xf] %v458
                %v460 = vld [vmem:[%s188 + $0x438] sm:$0xf]
                %461 = vst [vmem:[%s189 + $0x21c] sm:$0xf] %v460
                %v462 = vld [vmem:[%s188 + $0x440] sm:$0xf]
                %463 = vst [vmem:[%s189 + $0x220] sm:$0xf] %v462
                %v464 = vld [vmem:[%s188 + $0x448] sm:$0xf]
                %465 = vst [vmem:[%s189 + $0x224] sm:$0xf] %v464
                %v466 = vld [vmem:[%s188 + $0x450] sm:$0xf]
                %467 = vst [vmem:[%s189 + $0x228] sm:$0xf] %v466
                %v468 = vld [vmem:[%s188 + $0x458] sm:$0xf]
                %469 = vst [vmem:[%s189 + $0x22c] sm:$0xf] %v468
                %v470 = vld [vmem:[%s188 + $0x460] sm:$0xf]
                %471 = vst [vmem:[%s189 + $0x230] sm:$0xf] %v470
                %v472 = vld [vmem:[%s188 + $0x468] sm:$0xf]
                %473 = vst [vmem:[%s189 + $0x234] sm:$0xf] %v472
                %v474 = vld [vmem:[%s188 + $0x470] sm:$0xf]
                %475 = vst [vmem:[%s189 + $0x238] sm:$0xf] %v474
                %v476 = vld [vmem:[%s188 + $0x478] sm:$0xf]
                %477 = vst [vmem:[%s189 + $0x23c] sm:$0xf] %v476
                %v478 = vld [vmem:[%s188 + $0x480] sm:$0xf]
                %479 = vst [vmem:[%s189 + $0x240] sm:$0xf] %v478
                %v480 = vld [vmem:[%s188 + $0x488] sm:$0xf]
                %481 = vst [vmem:[%s189 + $0x244] sm:$0xf] %v480
                %v482 = vld [vmem:[%s188 + $0x490] sm:$0xf]
                %483 = vst [vmem:[%s189 + $0x248] sm:$0xf] %v482
                %v484 = vld [vmem:[%s188 + $0x498] sm:$0xf]
                %485 = vst [vmem:[%s189 + $0x24c] sm:$0xf] %v484
                %v486 = vld [vmem:[%s188 + $0x4a0] sm:$0xf]
                %487 = vst [vmem:[%s189 + $0x250] sm:$0xf] %v486
                %v488 = vld [vmem:[%s188 + $0x4a8] sm:$0xf]
                %489 = vst [vmem:[%s189 + $0x254] sm:$0xf] %v488
                %v490 = vld [vmem:[%s188 + $0x4b0] sm:$0xf]
                %491 = vst [vmem:[%s189 + $0x258] sm:$0xf] %v490
                %v492 = vld [vmem:[%s188 + $0x4b8] sm:$0xf]
                %493 = vst [vmem:[%s189 + $0x25c] sm:$0xf] %v492
                %v494 = vld [vmem:[%s188 + $0x4c0] sm:$0xf]
                %495 = vst [vmem:[%s189 + $0x260] sm:$0xf] %v494
                %v496 = vld [vmem:[%s188 + $0x4c8] sm:$0xf]
                %497 = vst [vmem:[%s189 + $0x264] sm:$0xf] %v496
                %v498 = vld [vmem:[%s188 + $0x4d0] sm:$0xf]
                %499 = vst [vmem:[%s189 + $0x268] sm:$0xf] %v498
                %v500 = vld [vmem:[%s188 + $0x4d8] sm:$0xf]
                %501 = vst [vmem:[%s189 + $0x26c] sm:$0xf] %v500
                %v502 = vld [vmem:[%s188 + $0x4e0] sm:$0xf]
                %503 = vst [vmem:[%s189 + $0x270] sm:$0xf] %v502
                %v504 = vld [vmem:[%s188 + $0x4e8] sm:$0xf]
                %505 = vst [vmem:[%s189 + $0x274] sm:$0xf] %v504
                %v506 = vld [vmem:[%s188 + $0x4f0] sm:$0xf]
                %507 = vst [vmem:[%s189 + $0x278] sm:$0xf] %v506
                %v508 = vld [vmem:[%s188 + $0x4f8] sm:$0xf]
                %509 = vst [vmem:[%s189 + $0x27c] sm:$0xf] %v508
                %v510 = vld [vmem:[%s188 + $0x500] sm:$0xf]
                %511 = vst [vmem:[%s189 + $0x280] sm:$0xf] %v510
                %v512 = vld [vmem:[%s188 + $0x508] sm:$0xf]
                %513 = vst [vmem:[%s189 + $0x284] sm:$0xf] %v512
                %v514 = vld [vmem:[%s188 + $0x510] sm:$0xf]
                %515 = vst [vmem:[%s189 + $0x288] sm:$0xf] %v514
                %v516 = vld [vmem:[%s188 + $0x518] sm:$0xf]
                %517 = vst [vmem:[%s189 + $0x28c] sm:$0xf] %v516
                %v518 = vld [vmem:[%s188 + $0x520] sm:$0xf]
                %519 = vst [vmem:[%s189 + $0x290] sm:$0xf] %v518
                %v520 = vld [vmem:[%s188 + $0x528] sm:$0xf]
                %521 = vst [vmem:[%s189 + $0x294] sm:$0xf] %v520
                %v522 = vld [vmem:[%s188 + $0x530] sm:$0xf]
                %523 = vst [vmem:[%s189 + $0x298] sm:$0xf] %v522
                %v524 = vld [vmem:[%s188 + $0x538] sm:$0xf]
                %525 = vst [vmem:[%s189 + $0x29c] sm:$0xf] %v524
              $region41: #{conv1x1_bn.2} parent=35 // loop_footer
                %s187 = sadd.s32 1, %s183
              $region42: #{conv1x1_bn.2} parent=35 // loop_footer_branch
                %182 = sbr.rel target = $region38
              $region43: #{conv1x1_bn.2} parent=35 // loop_exit
                _
            $region36: #{conv1x1_bn.2} parent=27 // pred_fallthru
              _
          $region28: #{conv1x1_bn.2} parent=23 // pred_fallthru
            _
          %881 = vnop
        $region24: #{conv1x1_bn.2} parent=19 // pred_fallthru
          _
      $region20: #{conv1x1_bn.2} parent=5 // pred_fallthru
        _
      %p882 = scmp.le.s32.totalorder 1, %s11
      %p883 = scmp.lt.s32.totalorder %s11, 3
      %p884 = pnand %p882, %p883
      %p885 = pneg %p884
      // Predicated region
      $region62: #{conv1x1_bn.2} parent=5 // pred_check
        _
      $region63: #{conv1x1_bn.2} parent=5 // pred_check_branch
        %887 = sbr.rel (%p884) target = $region65
      $region64: #{conv1x1_bn.2} parent=5 // pred_region
        %s888 = ssub.s32 %s11, 1
        %s889 = sand.u32 %s38, 1
        %s890 = sand.u32 %s38, 1
        %s891 = smul.addr %s890, 672
        %s892 = scalar_lea.vmem [#allocation2], %s891
        // Predicated region
        $region66: #{conv1x1_bn.2} parent=64 // pred_check
          %p893 = pneg %p51
        $region67: #{conv1x1_bn.2} parent=64 // pred_check_branch
          %895 = sbr.rel (%p893) target = $region69
        $region68: #{conv1x1_bn.2} parent=64 // pred_region
          _
        $region69: #{conv1x1_bn.2} parent=64 // pred_fallthru
          _
        %s896 = sand.u32 %s38, 1
        %s897 = sand.u32 %s38, 1
        %s898 = smul.addr %s897, 672
        %s899 = scalar_lea.vmem [#allocation2], %s898
        %p900 = pneg %p51
        %p901 = pneg %p48
        %p902 = pneg %p72
        %p903 = pneg %p69
        %p904 = pneg %p100
        %p905 = pneg %p97
        %s906 = sand.u32 %s87, 1
        %s907 = sand.u32 %s87, 1
        %s908 = smul.addr %s907, 224
        %s909 = scalar_lea.vmem [#allocation3], %s908
        %p910 = pneg %p121
        %p911 = pneg %p118
        %p912 = pneg %p142
        %p913 = pneg %p139
        %p915 = scmp.eq.s32.totalorder %s20, 0
        %p916 = scmp.eq.s32.totalorder %s21, 0
        %p917 = pnand %p915, %p916
        %p918 = pneg %p917
        // Predicated region
        $region70: #{conv1x1_bn.2} parent=64 // pred_check
          _
        $region71: #{conv1x1_bn.2} parent=64 // pred_check_branch
          %920 = sbr.rel (%p917) target = $region73
        $region72: #{conv1x1_bn.2} parent=64 // pred_region
          %vm921 = vcmask 7168
          %922 = vst.msk [vmem:[%s3] sm:$0xff] %vm921, 0.0
          %923 = vst.msk [vmem:[%s3 + $0x8] sm:$0xff] %vm921, 0.0
          %924 = vst.msk [vmem:[%s3 + $0x10] sm:$0xff] %vm921, 0.0
          %925 = vst.msk [vmem:[%s3 + $0x18] sm:$0xff] %vm921, 0.0
          %926 = vst.msk [vmem:[%s3 + $0x20] sm:$0xff] %vm921, 0.0
          %927 = vst.msk [vmem:[%s3 + $0x28] sm:$0xff] %vm921, 0.0
          %928 = vst.msk [vmem:[%s3 + $0x30] sm:$0xff] %vm921, 0.0
          %929 = vst.msk [vmem:[%s3 + $0x38] sm:$0xff] %vm921, 0.0
          %930 = vst.msk [vmem:[%s3 + $0x40] sm:$0xff] %vm921, 0.0
          %931 = vst.msk [vmem:[%s3 + $0x48] sm:$0xff] %vm921, 0.0
          %932 = vst.msk [vmem:[%s3 + $0x50] sm:$0xff] %vm921, 0.0
          %933 = vst.msk [vmem:[%s3 + $0x58] sm:$0xff] %vm921, 0.0
          %934 = vst.msk [vmem:[%s3 + $0x60] sm:$0xff] %vm921, 0.0
          %935 = vst.msk [vmem:[%s3 + $0x68] sm:$0xff] %vm921, 0.0
          %936 = vst.msk [vmem:[%s3 + $0x70] sm:$0xff] %vm921, 0.0
          %937 = vst.msk [vmem:[%s3 + $0x78] sm:$0xff] %vm921, 0.0
          %938 = vst.msk [vmem:[%s3 + $0x80] sm:$0xff] %vm921, 0.0
          %939 = vst.msk [vmem:[%s3 + $0x88] sm:$0xff] %vm921, 0.0
          %940 = vst.msk [vmem:[%s3 + $0x90] sm:$0xff] %vm921, 0.0
          %941 = vst.msk [vmem:[%s3 + $0x98] sm:$0xff] %vm921, 0.0
          %942 = vst.msk [vmem:[%s3 + $0xa0] sm:$0xff] %vm921, 0.0
          %943 = vst.msk [vmem:[%s3 + $0xa8] sm:$0xff] %vm921, 0.0
          %944 = vst.msk [vmem:[%s3 + $0xb0] sm:$0xff] %vm921, 0.0
          %945 = vst.msk [vmem:[%s3 + $0xb8] sm:$0xff] %vm921, 0.0
          %946 = vst.msk [vmem:[%s3 + $0xc0] sm:$0xff] %vm921, 0.0
          %947 = vst.msk [vmem:[%s3 + $0xc8] sm:$0xff] %vm921, 0.0
          %948 = vst.msk [vmem:[%s3 + $0xd0] sm:$0xff] %vm921, 0.0
          %949 = vst.msk [vmem:[%s3 + $0xd8] sm:$0xff] %vm921, 0.0
          %950 = vst.msk [vmem:[%s4] sm:$0xff] %vm921, 0.0
          %951 = vst.msk [vmem:[%s4 + $0x8] sm:$0xff] %vm921, 0.0
          %952 = vst.msk [vmem:[%s4 + $0x10] sm:$0xff] %vm921, 0.0
          %953 = vst.msk [vmem:[%s4 + $0x18] sm:$0xff] %vm921, 0.0
          %954 = vst.msk [vmem:[%s4 + $0x20] sm:$0xff] %vm921, 0.0
          %955 = vst.msk [vmem:[%s4 + $0x28] sm:$0xff] %vm921, 0.0
          %956 = vst.msk [vmem:[%s4 + $0x30] sm:$0xff] %vm921, 0.0
          %957 = vst.msk [vmem:[%s4 + $0x38] sm:$0xff] %vm921, 0.0
          %958 = vst.msk [vmem:[%s4 + $0x40] sm:$0xff] %vm921, 0.0
          %959 = vst.msk [vmem:[%s4 + $0x48] sm:$0xff] %vm921, 0.0
          %960 = vst.msk [vmem:[%s4 + $0x50] sm:$0xff] %vm921, 0.0
          %961 = vst.msk [vmem:[%s4 + $0x58] sm:$0xff] %vm921, 0.0
          %962 = vst.msk [vmem:[%s4 + $0x60] sm:$0xff] %vm921, 0.0
          %963 = vst.msk [vmem:[%s4 + $0x68] sm:$0xff] %vm921, 0.0
          %964 = vst.msk [vmem:[%s4 + $0x70] sm:$0xff] %vm921, 0.0
          %965 = vst.msk [vmem:[%s4 + $0x78] sm:$0xff] %vm921, 0.0
          %966 = vst.msk [vmem:[%s4 + $0x80] sm:$0xff] %vm921, 0.0
          %967 = vst.msk [vmem:[%s4 + $0x88] sm:$0xff] %vm921, 0.0
          %968 = vst.msk [vmem:[%s4 + $0x90] sm:$0xff] %vm921, 0.0
          %969 = vst.msk [vmem:[%s4 + $0x98] sm:$0xff] %vm921, 0.0
          %970 = vst.msk [vmem:[%s4 + $0xa0] sm:$0xff] %vm921, 0.0
          %971 = vst.msk [vmem:[%s4 + $0xa8] sm:$0xff] %vm921, 0.0
          %972 = vst.msk [vmem:[%s4 + $0xb0] sm:$0xff] %vm921, 0.0
          %973 = vst.msk [vmem:[%s4 + $0xb8] sm:$0xff] %vm921, 0.0
          %974 = vst.msk [vmem:[%s4 + $0xc0] sm:$0xff] %vm921, 0.0
          %975 = vst.msk [vmem:[%s4 + $0xc8] sm:$0xff] %vm921, 0.0
          %976 = vst.msk [vmem:[%s4 + $0xd0] sm:$0xff] %vm921, 0.0
          %977 = vst.msk [vmem:[%s4 + $0xd8] sm:$0xff] %vm921, 0.0
        $region73: #{conv1x1_bn.2} parent=64 // pred_fallthru
          _
        %v978 = vld [vmem:[%s892] sm:$0xf]
        %v979 = vld [vmem:[%s892 + $0x4] sm:$0xf]
        %v980 = vld [vmem:[%s892 + $0x8] sm:$0xf]
        %v981 = vld [vmem:[%s892 + $0xc] sm:$0xf]
        %v982 = vld [vmem:[%s892 + $0x10] sm:$0xf]
        %v983 = vld [vmem:[%s892 + $0x14] sm:$0xf]
        %v984 = vld [vmem:[%s892 + $0x18] sm:$0xf]
        %v985 = vld [vmem:[%s892 + $0x1c] sm:$0xf]
        %v986 = vld [vmem:[%s892 + $0x20] sm:$0xf]
        %v987 = vld [vmem:[%s892 + $0x24] sm:$0xf]
        %v988 = vld [vmem:[%s892 + $0x28] sm:$0xf]
        %v989 = vld [vmem:[%s892 + $0x2c] sm:$0xf]
        %v990 = vld [vmem:[%s892 + $0x30] sm:$0xf]
        %v991 = vld [vmem:[%s892 + $0x34] sm:$0xf]
        %v992 = vld [vmem:[%s892 + $0x38] sm:$0xf]
        %v993 = vld [vmem:[%s892 + $0x3c] sm:$0xf]
        %v994 = vld [vmem:[%s892 + $0x40] sm:$0xf]
        %v995 = vld [vmem:[%s892 + $0x44] sm:$0xf]
        %v996 = vld [vmem:[%s892 + $0x48] sm:$0xf]
        %v997 = vld [vmem:[%s892 + $0x4c] sm:$0xf]
        %v998 = vld [vmem:[%s892 + $0x50] sm:$0xf]
        %v999 = vld [vmem:[%s892 + $0x54] sm:$0xf]
        %v1000 = vld [vmem:[%s892 + $0x58] sm:$0xf]
        %v1001 = vld [vmem:[%s892 + $0x5c] sm:$0xf]
        %v1002 = vld [vmem:[%s892 + $0x60] sm:$0xf]
        %v1003 = vld [vmem:[%s892 + $0x64] sm:$0xf]
        %v1004 = vld [vmem:[%s892 + $0x68] sm:$0xf]
        %v1005 = vld [vmem:[%s892 + $0x6c] sm:$0xf]
        %v1006 = vld [vmem:[%s892 + $0x70] sm:$0xf]
        %v1007 = vld [vmem:[%s892 + $0x74] sm:$0xf]
        %v1008 = vld [vmem:[%s892 + $0x78] sm:$0xf]
        %v1009 = vld [vmem:[%s892 + $0x7c] sm:$0xf]
        %v1010 = vld [vmem:[%s892 + $0x80] sm:$0xf]
        %v1011 = vld [vmem:[%s892 + $0x84] sm:$0xf]
        %v1012 = vld [vmem:[%s892 + $0x88] sm:$0xf]
        %v1013 = vld [vmem:[%s892 + $0x8c] sm:$0xf]
        %v1014 = vld [vmem:[%s892 + $0x90] sm:$0xf]
        %v1015 = vld [vmem:[%s892 + $0x94] sm:$0xf]
        %v1016 = vld [vmem:[%s892 + $0x98] sm:$0xf]
        %v1017 = vld [vmem:[%s892 + $0x9c] sm:$0xf]
        %v1018 = vld [vmem:[%s892 + $0xa0] sm:$0xf]
        %v1019 = vld [vmem:[%s892 + $0xa4] sm:$0xf]
        %v1020 = vld [vmem:[%s892 + $0xa8] sm:$0xf]
        %v1021 = vld [vmem:[%s892 + $0xac] sm:$0xf]
        %v1022 = vld [vmem:[%s892 + $0xb0] sm:$0xf]
        %v1023 = vld [vmem:[%s892 + $0xb4] sm:$0xf]
        %v1024 = vld [vmem:[%s892 + $0xb8] sm:$0xf]
        %v1025 = vld [vmem:[%s892 + $0xbc] sm:$0xf]
        %v1026 = vld [vmem:[%s892 + $0xc0] sm:$0xf]
        %v1027 = vld [vmem:[%s892 + $0xc4] sm:$0xf]
        %v1028 = vld [vmem:[%s892 + $0xc8] sm:$0xf]
        %v1029 = vld [vmem:[%s892 + $0xcc] sm:$0xf]
        %v1030 = vld [vmem:[%s892 + $0xd0] sm:$0xf]
        %v1031 = vld [vmem:[%s892 + $0xd4] sm:$0xf]
        %v1032 = vld [vmem:[%s892 + $0xd8] sm:$0xf]
        %v1033 = vld [vmem:[%s892 + $0xdc] sm:$0xf]
        %v1034 = vld [vmem:[%s892 + $0xe0] sm:$0xf]
        %v1035 = vld [vmem:[%s892 + $0xe4] sm:$0xf]
        %v1036 = vld [vmem:[%s892 + $0xe8] sm:$0xf]
        %v1037 = vld [vmem:[%s892 + $0xec] sm:$0xf]
        %v1038 = vld [vmem:[%s892 + $0xf0] sm:$0xf]
        %v1039 = vld [vmem:[%s892 + $0xf4] sm:$0xf]
        %v1040 = vld [vmem:[%s892 + $0xf8] sm:$0xf]
        %v1041 = vld [vmem:[%s892 + $0xfc] sm:$0xf]
        %v1042 = vld [vmem:[%s892 + $0x100] sm:$0xf]
        %v1043 = vld [vmem:[%s892 + $0x104] sm:$0xf]
        %v1044 = vld [vmem:[%s892 + $0x108] sm:$0xf]
        %v1045 = vld [vmem:[%s892 + $0x10c] sm:$0xf]
        %v1046 = vld [vmem:[%s892 + $0x110] sm:$0xf]
        %v1047 = vld [vmem:[%s892 + $0x114] sm:$0xf]
        %v1048 = vld [vmem:[%s892 + $0x118] sm:$0xf]
        %v1049 = vld [vmem:[%s892 + $0x11c] sm:$0xf]
        %v1050 = vld [vmem:[%s892 + $0x120] sm:$0xf]
        %v1051 = vld [vmem:[%s892 + $0x124] sm:$0xf]
        %v1052 = vld [vmem:[%s892 + $0x128] sm:$0xf]
        %v1053 = vld [vmem:[%s892 + $0x12c] sm:$0xf]
        %v1054 = vld [vmem:[%s892 + $0x130] sm:$0xf]
        %v1055 = vld [vmem:[%s892 + $0x134] sm:$0xf]
        %v1056 = vld [vmem:[%s892 + $0x138] sm:$0xf]
        %v1057 = vld [vmem:[%s892 + $0x13c] sm:$0xf]
        %v1058 = vld [vmem:[%s892 + $0x140] sm:$0xf]
        %v1059 = vld [vmem:[%s892 + $0x144] sm:$0xf]
        %v1060 = vld [vmem:[%s892 + $0x148] sm:$0xf]
        %v1061 = vld [vmem:[%s892 + $0x14c] sm:$0xf]
        %v1062 = vld [vmem:[%s892 + $0x150] sm:$0xf]
        %v1063 = vld [vmem:[%s892 + $0x154] sm:$0xf]
        %v1064 = vld [vmem:[%s892 + $0x158] sm:$0xf]
        %v1065 = vld [vmem:[%s892 + $0x15c] sm:$0xf]
        %v1066 = vld [vmem:[%s892 + $0x160] sm:$0xf]
        %v1067 = vld [vmem:[%s892 + $0x164] sm:$0xf]
        %v1068 = vld [vmem:[%s892 + $0x168] sm:$0xf]
        %v1069 = vld [vmem:[%s892 + $0x16c] sm:$0xf]
        %v1070 = vld [vmem:[%s892 + $0x170] sm:$0xf]
        %v1071 = vld [vmem:[%s892 + $0x174] sm:$0xf]
        %v1072 = vld [vmem:[%s892 + $0x178] sm:$0xf]
        %v1073 = vld [vmem:[%s892 + $0x17c] sm:$0xf]
        %v1074 = vld [vmem:[%s892 + $0x180] sm:$0xf]
        %v1075 = vld [vmem:[%s892 + $0x184] sm:$0xf]
        %v1076 = vld [vmem:[%s892 + $0x188] sm:$0xf]
        %v1077 = vld [vmem:[%s892 + $0x18c] sm:$0xf]
        %v1078 = vld [vmem:[%s892 + $0x190] sm:$0xf]
        %v1079 = vld [vmem:[%s892 + $0x194] sm:$0xf]
        %v1080 = vld [vmem:[%s892 + $0x198] sm:$0xf]
        %v1081 = vld [vmem:[%s892 + $0x19c] sm:$0xf]
        %v1082 = vld [vmem:[%s892 + $0x1a0] sm:$0xf]
        %v1083 = vld [vmem:[%s892 + $0x1a4] sm:$0xf]
        %v1084 = vld [vmem:[%s892 + $0x1a8] sm:$0xf]
        %v1085 = vld [vmem:[%s892 + $0x1ac] sm:$0xf]
        %v1086 = vld [vmem:[%s892 + $0x1b0] sm:$0xf]
        %v1087 = vld [vmem:[%s892 + $0x1b4] sm:$0xf]
        %v1088 = vld [vmem:[%s892 + $0x1b8] sm:$0xf]
        %v1089 = vld [vmem:[%s892 + $0x1bc] sm:$0xf]
        %v1090 = vld [vmem:[%s892 + $0x1c0] sm:$0xf]
        %v1091 = vld [vmem:[%s892 + $0x1c4] sm:$0xf]
        %v1092 = vld [vmem:[%s892 + $0x1c8] sm:$0xf]
        %v1093 = vld [vmem:[%s892 + $0x1cc] sm:$0xf]
        %v1094 = vld [vmem:[%s892 + $0x1d0] sm:$0xf]
        %v1095 = vld [vmem:[%s892 + $0x1d4] sm:$0xf]
        %v1096 = vld [vmem:[%s892 + $0x1d8] sm:$0xf]
        %v1097 = vld [vmem:[%s892 + $0x1dc] sm:$0xf]
        %v1098 = vld [vmem:[%s892 + $0x1e0] sm:$0xf]
        %v1099 = vld [vmem:[%s892 + $0x1e4] sm:$0xf]
        %v1100 = vld [vmem:[%s892 + $0x1e8] sm:$0xf]
        %v1101 = vld [vmem:[%s892 + $0x1ec] sm:$0xf]
        %v1102 = vld [vmem:[%s892 + $0x1f0] sm:$0xf]
        %v1103 = vld [vmem:[%s892 + $0x1f4] sm:$0xf]
        %v1104 = vld [vmem:[%s892 + $0x1f8] sm:$0xf]
        %v1105 = vld [vmem:[%s892 + $0x1fc] sm:$0xf]
        %v1106 = vld [vmem:[%s892 + $0x200] sm:$0xf]
        %v1107 = vld [vmem:[%s892 + $0x204] sm:$0xf]
        %v1108 = vld [vmem:[%s892 + $0x208] sm:$0xf]
        %v1109 = vld [vmem:[%s892 + $0x20c] sm:$0xf]
        %v1110 = vld [vmem:[%s892 + $0x210] sm:$0xf]
        %v1111 = vld [vmem:[%s892 + $0x214] sm:$0xf]
        %v1112 = vld [vmem:[%s892 + $0x218] sm:$0xf]
        %v1113 = vld [vmem:[%s892 + $0x21c] sm:$0xf]
        %v1114 = vld [vmem:[%s892 + $0x220] sm:$0xf]
        %v1115 = vld [vmem:[%s892 + $0x224] sm:$0xf]
        %v1116 = vld [vmem:[%s892 + $0x228] sm:$0xf]
        %v1117 = vld [vmem:[%s892 + $0x22c] sm:$0xf]
        %v1118 = vld [vmem:[%s892 + $0x230] sm:$0xf]
        %v1119 = vld [vmem:[%s892 + $0x234] sm:$0xf]
        %v1120 = vld [vmem:[%s892 + $0x238] sm:$0xf]
        %v1121 = vld [vmem:[%s892 + $0x23c] sm:$0xf]
        %v1122 = vld [vmem:[%s892 + $0x240] sm:$0xf]
        %v1123 = vld [vmem:[%s892 + $0x244] sm:$0xf]
        %v1124 = vld [vmem:[%s892 + $0x248] sm:$0xf]
        %v1125 = vld [vmem:[%s892 + $0x24c] sm:$0xf]
        %v1126 = vld [vmem:[%s892 + $0x250] sm:$0xf]
        %v1127 = vld [vmem:[%s892 + $0x254] sm:$0xf]
        %v1128 = vld [vmem:[%s892 + $0x258] sm:$0xf]
        %v1129 = vld [vmem:[%s892 + $0x25c] sm:$0xf]
        %v1130 = vld [vmem:[%s892 + $0x260] sm:$0xf]
        %v1131 = vld [vmem:[%s892 + $0x264] sm:$0xf]
        %v1132 = vld [vmem:[%s892 + $0x268] sm:$0xf]
        %v1133 = vld [vmem:[%s892 + $0x26c] sm:$0xf]
        %v1134 = vld [vmem:[%s892 + $0x270] sm:$0xf]
        %v1135 = vld [vmem:[%s892 + $0x274] sm:$0xf]
        %v1136 = vld [vmem:[%s892 + $0x278] sm:$0xf]
        %v1137 = vld [vmem:[%s892 + $0x27c] sm:$0xf]
        %v1138 = vld [vmem:[%s892 + $0x280] sm:$0xf]
        %v1139 = vld [vmem:[%s892 + $0x284] sm:$0xf]
        %v1140 = vld [vmem:[%s892 + $0x288] sm:$0xf]
        %v1141 = vld [vmem:[%s892 + $0x28c] sm:$0xf]
        %v1142 = vld [vmem:[%s892 + $0x290] sm:$0xf]
        %v1143 = vld [vmem:[%s892 + $0x294] sm:$0xf]
        %v1144 = vld [vmem:[%s892 + $0x298] sm:$0xf]
        %v1145 = vld [vmem:[%s892 + $0x29c] sm:$0xf]
        %v1146 = vld [vmem:[%s1] sm:$0xff]
        %v1147 = vld [vmem:[%s1 + $0x8] sm:$0xff]
        %v1148 = vld [vmem:[%s1 + $0x10] sm:$0xff]
        %v1149 = vld [vmem:[%s1 + $0x18] sm:$0xff]
        %v1150 = vld [vmem:[%s1 + $0x20] sm:$0xff]
        %v1151 = vld [vmem:[%s1 + $0x28] sm:$0xf]
        %v1152 = vld [vmem:[%s1 + $0x2c] sm:$0xff]
        %v1153 = vld [vmem:[%s1 + $0x34] sm:$0xff]
        %v1154 = vld [vmem:[%s1 + $0x3c] sm:$0xff]
        %v1155 = vld [vmem:[%s1 + $0x44] sm:$0xff]
        %v1156 = vld [vmem:[%s1 + $0x4c] sm:$0xff]
        %v1157 = vld [vmem:[%s1 + $0x54] sm:$0xf]
        %v1158 = vld [vmem:[%s1 + $0x58] sm:$0xff]
        %v1159 = vld [vmem:[%s1 + $0x60] sm:$0xff]
        %v1160 = vld [vmem:[%s1 + $0x68] sm:$0xff]
        %v1161 = vld [vmem:[%s1 + $0x70] sm:$0xff]
        %v1162 = vld [vmem:[%s1 + $0x78] sm:$0xff]
        %v1163 = vld [vmem:[%s1 + $0x80] sm:$0xf]
        %v1164 = vld [vmem:[%s1 + $0x84] sm:$0xff]
        %v1165 = vld [vmem:[%s1 + $0x8c] sm:$0xff]
        %v1166 = vld [vmem:[%s1 + $0x94] sm:$0xff]
        %v1167 = vld [vmem:[%s1 + $0x9c] sm:$0xff]
        %v1168 = vld [vmem:[%s1 + $0xa4] sm:$0xff]
        %v1169 = vld [vmem:[%s1 + $0xac] sm:$0xf]
        %v1170 = vld [vmem:[%s1 + $0xb0] sm:$0xff]
        %v1171 = vld [vmem:[%s1 + $0xb8] sm:$0xff]
        %v1172 = vld [vmem:[%s1 + $0xc0] sm:$0xff]
        %v1173 = vld [vmem:[%s1 + $0xc8] sm:$0xff]
        %v1174 = vld [vmem:[%s1 + $0xd0] sm:$0xff]
        %v1175 = vld [vmem:[%s1 + $0xd8] sm:$0xf]
        %v1176 = vld [vmem:[%s1 + $0xdc] sm:$0xff]
        %v1177 = vld [vmem:[%s1 + $0xe4] sm:$0xff]
        %v1178 = vld [vmem:[%s1 + $0xec] sm:$0xff]
        %v1179 = vld [vmem:[%s1 + $0xf4] sm:$0xff]
        %v1180 = vld [vmem:[%s1 + $0xfc] sm:$0xff]
        %v1181 = vld [vmem:[%s1 + $0x104] sm:$0xf]
        %v1182 = vld [vmem:[%s1 + $0x108] sm:$0xff]
        %v1183 = vld [vmem:[%s1 + $0x110] sm:$0xff]
        %v1184 = vld [vmem:[%s1 + $0x118] sm:$0xff]
        %v1185 = vld [vmem:[%s1 + $0x120] sm:$0xff]
        %v1186 = vld [vmem:[%s1 + $0x128] sm:$0xff]
        %v1187 = vld [vmem:[%s1 + $0x130] sm:$0xf]
        %v1188 = vld [vmem:[%s1 + $0x134] sm:$0xff]
        %v1189 = vld [vmem:[%s1 + $0x13c] sm:$0xff]
        %v1190 = vld [vmem:[%s1 + $0x144] sm:$0xff]
        %v1191 = vld [vmem:[%s1 + $0x14c] sm:$0xff]
        %v1192 = vld [vmem:[%s1 + $0x154] sm:$0xff]
        %v1193 = vld [vmem:[%s1 + $0x15c] sm:$0xf]
        %v1194 = vld [vmem:[%s1 + $0x160] sm:$0xff]
        %v1195 = vld [vmem:[%s1 + $0x168] sm:$0xff]
        %v1196 = vld [vmem:[%s1 + $0x170] sm:$0xff]
        %v1197 = vld [vmem:[%s1 + $0x178] sm:$0xff]
        %v1198 = vld [vmem:[%s1 + $0x180] sm:$0xff]
        %v1199 = vld [vmem:[%s1 + $0x188] sm:$0xf]
        %v1200 = vld [vmem:[%s1 + $0x18c] sm:$0xff]
        %v1201 = vld [vmem:[%s1 + $0x194] sm:$0xff]
        %v1202 = vld [vmem:[%s1 + $0x19c] sm:$0xff]
        %v1203 = vld [vmem:[%s1 + $0x1a4] sm:$0xff]
        %v1204 = vld [vmem:[%s1 + $0x1ac] sm:$0xff]
        %v1205 = vld [vmem:[%s1 + $0x1b4] sm:$0xf]
        %v1206 = vld [vmem:[%s1 + $0x1b8] sm:$0xff]
        %v1207 = vld [vmem:[%s1 + $0x1c0] sm:$0xff]
        %v1208 = vld [vmem:[%s1 + $0x1c8] sm:$0xff]
        %v1209 = vld [vmem:[%s1 + $0x1d0] sm:$0xff]
        %v1210 = vld [vmem:[%s1 + $0x1d8] sm:$0xff]
        %v1211 = vld [vmem:[%s1 + $0x1e0] sm:$0xf]
        %v1212 = vld [vmem:[%s1 + $0x1e4] sm:$0xff]
        %v1213 = vld [vmem:[%s1 + $0x1ec] sm:$0xff]
        %v1214 = vld [vmem:[%s1 + $0x1f4] sm:$0xff]
        %v1215 = vld [vmem:[%s1 + $0x1fc] sm:$0xff]
        %v1216 = vld [vmem:[%s1 + $0x204] sm:$0xff]
        %v1217 = vld [vmem:[%s1 + $0x20c] sm:$0xf]
        %v1218 = vld [vmem:[%s1 + $0x210] sm:$0xff]
        %v1219 = vld [vmem:[%s1 + $0x218] sm:$0xff]
        %v1220 = vld [vmem:[%s1 + $0x220] sm:$0xff]
        %v1221 = vld [vmem:[%s1 + $0x228] sm:$0xff]
        %v1222 = vld [vmem:[%s1 + $0x230] sm:$0xff]
        %v1223 = vld [vmem:[%s1 + $0x238] sm:$0xf]
        %v1224 = vld [vmem:[%s1 + $0x23c] sm:$0xff]
        %v1225 = vld [vmem:[%s1 + $0x244] sm:$0xff]
        %v1226 = vld [vmem:[%s1 + $0x24c] sm:$0xff]
        %v1227 = vld [vmem:[%s1 + $0x254] sm:$0xff]
        %v1228 = vld [vmem:[%s1 + $0x25c] sm:$0xff]
        %v1229 = vld [vmem:[%s1 + $0x264] sm:$0xf]
        %v1230 = vld [vmem:[%s1 + $0x268] sm:$0xff]
        %v1231 = vld [vmem:[%s1 + $0x270] sm:$0xff]
        %v1232 = vld [vmem:[%s1 + $0x278] sm:$0xff]
        %v1233 = vld [vmem:[%s1 + $0x280] sm:$0xff]
        %v1234 = vld [vmem:[%s1 + $0x288] sm:$0xff]
        %v1235 = vld [vmem:[%s1 + $0x290] sm:$0xf]
        %v1236 = vld [vmem:[%s1 + $0x294] sm:$0xff]
        %v1237 = vld [vmem:[%s1 + $0x29c] sm:$0xff]
        %v1238 = vld [vmem:[%s1 + $0x2a4] sm:$0xff]
        %v1239 = vld [vmem:[%s1 + $0x2ac] sm:$0xff]
        %v1240 = vld [vmem:[%s1 + $0x2b4] sm:$0xff]
        %v1241 = vld [vmem:[%s1 + $0x2bc] sm:$0xf]
        %v1242 = vld [vmem:[%s1 + $0x2c0] sm:$0xff]
        %v1243 = vld [vmem:[%s1 + $0x2c8] sm:$0xff]
        %v1244 = vld [vmem:[%s1 + $0x2d0] sm:$0xff]
        %v1245 = vld [vmem:[%s1 + $0x2d8] sm:$0xff]
        %v1246 = vld [vmem:[%s1 + $0x2e0] sm:$0xff]
        %v1247 = vld [vmem:[%s1 + $0x2e8] sm:$0xf]
        %v1248 = vld [vmem:[%s1 + $0x2ec] sm:$0xff]
        %v1249 = vld [vmem:[%s1 + $0x2f4] sm:$0xff]
        %v1250 = vld [vmem:[%s1 + $0x2fc] sm:$0xff]
        %v1251 = vld [vmem:[%s1 + $0x304] sm:$0xff]
        %v1252 = vld [vmem:[%s1 + $0x30c] sm:$0xff]
        %v1253 = vld [vmem:[%s1 + $0x314] sm:$0xf]
        %v1254 = vld [vmem:[%s1 + $0x318] sm:$0xff]
        %v1255 = vld [vmem:[%s1 + $0x320] sm:$0xff]
        %v1256 = vld [vmem:[%s1 + $0x328] sm:$0xff]
        %v1257 = vld [vmem:[%s1 + $0x330] sm:$0xff]
        %v1258 = vld [vmem:[%s1 + $0x338] sm:$0xff]
        %v1259 = vld [vmem:[%s1 + $0x340] sm:$0xf]
        %v1260 = vld [vmem:[%s1 + $0x344] sm:$0xff]
        %v1261 = vld [vmem:[%s1 + $0x34c] sm:$0xff]
        %v1262 = vld [vmem:[%s1 + $0x354] sm:$0xff]
        %v1263 = vld [vmem:[%s1 + $0x35c] sm:$0xff]
        %v1264 = vld [vmem:[%s1 + $0x364] sm:$0xff]
        %v1265 = vld [vmem:[%s1 + $0x36c] sm:$0xf]
        %v1266 = vld [vmem:[%s1 + $0x370] sm:$0xff]
        %v1267 = vld [vmem:[%s1 + $0x378] sm:$0xff]
        %v1268 = vld [vmem:[%s1 + $0x380] sm:$0xff]
        %v1269 = vld [vmem:[%s1 + $0x388] sm:$0xff]
        %v1270 = vld [vmem:[%s1 + $0x390] sm:$0xff]
        %v1271 = vld [vmem:[%s1 + $0x398] sm:$0xf]
        %v1272 = vld [vmem:[%s1 + $0x39c] sm:$0xff]
        %v1273 = vld [vmem:[%s1 + $0x3a4] sm:$0xff]
        %v1274 = vld [vmem:[%s1 + $0x3ac] sm:$0xff]
        %v1275 = vld [vmem:[%s1 + $0x3b4] sm:$0xff]
        %v1276 = vld [vmem:[%s1 + $0x3bc] sm:$0xff]
        %v1277 = vld [vmem:[%s1 + $0x3c4] sm:$0xf]
        %v1278 = vld [vmem:[%s1 + $0x3c8] sm:$0xff]
        %v1279 = vld [vmem:[%s1 + $0x3d0] sm:$0xff]
        %v1280 = vld [vmem:[%s1 + $0x3d8] sm:$0xff]
        %v1281 = vld [vmem:[%s1 + $0x3e0] sm:$0xff]
        %v1282 = vld [vmem:[%s1 + $0x3e8] sm:$0xff]
        %v1283 = vld [vmem:[%s1 + $0x3f0] sm:$0xf]
        %v1284 = vld [vmem:[%s1 + $0x3f4] sm:$0xff]
        %v1285 = vld [vmem:[%s1 + $0x3fc] sm:$0xff]
        %v1286 = vld [vmem:[%s1 + $0x404] sm:$0xff]
        %v1287 = vld [vmem:[%s1 + $0x40c] sm:$0xff]
        %v1288 = vld [vmem:[%s1 + $0x414] sm:$0xff]
        %v1289 = vld [vmem:[%s1 + $0x41c] sm:$0xf]
        %v1290 = vld [vmem:[%s1 + $0x420] sm:$0xff]
        %v1291 = vld [vmem:[%s1 + $0x428] sm:$0xff]
        %v1292 = vld [vmem:[%s1 + $0x430] sm:$0xff]
        %v1293 = vld [vmem:[%s1 + $0x438] sm:$0xff]
        %v1294 = vld [vmem:[%s1 + $0x440] sm:$0xff]
        %v1295 = vld [vmem:[%s1 + $0x448] sm:$0xf]
        %v1296 = vld [vmem:[%s1 + $0x44c] sm:$0xff]
        %v1297 = vld [vmem:[%s1 + $0x454] sm:$0xff]
        %v1298 = vld [vmem:[%s1 + $0x45c] sm:$0xff]
        %v1299 = vld [vmem:[%s1 + $0x464] sm:$0xff]
        %v1300 = vld [vmem:[%s1 + $0x46c] sm:$0xff]
        %v1301 = vld [vmem:[%s1 + $0x474] sm:$0xf]
        %v1302 = vld [vmem:[%s1 + $0x478] sm:$0xff]
        %v1303 = vld [vmem:[%s1 + $0x480] sm:$0xff]
        %v1304 = vld [vmem:[%s1 + $0x488] sm:$0xff]
        %v1305 = vld [vmem:[%s1 + $0x490] sm:$0xff]
        %v1306 = vld [vmem:[%s1 + $0x498] sm:$0xff]
        %v1307 = vld [vmem:[%s1 + $0x4a0] sm:$0xf]
        %v1308 = vld [vmem:[%s1 + $0x4a4] sm:$0xff]
        %v1309 = vld [vmem:[%s1 + $0x4ac] sm:$0xff]
        %v1310 = vld [vmem:[%s1 + $0x4b4] sm:$0xff]
        %v1311 = vld [vmem:[%s1 + $0x4bc] sm:$0xff]
        %v1312 = vld [vmem:[%s1 + $0x4c4] sm:$0xff]
        %v1313 = vld [vmem:[%s1 + $0x4cc] sm:$0xf]
        %v1482 = vunpack.c.l.b16 %v1146
        %v1483 = vunpack.c.h.b16 %v1146
        %v1484 = vunpack.c.l.b16 %v1147
        %v1485 = vunpack.c.h.b16 %v1147
        %v1486 = vunpack.c.l.b16 %v1148
        %v1487 = vunpack.c.h.b16 %v1148
        %v1488 = vunpack.c.l.b16 %v1149
        %v1489 = vunpack.c.h.b16 %v1149
        %v1490 = vunpack.c.l.b16 %v1150
        %v1491 = vunpack.c.h.b16 %v1150
        %v1492 = vunpack.c.l.b16 %v1151
        %v1493 = vunpack.c.l.b16 %v1152
        %v1494 = vunpack.c.h.b16 %v1152
        %v1495 = vunpack.c.l.b16 %v1153
        %v1496 = vunpack.c.h.b16 %v1153
        %v1497 = vunpack.c.l.b16 %v1154
        %v1498 = vunpack.c.h.b16 %v1154
        %v1499 = vunpack.c.l.b16 %v1155
        %v1500 = vunpack.c.h.b16 %v1155
        %v1501 = vunpack.c.l.b16 %v1156
        %v1502 = vunpack.c.h.b16 %v1156
        %v1503 = vunpack.c.l.b16 %v1157
        %v1504 = vunpack.c.l.b16 %v1158
        %v1505 = vunpack.c.h.b16 %v1158
        %v1506 = vunpack.c.l.b16 %v1159
        %v1507 = vunpack.c.h.b16 %v1159
        %v1508 = vunpack.c.l.b16 %v1160
        %v1509 = vunpack.c.h.b16 %v1160
        %v1510 = vunpack.c.l.b16 %v1161
        %v1511 = vunpack.c.h.b16 %v1161
        %v1512 = vunpack.c.l.b16 %v1162
        %v1513 = vunpack.c.h.b16 %v1162
        %v1514 = vunpack.c.l.b16 %v1163
        %v1515 = vunpack.c.l.b16 %v1164
        %v1516 = vunpack.c.h.b16 %v1164
        %v1517 = vunpack.c.l.b16 %v1165
        %v1518 = vunpack.c.h.b16 %v1165
        %v1519 = vunpack.c.l.b16 %v1166
        %v1520 = vunpack.c.h.b16 %v1166
        %v1521 = vunpack.c.l.b16 %v1167
        %v1522 = vunpack.c.h.b16 %v1167
        %v1523 = vunpack.c.l.b16 %v1168
        %v1524 = vunpack.c.h.b16 %v1168
        %v1525 = vunpack.c.l.b16 %v1169
        %v1526 = vunpack.c.l.b16 %v1170
        %v1527 = vunpack.c.h.b16 %v1170
        %v1528 = vunpack.c.l.b16 %v1171
        %v1529 = vunpack.c.h.b16 %v1171
        %v1530 = vunpack.c.l.b16 %v1172
        %v1531 = vunpack.c.h.b16 %v1172
        %v1532 = vunpack.c.l.b16 %v1173
        %v1533 = vunpack.c.h.b16 %v1173
        %v1534 = vunpack.c.l.b16 %v1174
        %v1535 = vunpack.c.h.b16 %v1174
        %v1536 = vunpack.c.l.b16 %v1175
        %v1537 = vunpack.c.l.b16 %v1176
        %v1538 = vunpack.c.h.b16 %v1176
        %v1539 = vunpack.c.l.b16 %v1177
        %v1540 = vunpack.c.h.b16 %v1177
        %v1541 = vunpack.c.l.b16 %v1178
        %v1542 = vunpack.c.h.b16 %v1178
        %v1543 = vunpack.c.l.b16 %v1179
        %v1544 = vunpack.c.h.b16 %v1179
        %v1545 = vunpack.c.l.b16 %v1180
        %v1546 = vunpack.c.h.b16 %v1180
        %v1547 = vunpack.c.l.b16 %v1181
        %v1548 = vunpack.c.l.b16 %v1182
        %v1549 = vunpack.c.h.b16 %v1182
        %v1550 = vunpack.c.l.b16 %v1183
        %v1551 = vunpack.c.h.b16 %v1183
        %v1552 = vunpack.c.l.b16 %v1184
        %v1553 = vunpack.c.h.b16 %v1184
        %v1554 = vunpack.c.l.b16 %v1185
        %v1555 = vunpack.c.h.b16 %v1185
        %v1556 = vunpack.c.l.b16 %v1186
        %v1557 = vunpack.c.h.b16 %v1186
        %v1558 = vunpack.c.l.b16 %v1187
        %v1559 = vunpack.c.l.b16 %v1188
        %v1560 = vunpack.c.h.b16 %v1188
        %v1561 = vunpack.c.l.b16 %v1189
        %v1562 = vunpack.c.h.b16 %v1189
        %v1563 = vunpack.c.l.b16 %v1190
        %v1564 = vunpack.c.h.b16 %v1190
        %v1565 = vunpack.c.l.b16 %v1191
        %v1566 = vunpack.c.h.b16 %v1191
        %v1567 = vunpack.c.l.b16 %v1192
        %v1568 = vunpack.c.h.b16 %v1192
        %v1569 = vunpack.c.l.b16 %v1193
        %v1570 = vunpack.c.l.b16 %v1194
        %v1571 = vunpack.c.h.b16 %v1194
        %v1572 = vunpack.c.l.b16 %v1195
        %v1573 = vunpack.c.h.b16 %v1195
        %v1574 = vunpack.c.l.b16 %v1196
        %v1575 = vunpack.c.h.b16 %v1196
        %v1576 = vunpack.c.l.b16 %v1197
        %v1577 = vunpack.c.h.b16 %v1197
        %v1578 = vunpack.c.l.b16 %v1198
        %v1579 = vunpack.c.h.b16 %v1198
        %v1580 = vunpack.c.l.b16 %v1199
        %v1581 = vunpack.c.l.b16 %v1200
        %v1582 = vunpack.c.h.b16 %v1200
        %v1583 = vunpack.c.l.b16 %v1201
        %v1584 = vunpack.c.h.b16 %v1201
        %v1585 = vunpack.c.l.b16 %v1202
        %v1586 = vunpack.c.h.b16 %v1202
        %v1587 = vunpack.c.l.b16 %v1203
        %v1588 = vunpack.c.h.b16 %v1203
        %v1589 = vunpack.c.l.b16 %v1204
        %v1590 = vunpack.c.h.b16 %v1204
        %v1591 = vunpack.c.l.b16 %v1205
        %v1592 = vunpack.c.l.b16 %v1206
        %v1593 = vunpack.c.h.b16 %v1206
        %v1594 = vunpack.c.l.b16 %v1207
        %v1595 = vunpack.c.h.b16 %v1207
        %v1596 = vunpack.c.l.b16 %v1208
        %v1597 = vunpack.c.h.b16 %v1208
        %v1598 = vunpack.c.l.b16 %v1209
        %v1599 = vunpack.c.h.b16 %v1209
        %v1600 = vunpack.c.l.b16 %v1210
        %v1601 = vunpack.c.h.b16 %v1210
        %v1602 = vunpack.c.l.b16 %v1211
        %v1603 = vunpack.c.l.b16 %v1212
        %v1604 = vunpack.c.h.b16 %v1212
        %v1605 = vunpack.c.l.b16 %v1213
        %v1606 = vunpack.c.h.b16 %v1213
        %v1607 = vunpack.c.l.b16 %v1214
        %v1608 = vunpack.c.h.b16 %v1214
        %v1609 = vunpack.c.l.b16 %v1215
        %v1610 = vunpack.c.h.b16 %v1215
        %v1611 = vunpack.c.l.b16 %v1216
        %v1612 = vunpack.c.h.b16 %v1216
        %v1613 = vunpack.c.l.b16 %v1217
        %v1614 = vunpack.c.l.b16 %v1218
        %v1615 = vunpack.c.h.b16 %v1218
        %v1616 = vunpack.c.l.b16 %v1219
        %v1617 = vunpack.c.h.b16 %v1219
        %v1618 = vunpack.c.l.b16 %v1220
        %v1619 = vunpack.c.h.b16 %v1220
        %v1620 = vunpack.c.l.b16 %v1221
        %v1621 = vunpack.c.h.b16 %v1221
        %v1622 = vunpack.c.l.b16 %v1222
        %v1623 = vunpack.c.h.b16 %v1222
        %v1624 = vunpack.c.l.b16 %v1223
        %v1625 = vunpack.c.l.b16 %v1224
        %v1626 = vunpack.c.h.b16 %v1224
        %v1627 = vunpack.c.l.b16 %v1225
        %v1628 = vunpack.c.h.b16 %v1225
        %v1629 = vunpack.c.l.b16 %v1226
        %v1630 = vunpack.c.h.b16 %v1226
        %v1631 = vunpack.c.l.b16 %v1227
        %v1632 = vunpack.c.h.b16 %v1227
        %v1633 = vunpack.c.l.b16 %v1228
        %v1634 = vunpack.c.h.b16 %v1228
        %v1635 = vunpack.c.l.b16 %v1229
        %v1636 = vunpack.c.l.b16 %v1230
        %v1637 = vunpack.c.h.b16 %v1230
        %v1638 = vunpack.c.l.b16 %v1231
        %v1639 = vunpack.c.h.b16 %v1231
        %v1640 = vunpack.c.l.b16 %v1232
        %v1641 = vunpack.c.h.b16 %v1232
        %v1642 = vunpack.c.l.b16 %v1233
        %v1643 = vunpack.c.h.b16 %v1233
        %v1644 = vunpack.c.l.b16 %v1234
        %v1645 = vunpack.c.h.b16 %v1234
        %v1646 = vunpack.c.l.b16 %v1235
        %v1647 = vunpack.c.l.b16 %v1236
        %v1648 = vunpack.c.h.b16 %v1236
        %v1649 = vunpack.c.l.b16 %v1237
        %v1650 = vunpack.c.h.b16 %v1237
        %v1651 = vunpack.c.l.b16 %v1238
        %v1652 = vunpack.c.h.b16 %v1238
        %v1653 = vunpack.c.l.b16 %v1239
        %v1654 = vunpack.c.h.b16 %v1239
        %v1655 = vunpack.c.l.b16 %v1240
        %v1656 = vunpack.c.h.b16 %v1240
        %v1657 = vunpack.c.l.b16 %v1241
        %v1658 = vunpack.c.l.b16 %v1242
        %v1659 = vunpack.c.h.b16 %v1242
        %v1660 = vunpack.c.l.b16 %v1243
        %v1661 = vunpack.c.h.b16 %v1243
        %v1662 = vunpack.c.l.b16 %v1244
        %v1663 = vunpack.c.h.b16 %v1244
        %v1664 = vunpack.c.l.b16 %v1245
        %v1665 = vunpack.c.h.b16 %v1245
        %v1666 = vunpack.c.l.b16 %v1246
        %v1667 = vunpack.c.h.b16 %v1246
        %v1668 = vunpack.c.l.b16 %v1247
        %v1669 = vunpack.c.l.b16 %v1248
        %v1670 = vunpack.c.h.b16 %v1248
        %v1671 = vunpack.c.l.b16 %v1249
        %v1672 = vunpack.c.h.b16 %v1249
        %v1673 = vunpack.c.l.b16 %v1250
        %v1674 = vunpack.c.h.b16 %v1250
        %v1675 = vunpack.c.l.b16 %v1251
        %v1676 = vunpack.c.h.b16 %v1251
        %v1677 = vunpack.c.l.b16 %v1252
        %v1678 = vunpack.c.h.b16 %v1252
        %v1679 = vunpack.c.l.b16 %v1253
        %v1680 = vunpack.c.l.b16 %v1254
        %v1681 = vunpack.c.h.b16 %v1254
        %v1682 = vunpack.c.l.b16 %v1255
        %v1683 = vunpack.c.h.b16 %v1255
        %v1684 = vunpack.c.l.b16 %v1256
        %v1685 = vunpack.c.h.b16 %v1256
        %v1686 = vunpack.c.l.b16 %v1257
        %v1687 = vunpack.c.h.b16 %v1257
        %v1688 = vunpack.c.l.b16 %v1258
        %v1689 = vunpack.c.h.b16 %v1258
        %v1690 = vunpack.c.l.b16 %v1259
        %v1691 = vunpack.c.l.b16 %v1260
        %v1692 = vunpack.c.h.b16 %v1260
        %v1693 = vunpack.c.l.b16 %v1261
        %v1694 = vunpack.c.h.b16 %v1261
        %v1695 = vunpack.c.l.b16 %v1262
        %v1696 = vunpack.c.h.b16 %v1262
        %v1697 = vunpack.c.l.b16 %v1263
        %v1698 = vunpack.c.h.b16 %v1263
        %v1699 = vunpack.c.l.b16 %v1264
        %v1700 = vunpack.c.h.b16 %v1264
        %v1701 = vunpack.c.l.b16 %v1265
        %v1702 = vunpack.c.l.b16 %v1266
        %v1703 = vunpack.c.h.b16 %v1266
        %v1704 = vunpack.c.l.b16 %v1267
        %v1705 = vunpack.c.h.b16 %v1267
        %v1706 = vunpack.c.l.b16 %v1268
        %v1707 = vunpack.c.h.b16 %v1268
        %v1708 = vunpack.c.l.b16 %v1269
        %v1709 = vunpack.c.h.b16 %v1269
        %v1710 = vunpack.c.l.b16 %v1270
        %v1711 = vunpack.c.h.b16 %v1270
        %v1712 = vunpack.c.l.b16 %v1271
        %v1713 = vunpack.c.l.b16 %v1272
        %v1714 = vunpack.c.h.b16 %v1272
        %v1715 = vunpack.c.l.b16 %v1273
        %v1716 = vunpack.c.h.b16 %v1273
        %v1717 = vunpack.c.l.b16 %v1274
        %v1718 = vunpack.c.h.b16 %v1274
        %v1719 = vunpack.c.l.b16 %v1275
        %v1720 = vunpack.c.h.b16 %v1275
        %v1721 = vunpack.c.l.b16 %v1276
        %v1722 = vunpack.c.h.b16 %v1276
        %v1723 = vunpack.c.l.b16 %v1277
        %v1724 = vunpack.c.l.b16 %v1278
        %v1725 = vunpack.c.h.b16 %v1278
        %v1726 = vunpack.c.l.b16 %v1279
        %v1727 = vunpack.c.h.b16 %v1279
        %v1728 = vunpack.c.l.b16 %v1280
        %v1729 = vunpack.c.h.b16 %v1280
        %v1730 = vunpack.c.l.b16 %v1281
        %v1731 = vunpack.c.h.b16 %v1281
        %v1732 = vunpack.c.l.b16 %v1282
        %v1733 = vunpack.c.h.b16 %v1282
        %v1734 = vunpack.c.l.b16 %v1283
        %v1735 = vunpack.c.l.b16 %v1284
        %v1736 = vunpack.c.h.b16 %v1284
        %v1737 = vunpack.c.l.b16 %v1285
        %v1738 = vunpack.c.h.b16 %v1285
        %v1739 = vunpack.c.l.b16 %v1286
        %v1740 = vunpack.c.h.b16 %v1286
        %v1741 = vunpack.c.l.b16 %v1287
        %v1742 = vunpack.c.h.b16 %v1287
        %v1743 = vunpack.c.l.b16 %v1288
        %v1744 = vunpack.c.h.b16 %v1288
        %v1745 = vunpack.c.l.b16 %v1289
        %v1746 = vunpack.c.l.b16 %v1290
        %v1747 = vunpack.c.h.b16 %v1290
        %v1748 = vunpack.c.l.b16 %v1291
        %v1749 = vunpack.c.h.b16 %v1291
        %v1750 = vunpack.c.l.b16 %v1292
        %v1751 = vunpack.c.h.b16 %v1292
        %v1752 = vunpack.c.l.b16 %v1293
        %v1753 = vunpack.c.h.b16 %v1293
        %v1754 = vunpack.c.l.b16 %v1294
        %v1755 = vunpack.c.h.b16 %v1294
        %v1756 = vunpack.c.l.b16 %v1295
        %v1757 = vunpack.c.l.b16 %v1296
        %v1758 = vunpack.c.h.b16 %v1296
        %v1759 = vunpack.c.l.b16 %v1297
        %v1760 = vunpack.c.h.b16 %v1297
        %v1761 = vunpack.c.l.b16 %v1298
        %v1762 = vunpack.c.h.b16 %v1298
        %v1763 = vunpack.c.l.b16 %v1299
        %v1764 = vunpack.c.h.b16 %v1299
        %v1765 = vunpack.c.l.b16 %v1300
        %v1766 = vunpack.c.h.b16 %v1300
        %v1767 = vunpack.c.l.b16 %v1301
        %v1768 = vunpack.c.l.b16 %v1302
        %v1769 = vunpack.c.h.b16 %v1302
        %v1770 = vunpack.c.l.b16 %v1303
        %v1771 = vunpack.c.h.b16 %v1303
        %v1772 = vunpack.c.l.b16 %v1304
        %v1773 = vunpack.c.h.b16 %v1304
        %v1774 = vunpack.c.l.b16 %v1305
        %v1775 = vunpack.c.h.b16 %v1305
        %v1776 = vunpack.c.l.b16 %v1306
        %v1777 = vunpack.c.h.b16 %v1306
        %v1778 = vunpack.c.l.b16 %v1307
        %v1779 = vunpack.c.l.b16 %v1308
        %v1780 = vunpack.c.h.b16 %v1308
        %v1781 = vunpack.c.l.b16 %v1309
        %v1782 = vunpack.c.h.b16 %v1309
        %v1783 = vunpack.c.l.b16 %v1310
        %v1784 = vunpack.c.h.b16 %v1310
        %v1785 = vunpack.c.l.b16 %v1311
        %v1786 = vunpack.c.h.b16 %v1311
        %v1787 = vunpack.c.l.b16 %v1312
        %v1788 = vunpack.c.h.b16 %v1312
        %v1789 = vunpack.c.l.b16 %v1313
        %v1790 = vpack.c.b16 %v1493, %v1482
        %v1791 = vpack.c.b16 %v1494, %v1483
        %v1792 = vpack.c.b16 %v1495, %v1484
        %v1793 = vpack.c.b16 %v1496, %v1485
        %v1794 = vpack.c.b16 %v1497, %v1486
        %v1795 = vpack.c.b16 %v1498, %v1487
        %v1796 = vpack.c.b16 %v1499, %v1488
        %v1797 = vpack.c.b16 %v1500, %v1489
        %v1798 = vpack.c.b16 %v1501, %v1490
        %v1799 = vpack.c.b16 %v1502, %v1491
        %v1800 = vpack.c.b16 %v1503, %v1492
        %v1801 = vpack.c.b16 %v1515, %v1504
        %v1802 = vpack.c.b16 %v1516, %v1505
        %v1803 = vpack.c.b16 %v1517, %v1506
        %v1804 = vpack.c.b16 %v1518, %v1507
        %v1805 = vpack.c.b16 %v1519, %v1508
        %v1806 = vpack.c.b16 %v1520, %v1509
        %v1807 = vpack.c.b16 %v1521, %v1510
        %v1808 = vpack.c.b16 %v1522, %v1511
        %v1809 = vpack.c.b16 %v1523, %v1512
        %v1810 = vpack.c.b16 %v1524, %v1513
        %v1811 = vpack.c.b16 %v1525, %v1514
        %v1812 = vpack.c.b16 %v1537, %v1526
        %v1813 = vpack.c.b16 %v1538, %v1527
        %v1814 = vpack.c.b16 %v1539, %v1528
        %v1815 = vpack.c.b16 %v1540, %v1529
        %v1816 = vpack.c.b16 %v1541, %v1530
        %v1817 = vpack.c.b16 %v1542, %v1531
        %v1818 = vpack.c.b16 %v1543, %v1532
        %v1819 = vpack.c.b16 %v1544, %v1533
        %v1820 = vpack.c.b16 %v1545, %v1534
        %v1821 = vpack.c.b16 %v1546, %v1535
        %v1822 = vpack.c.b16 %v1547, %v1536
        %v1823 = vpack.c.b16 %v1559, %v1548
        %v1824 = vpack.c.b16 %v1560, %v1549
        %v1825 = vpack.c.b16 %v1561, %v1550
        %v1826 = vpack.c.b16 %v1562, %v1551
        %v1827 = vpack.c.b16 %v1563, %v1552
        %v1828 = vpack.c.b16 %v1564, %v1553
        %v1829 = vpack.c.b16 %v1565, %v1554
        %v1830 = vpack.c.b16 %v1566, %v1555
        %v1831 = vpack.c.b16 %v1567, %v1556
        %v1832 = vpack.c.b16 %v1568, %v1557
        %v1833 = vpack.c.b16 %v1569, %v1558
        %v1834 = vpack.c.b16 %v1581, %v1570
        %v1835 = vpack.c.b16 %v1582, %v1571
        %v1836 = vpack.c.b16 %v1583, %v1572
        %v1837 = vpack.c.b16 %v1584, %v1573
        %v1838 = vpack.c.b16 %v1585, %v1574
        %v1839 = vpack.c.b16 %v1586, %v1575
        %v1840 = vpack.c.b16 %v1587, %v1576
        %v1841 = vpack.c.b16 %v1588, %v1577
        %v1842 = vpack.c.b16 %v1589, %v1578
        %v1843 = vpack.c.b16 %v1590, %v1579
        %v1844 = vpack.c.b16 %v1591, %v1580
        %v1845 = vpack.c.b16 %v1603, %v1592
        %v1846 = vpack.c.b16 %v1604, %v1593
        %v1847 = vpack.c.b16 %v1605, %v1594
        %v1848 = vpack.c.b16 %v1606, %v1595
        %v1849 = vpack.c.b16 %v1607, %v1596
        %v1850 = vpack.c.b16 %v1608, %v1597
        %v1851 = vpack.c.b16 %v1609, %v1598
        %v1852 = vpack.c.b16 %v1610, %v1599
        %v1853 = vpack.c.b16 %v1611, %v1600
        %v1854 = vpack.c.b16 %v1612, %v1601
        %v1855 = vpack.c.b16 %v1613, %v1602
        %v1856 = vpack.c.b16 %v1625, %v1614
        %v1857 = vpack.c.b16 %v1626, %v1615
        %v1858 = vpack.c.b16 %v1627, %v1616
        %v1859 = vpack.c.b16 %v1628, %v1617
        %v1860 = vpack.c.b16 %v1629, %v1618
        %v1861 = vpack.c.b16 %v1630, %v1619
        %v1862 = vpack.c.b16 %v1631, %v1620
        %v1863 = vpack.c.b16 %v1632, %v1621
        %v1864 = vpack.c.b16 %v1633, %v1622
        %v1865 = vpack.c.b16 %v1634, %v1623
        %v1866 = vpack.c.b16 %v1635, %v1624
        %v1867 = vpack.c.b16 %v1647, %v1636
        %v1868 = vpack.c.b16 %v1648, %v1637
        %v1869 = vpack.c.b16 %v1649, %v1638
        %v1870 = vpack.c.b16 %v1650, %v1639
        %v1871 = vpack.c.b16 %v1651, %v1640
        %v1872 = vpack.c.b16 %v1652, %v1641
        %v1873 = vpack.c.b16 %v1653, %v1642
        %v1874 = vpack.c.b16 %v1654, %v1643
        %v1875 = vpack.c.b16 %v1655, %v1644
        %v1876 = vpack.c.b16 %v1656, %v1645
        %v1877 = vpack.c.b16 %v1657, %v1646
        %v1878 = vpack.c.b16 %v1669, %v1658
        %v1879 = vpack.c.b16 %v1670, %v1659
        %v1880 = vpack.c.b16 %v1671, %v1660
        %v1881 = vpack.c.b16 %v1672, %v1661
        %v1882 = vpack.c.b16 %v1673, %v1662
        %v1883 = vpack.c.b16 %v1674, %v1663
        %v1884 = vpack.c.b16 %v1675, %v1664
        %v1885 = vpack.c.b16 %v1676, %v1665
        %v1886 = vpack.c.b16 %v1677, %v1666
        %v1887 = vpack.c.b16 %v1678, %v1667
        %v1888 = vpack.c.b16 %v1679, %v1668
        %v1889 = vpack.c.b16 %v1691, %v1680
        %v1890 = vpack.c.b16 %v1692, %v1681
        %v1891 = vpack.c.b16 %v1693, %v1682
        %v1892 = vpack.c.b16 %v1694, %v1683
        %v1893 = vpack.c.b16 %v1695, %v1684
        %v1894 = vpack.c.b16 %v1696, %v1685
        %v1895 = vpack.c.b16 %v1697, %v1686
        %v1896 = vpack.c.b16 %v1698, %v1687
        %v1897 = vpack.c.b16 %v1699, %v1688
        %v1898 = vpack.c.b16 %v1700, %v1689
        %v1899 = vpack.c.b16 %v1701, %v1690
        %v1900 = vpack.c.b16 %v1713, %v1702
        %v1901 = vpack.c.b16 %v1714, %v1703
        %v1902 = vpack.c.b16 %v1715, %v1704
        %v1903 = vpack.c.b16 %v1716, %v1705
        %v1904 = vpack.c.b16 %v1717, %v1706
        %v1905 = vpack.c.b16 %v1718, %v1707
        %v1906 = vpack.c.b16 %v1719, %v1708
        %v1907 = vpack.c.b16 %v1720, %v1709
        %v1908 = vpack.c.b16 %v1721, %v1710
        %v1909 = vpack.c.b16 %v1722, %v1711
        %v1910 = vpack.c.b16 %v1723, %v1712
        %v1911 = vpack.c.b16 %v1735, %v1724
        %v1912 = vpack.c.b16 %v1736, %v1725
        %v1913 = vpack.c.b16 %v1737, %v1726
        %v1914 = vpack.c.b16 %v1738, %v1727
        %v1915 = vpack.c.b16 %v1739, %v1728
        %v1916 = vpack.c.b16 %v1740, %v1729
        %v1917 = vpack.c.b16 %v1741, %v1730
        %v1918 = vpack.c.b16 %v1742, %v1731
        %v1919 = vpack.c.b16 %v1743, %v1732
        %v1920 = vpack.c.b16 %v1744, %v1733
        %v1921 = vpack.c.b16 %v1745, %v1734
        %v1922 = vpack.c.b16 %v1757, %v1746
        %v1923 = vpack.c.b16 %v1758, %v1747
        %v1924 = vpack.c.b16 %v1759, %v1748
        %v1925 = vpack.c.b16 %v1760, %v1749
        %v1926 = vpack.c.b16 %v1761, %v1750
        %v1927 = vpack.c.b16 %v1762, %v1751
        %v1928 = vpack.c.b16 %v1763, %v1752
        %v1929 = vpack.c.b16 %v1764, %v1753
        %v1930 = vpack.c.b16 %v1765, %v1754
        %v1931 = vpack.c.b16 %v1766, %v1755
        %v1932 = vpack.c.b16 %v1767, %v1756
        %v1933 = vpack.c.b16 %v1779, %v1768
        %v1934 = vpack.c.b16 %v1780, %v1769
        %v1935 = vpack.c.b16 %v1781, %v1770
        %v1936 = vpack.c.b16 %v1782, %v1771
        %v1937 = vpack.c.b16 %v1783, %v1772
        %v1938 = vpack.c.b16 %v1784, %v1773
        %v1939 = vpack.c.b16 %v1785, %v1774
        %v1940 = vpack.c.b16 %v1786, %v1775
        %v1941 = vpack.c.b16 %v1787, %v1776
        %v1942 = vpack.c.b16 %v1788, %v1777
        %v1943 = vpack.c.b16 %v1789, %v1778
        %v2252 = vunpack.c.l.b16 %v978
        %v2253 = vunpack.c.l.b16 %v979
        %v2254 = vunpack.c.l.b16 %v980
        %v2255 = vunpack.c.l.b16 %v981
        %v2256 = vunpack.c.l.b16 %v982
        %v2257 = vunpack.c.l.b16 %v983
        %v2258 = vunpack.c.l.b16 %v984
        %v2259 = vunpack.c.l.b16 %v985
        %v2260 = vunpack.c.l.b16 %v986
        %v2261 = vunpack.c.l.b16 %v987
        %v2262 = vunpack.c.l.b16 %v988
        %v2263 = vunpack.c.l.b16 %v989
        %v2264 = vunpack.c.l.b16 %v990
        %v2265 = vunpack.c.l.b16 %v991
        %v2266 = vunpack.c.l.b16 %v992
        %v2267 = vunpack.c.l.b16 %v993
        %v2268 = vunpack.c.l.b16 %v994
        %v2269 = vunpack.c.l.b16 %v995
        %v2270 = vunpack.c.l.b16 %v996
        %v2271 = vunpack.c.l.b16 %v997
        %v2272 = vunpack.c.l.b16 %v998
        %v2273 = vunpack.c.l.b16 %v999
        %v2274 = vunpack.c.l.b16 %v1000
        %v2275 = vunpack.c.l.b16 %v1001
        %v2276 = vunpack.c.l.b16 %v1002
        %v2277 = vunpack.c.l.b16 %v1003
        %v2278 = vunpack.c.l.b16 %v1004
        %v2279 = vunpack.c.l.b16 %v1005
        %v2280 = vunpack.c.l.b16 %v1006
        %v2281 = vunpack.c.l.b16 %v1007
        %v2282 = vunpack.c.l.b16 %v1008
        %v2283 = vunpack.c.l.b16 %v1009
        %v2284 = vunpack.c.l.b16 %v1010
        %v2285 = vunpack.c.l.b16 %v1011
        %v2286 = vunpack.c.l.b16 %v1012
        %v2287 = vunpack.c.l.b16 %v1013
        %v2288 = vunpack.c.l.b16 %v1014
        %v2289 = vunpack.c.l.b16 %v1015
        %v2290 = vunpack.c.l.b16 %v1016
        %v2291 = vunpack.c.l.b16 %v1017
        %v2292 = vunpack.c.l.b16 %v1018
        %v2293 = vunpack.c.l.b16 %v1019
        %v2294 = vunpack.c.l.b16 %v1020
        %v2295 = vunpack.c.l.b16 %v1021
        %v2296 = vunpack.c.l.b16 %v1022
        %v2297 = vunpack.c.l.b16 %v1023
        %v2298 = vunpack.c.l.b16 %v1024
        %v2299 = vunpack.c.l.b16 %v1025
        %v2300 = vunpack.c.l.b16 %v1026
        %v2301 = vunpack.c.l.b16 %v1027
        %v2302 = vunpack.c.l.b16 %v1028
        %v2303 = vunpack.c.l.b16 %v1029
        %v2304 = vunpack.c.l.b16 %v1030
        %v2305 = vunpack.c.l.b16 %v1031
        %v2306 = vunpack.c.l.b16 %v1032
        %v2307 = vunpack.c.l.b16 %v1033
        %v2308 = vunpack.c.l.b16 %v1034
        %v2309 = vunpack.c.l.b16 %v1035
        %v2310 = vunpack.c.l.b16 %v1036
        %v2311 = vunpack.c.l.b16 %v1037
        %v2312 = vunpack.c.l.b16 %v1038
        %v2313 = vunpack.c.l.b16 %v1039
        %v2314 = vunpack.c.l.b16 %v1040
        %v2315 = vunpack.c.l.b16 %v1041
        %v2316 = vunpack.c.l.b16 %v1042
        %v2317 = vunpack.c.l.b16 %v1043
        %v2318 = vunpack.c.l.b16 %v1044
        %v2319 = vunpack.c.l.b16 %v1045
        %v2320 = vunpack.c.l.b16 %v1046
        %v2321 = vunpack.c.l.b16 %v1047
        %v2322 = vunpack.c.l.b16 %v1048
        %v2323 = vunpack.c.l.b16 %v1049
        %v2324 = vunpack.c.l.b16 %v1050
        %v2325 = vunpack.c.l.b16 %v1051
        %v2326 = vunpack.c.l.b16 %v1052
        %v2327 = vunpack.c.l.b16 %v1053
        %v2328 = vunpack.c.l.b16 %v1054
        %v2329 = vunpack.c.l.b16 %v1055
        %v2330 = vunpack.c.l.b16 %v1056
        %v2331 = vunpack.c.l.b16 %v1057
        %v2332 = vunpack.c.l.b16 %v1058
        %v2333 = vunpack.c.l.b16 %v1059
        %v2334 = vunpack.c.l.b16 %v1060
        %v2335 = vunpack.c.l.b16 %v1061
        %v2336 = vunpack.c.l.b16 %v1062
        %v2337 = vunpack.c.l.b16 %v1063
        %v2338 = vunpack.c.l.b16 %v1064
        %v2339 = vunpack.c.l.b16 %v1065
        %v2340 = vunpack.c.l.b16 %v1066
        %v2341 = vunpack.c.l.b16 %v1067
        %v2342 = vunpack.c.l.b16 %v1068
        %v2343 = vunpack.c.l.b16 %v1069
        %v2344 = vunpack.c.l.b16 %v1070
        %v2345 = vunpack.c.l.b16 %v1071
        %v2346 = vunpack.c.l.b16 %v1072
        %v2347 = vunpack.c.l.b16 %v1073
        %v2348 = vunpack.c.l.b16 %v1074
        %v2349 = vunpack.c.l.b16 %v1075
        %v2350 = vunpack.c.l.b16 %v1076
        %v2351 = vunpack.c.l.b16 %v1077
        %v2352 = vunpack.c.l.b16 %v1078
        %v2353 = vunpack.c.l.b16 %v1079
        %v2354 = vunpack.c.l.b16 %v1080
        %v2355 = vunpack.c.l.b16 %v1081
        %v2356 = vunpack.c.l.b16 %v1082
        %v2357 = vunpack.c.l.b16 %v1083
        %v2358 = vunpack.c.l.b16 %v1084
        %v2359 = vunpack.c.l.b16 %v1085
        %v2360 = vunpack.c.l.b16 %v1086
        %v2361 = vunpack.c.l.b16 %v1087
        %v2362 = vunpack.c.l.b16 %v1088
        %v2363 = vunpack.c.l.b16 %v1089
        %v2364 = vunpack.c.l.b16 %v1090
        %v2365 = vunpack.c.l.b16 %v1091
        %v2366 = vunpack.c.l.b16 %v1092
        %v2367 = vunpack.c.l.b16 %v1093
        %v2368 = vunpack.c.l.b16 %v1094
        %v2369 = vunpack.c.l.b16 %v1095
        %v2370 = vunpack.c.l.b16 %v1096
        %v2371 = vunpack.c.l.b16 %v1097
        %v2372 = vunpack.c.l.b16 %v1098
        %v2373 = vunpack.c.l.b16 %v1099
        %v2374 = vunpack.c.l.b16 %v1100
        %v2375 = vunpack.c.l.b16 %v1101
        %v2376 = vunpack.c.l.b16 %v1102
        %v2377 = vunpack.c.l.b16 %v1103
        %v2378 = vunpack.c.l.b16 %v1104
        %v2379 = vunpack.c.l.b16 %v1105
        %v2380 = vunpack.c.l.b16 %v1106
        %v2381 = vunpack.c.l.b16 %v1107
        %v2382 = vunpack.c.l.b16 %v1108
        %v2383 = vunpack.c.l.b16 %v1109
        %v2384 = vunpack.c.l.b16 %v1110
        %v2385 = vunpack.c.l.b16 %v1111
        %v2386 = vunpack.c.l.b16 %v1112
        %v2387 = vunpack.c.l.b16 %v1113
        %v2388 = vunpack.c.l.b16 %v1114
        %v2389 = vunpack.c.l.b16 %v1115
        %v2390 = vunpack.c.l.b16 %v1116
        %v2391 = vunpack.c.l.b16 %v1117
        %v2392 = vunpack.c.l.b16 %v1118
        %v2393 = vunpack.c.l.b16 %v1119
        %v2394 = vunpack.c.l.b16 %v1120
        %v2395 = vunpack.c.l.b16 %v1121
        %v2396 = vunpack.c.l.b16 %v1122
        %v2397 = vunpack.c.l.b16 %v1123
        %v2398 = vunpack.c.l.b16 %v1124
        %v2399 = vunpack.c.l.b16 %v1125
        %v2400 = vunpack.c.l.b16 %v1126
        %v2401 = vunpack.c.l.b16 %v1127
        %v2402 = vunpack.c.l.b16 %v1128
        %v2403 = vunpack.c.l.b16 %v1129
        %v2404 = vunpack.c.l.b16 %v1130
        %v2405 = vunpack.c.l.b16 %v1131
        %v2406 = vunpack.c.l.b16 %v1132
        %v2407 = vunpack.c.l.b16 %v1133
        %v2408 = vunpack.c.l.b16 %v1134
        %v2409 = vunpack.c.l.b16 %v1135
        %v2410 = vunpack.c.l.b16 %v1136
        %v2411 = vunpack.c.l.b16 %v1137
        %v2412 = vunpack.c.l.b16 %v1138
        %v2413 = vunpack.c.l.b16 %v1139
        %v2414 = vunpack.c.l.b16 %v1140
        %v2415 = vunpack.c.l.b16 %v1141
        %v2416 = vunpack.c.l.b16 %v1142
        %v2417 = vunpack.c.l.b16 %v1143
        %v2418 = vunpack.c.l.b16 %v1144
        %v2419 = vunpack.c.l.b16 %v1145
        %v2420 = vpack.c.b16 %v2253, %v2252
        %v2421 = vpack.c.b16 %v2255, %v2254
        %v2422 = vpack.c.b16 %v2257, %v2256
        %v2423 = vpack.c.b16 %v2259, %v2258
        %v2424 = vpack.c.b16 %v2261, %v2260
        %v2425 = vpack.c.b16 %v2263, %v2262
        %v2426 = vpack.c.b16 %v2265, %v2264
        %v2427 = vpack.c.b16 %v2267, %v2266
        %v2428 = vpack.c.b16 %v2269, %v2268
        %v2429 = vpack.c.b16 %v2271, %v2270
        %v2430 = vpack.c.b16 %v2273, %v2272
        %v2431 = vpack.c.b16 %v2275, %v2274
        %v2432 = vpack.c.b16 %v2277, %v2276
        %v2433 = vpack.c.b16 %v2279, %v2278
        %v2434 = vpack.c.b16 %v2281, %v2280
        %v2435 = vpack.c.b16 %v2283, %v2282
        %v2436 = vpack.c.b16 %v2285, %v2284
        %v2437 = vpack.c.b16 %v2287, %v2286
        %v2438 = vpack.c.b16 %v2289, %v2288
        %v2439 = vpack.c.b16 %v2291, %v2290
        %v2440 = vpack.c.b16 %v2293, %v2292
        %v2441 = vpack.c.b16 %v2295, %v2294
        %v2442 = vpack.c.b16 %v2297, %v2296
        %v2443 = vpack.c.b16 %v2299, %v2298
        %v2444 = vpack.c.b16 %v2301, %v2300
        %v2445 = vpack.c.b16 %v2303, %v2302
        %v2446 = vpack.c.b16 %v2305, %v2304
        %v2447 = vpack.c.b16 %v2307, %v2306
        %v2448 = vpack.c.b16 %v2309, %v2308
        %v2449 = vpack.c.b16 %v2311, %v2310
        %v2450 = vpack.c.b16 %v2313, %v2312
        %v2451 = vpack.c.b16 %v2315, %v2314
        %v2452 = vpack.c.b16 %v2317, %v2316
        %v2453 = vpack.c.b16 %v2319, %v2318
        %v2454 = vpack.c.b16 %v2321, %v2320
        %v2455 = vpack.c.b16 %v2323, %v2322
        %v2456 = vpack.c.b16 %v2325, %v2324
        %v2457 = vpack.c.b16 %v2327, %v2326
        %v2458 = vpack.c.b16 %v2329, %v2328
        %v2459 = vpack.c.b16 %v2331, %v2330
        %v2460 = vpack.c.b16 %v2333, %v2332
        %v2461 = vpack.c.b16 %v2335, %v2334
        %v2462 = vpack.c.b16 %v2337, %v2336
        %v2463 = vpack.c.b16 %v2339, %v2338
        %v2464 = vpack.c.b16 %v2341, %v2340
        %v2465 = vpack.c.b16 %v2343, %v2342
        %v2466 = vpack.c.b16 %v2345, %v2344
        %v2467 = vpack.c.b16 %v2347, %v2346
        %v2468 = vpack.c.b16 %v2349, %v2348
        %v2469 = vpack.c.b16 %v2351, %v2350
        %v2470 = vpack.c.b16 %v2353, %v2352
        %v2471 = vpack.c.b16 %v2355, %v2354
        %v2472 = vpack.c.b16 %v2357, %v2356
        %v2473 = vpack.c.b16 %v2359, %v2358
        %v2474 = vpack.c.b16 %v2361, %v2360
        %v2475 = vpack.c.b16 %v2363, %v2362
        %v2476 = vpack.c.b16 %v2365, %v2364
        %v2477 = vpack.c.b16 %v2367, %v2366
        %v2478 = vpack.c.b16 %v2369, %v2368
        %v2479 = vpack.c.b16 %v2371, %v2370
        %v2480 = vpack.c.b16 %v2373, %v2372
        %v2481 = vpack.c.b16 %v2375, %v2374
        %v2482 = vpack.c.b16 %v2377, %v2376
        %v2483 = vpack.c.b16 %v2379, %v2378
        %v2484 = vpack.c.b16 %v2381, %v2380
        %v2485 = vpack.c.b16 %v2383, %v2382
        %v2486 = vpack.c.b16 %v2385, %v2384
        %v2487 = vpack.c.b16 %v2387, %v2386
        %v2488 = vpack.c.b16 %v2389, %v2388
        %v2489 = vpack.c.b16 %v2391, %v2390
        %v2490 = vpack.c.b16 %v2393, %v2392
        %v2491 = vpack.c.b16 %v2395, %v2394
        %v2492 = vpack.c.b16 %v2397, %v2396
        %v2493 = vpack.c.b16 %v2399, %v2398
        %v2494 = vpack.c.b16 %v2401, %v2400
        %v2495 = vpack.c.b16 %v2403, %v2402
        %v2496 = vpack.c.b16 %v2405, %v2404
        %v2497 = vpack.c.b16 %v2407, %v2406
        %v2498 = vpack.c.b16 %v2409, %v2408
        %v2499 = vpack.c.b16 %v2411, %v2410
        %v2500 = vpack.c.b16 %v2413, %v2412
        %v2501 = vpack.c.b16 %v2415, %v2414
        %v2502 = vpack.c.b16 %v2417, %v2416
        %v2503 = vpack.c.b16 %v2419, %v2418
        %vm2588 = vcmask 523264
        %v2590 = vsel %vm2588, %v1800, 0
        %v2593 = vsel %vm2588, %v1811, 0
        %v2596 = vsel %vm2588, %v1822, 0
        %v2599 = vsel %vm2588, %v1833, 0
        %v2602 = vsel %vm2588, %v1844, 0
        %v2605 = vsel %vm2588, %v1855, 0
        %v2608 = vsel %vm2588, %v1866, 0
        %v2611 = vsel %vm2588, %v1877, 0
        %v2614 = vsel %vm2588, %v1888, 0
        %v2617 = vsel %vm2588, %v1899, 0
        %v2620 = vsel %vm2588, %v1910, 0
        %v2623 = vsel %vm2588, %v1921, 0
        %v2626 = vsel %vm2588, %v1932, 0
        %v2629 = vsel %vm2588, %v1943, 0
        %2631 = vmatprep.subr.bf16.mxu0 0
        %2632 = vmatpush1.bf16.msra.mxu0 %v2420
        %2633 = vmatprep.subr.bf16.mxu0 0
        %2634 = vmatpush1.bf16.msra.mxu0 %v2421
        %2635 = vmatprep.subr.bf16.mxu0 0
        %2636 = vmatpush1.bf16.msra.mxu0 %v2422
        %2637 = vmatprep.subr.bf16.mxu0 0
        %2638 = vmatpush1.bf16.msra.mxu0 %v2423
        %2639 = vmatprep.subr.bf16.mxu0 0
        %2640 = vmatpush1.bf16.msra.mxu0 %v2424
        %2641 = vmatprep.subr.bf16.mxu0 0
        %2642 = vmatpush1.bf16.msra.mxu0 %v2425
        %2643 = vmatprep.subr.bf16.mxu0 0
        %2644 = vmatpush1.bf16.msra.mxu0 %v2426
        %2645 = vmatprep.subr.bf16.mxu0 0
        %2646 = vmatpush1.bf16.msra.mxu0 %v2427
        %2647 = vmatprep.subr.bf16.mxu0 0
        %2648 = vmatpush1.bf16.msra.mxu0 %v2428
        %2649 = vmatprep.subr.bf16.mxu0 0
        %2650 = vmatpush1.bf16.msra.mxu0 %v2429
        %2651 = vmatprep.subr.bf16.mxu0 0
        %2652 = vmatpush1.bf16.msra.mxu0 %v2430
        %2653 = vmatprep.subr.bf16.mxu0 0
        %2654 = vmatpush1.bf16.msra.mxu0 %v2431
        %2655 = vmatprep.subr.bf16.mxu0 0
        %2656 = vmatpush1.bf16.msra.mxu0 %v2432
        %2657 = vmatprep.subr.bf16.mxu0 0
        %2658 = vmatpush1.bf16.msra.mxu0 %v2433
        %2659 = vmatprep.subr.bf16.mxu0 0
        %2660 = vmatpush1.bf16.msra.mxu0 %v2434
        %2661 = vmatprep.subr.bf16.mxu0 0
        %2662 = vmatpush1.bf16.msra.mxu0 %v2435
        %2663 = vmatprep.mubr.bf16.mxu0 %v1791
        %2664 = vmatmul.mubr.bf16.gmra.mrb[0].mxu0 %v1790
        %v2665 = vpop.f32.mrb[0].mxu0
        %v2666 = vadd.f32 0.0, %v2665
        %v2667 = vpop.f32.mrb[0].mxu0
        %v2668 = vpop.f32.mrb[0].mxu0
        %v2669 = vadd.f32 0.0, %v2668
        %v2670 = vpop.f32.mrb[0].mxu0
        %2671 = vmatprep.mubr.bf16.mxu0 %v1802
        %2672 = vmatmul.mubr.bf16.gmra.mrb[0].mxu0 %v1801
        %v2673 = vpop.f32.mrb[0].mxu0
        %v2674 = vadd.f32 0.0, %v2673
        %v2675 = vpop.f32.mrb[0].mxu0
        %v2676 = vpop.f32.mrb[0].mxu0
        %v2677 = vadd.f32 0.0, %v2676
        %v2678 = vpop.f32.mrb[0].mxu0
        %2679 = vmatprep.mubr.bf16.mxu0 %v1813
        %2680 = vmatmul.mubr.bf16.gmra.mrb[0].mxu0 %v1812
        %v2681 = vpop.f32.mrb[0].mxu0
        %v2682 = vadd.f32 0.0, %v2681
        %v2683 = vpop.f32.mrb[0].mxu0
        %v2684 = vpop.f32.mrb[0].mxu0
        %v2685 = vadd.f32 0.0, %v2684
        %v2686 = vpop.f32.mrb[0].mxu0
        %2687 = vmatprep.mubr.bf16.mxu0 %v1824
        %2688 = vmatmul.mubr.bf16.gmra.mrb[0].mxu0 %v1823
        %v2689 = vpop.f32.mrb[0].mxu0
        %v2690 = vadd.f32 0.0, %v2689
        %v2691 = vpop.f32.mrb[0].mxu0
        %v2692 = vpop.f32.mrb[0].mxu0
        %v2693 = vadd.f32 0.0, %v2692
        %v2694 = vpop.f32.mrb[0].mxu0
        %2695 = vmatprep.mubr.bf16.mxu0 %v1835
        %2696 = vmatmul.mubr.bf16.gmra.mrb[0].mxu0 %v1834
        %v2697 = vpop.f32.mrb[0].mxu0
        %v2698 = vadd.f32 0.0, %v2697
        %v2699 = vpop.f32.mrb[0].mxu0
        %v2700 = vpop.f32.mrb[0].mxu0
        %v2701 = vadd.f32 0.0, %v2700
        %v2702 = vpop.f32.mrb[0].mxu0
        %2703 = vmatprep.mubr.bf16.mxu0 %v1846
        %2704 = vmatmul.mubr.bf16.gmra.mrb[0].mxu0 %v1845
        %v2705 = vpop.f32.mrb[0].mxu0
        %v2706 = vadd.f32 0.0, %v2705
        %v2707 = vpop.f32.mrb[0].mxu0
        %v2708 = vpop.f32.mrb[0].mxu0
        %v2709 = vadd.f32 0.0, %v2708
        %v2710 = vpop.f32.mrb[0].mxu0
        %2711 = vmatprep.mubr.bf16.mxu0 %v1857
        %2712 = vmatmul.mubr.bf16.gmra.mrb[0].mxu0 %v1856
        %v2713 = vpop.f32.mrb[0].mxu0
        %v2714 = vadd.f32 0.0, %v2713
        %v2715 = vpop.f32.mrb[0].mxu0
        %v2716 = vpop.f32.mrb[0].mxu0
        %v2717 = vadd.f32 0.0, %v2716
        %v2718 = vpop.f32.mrb[0].mxu0
        %2719 = vmatprep.mubr.bf16.mxu0 %v1868
        %2720 = vmatmul.mubr.bf16.gmra.mrb[0].mxu0 %v1867
        %v2721 = vpop.f32.mrb[0].mxu0
        %v2722 = vadd.f32 0.0, %v2721
        %v2723 = vpop.f32.mrb[0].mxu0
        %v2724 = vpop.f32.mrb[0].mxu0
        %v2725 = vadd.f32 0.0, %v2724
        %v2726 = vpop.f32.mrb[0].mxu0
        %2727 = vmatprep.mubr.bf16.mxu0 %v1879
        %2728 = vmatmul.mubr.bf16.gmra.mrb[0].mxu0 %v1878
        %v2729 = vpop.f32.mrb[0].mxu0
        %v2730 = vadd.f32 0.0, %v2729
        %v2731 = vpop.f32.mrb[0].mxu0
        %v2732 = vpop.f32.mrb[0].mxu0
        %v2733 = vadd.f32 0.0, %v2732
        %v2734 = vpop.f32.mrb[0].mxu0
        %2735 = vmatprep.mubr.bf16.mxu0 %v1890
        %2736 = vmatmul.mubr.bf16.gmra.mrb[0].mxu0 %v1889
        %v2737 = vpop.f32.mrb[0].mxu0
        %v2738 = vadd.f32 0.0, %v2737
        %v2739 = vpop.f32.mrb[0].mxu0
        %v2740 = vpop.f32.mrb[0].mxu0
        %v2741 = vadd.f32 0.0, %v2740
        %v2742 = vpop.f32.mrb[0].mxu0
        %2743 = vmatprep.mubr.bf16.mxu0 %v1901
        %2744 = vmatmul.mubr.bf16.gmra.mrb[0].mxu0 %v1900
        %v2745 = vpop.f32.mrb[0].mxu0
        %v2746 = vadd.f32 0.0, %v2745
        %v2747 = vpop.f32.mrb[0].mxu0
        %v2748 = vpop.f32.mrb[0].mxu0
        %v2749 = vadd.f32 0.0, %v2748
        %v2750 = vpop.f32.mrb[0].mxu0
        %2751 = vmatprep.mubr.bf16.mxu0 %v1912
        %2752 = vmatmul.mubr.bf16.gmra.mrb[0].mxu0 %v1911
        %v2753 = vpop.f32.mrb[0].mxu0
        %v2754 = vadd.f32 0.0, %v2753
        %v2755 = vpop.f32.mrb[0].mxu0
        %v2756 = vpop.f32.mrb[0].mxu0
        %v2757 = vadd.f32 0.0, %v2756
        %v2758 = vpop.f32.mrb[0].mxu0
        %2759 = vmatprep.mubr.bf16.mxu0 %v1923
        %2760 = vmatmul.mubr.bf16.gmra.mrb[0].mxu0 %v1922
        %v2761 = vpop.f32.mrb[0].mxu0
        %v2762 = vadd.f32 0.0, %v2761
        %v2763 = vpop.f32.mrb[0].mxu0
        %v2764 = vpop.f32.mrb[0].mxu0
        %v2765 = vadd.f32 0.0, %v2764
        %v2766 = vpop.f32.mrb[0].mxu0
        %2767 = vmatprep.mubr.bf16.mxu0 %v1934
        %2768 = vmatmul.mubr.bf16.gmra.mrb[0].mxu0 %v1933
        %v2769 = vpop.f32.mrb[0].mxu0
        %v2770 = vadd.f32 0.0, %v2769
        %v2771 = vpop.f32.mrb[0].mxu0
        %v2772 = vpop.f32.mrb[0].mxu0
        %v2773 = vadd.f32 0.0, %v2772
        %v2774 = vpop.f32.mrb[0].mxu0
        %2775 = vdwg.mxu0
        %2776 = vmatprep.subr.bf16.mxu0 0
        %2777 = vmatpush1.bf16.msra.mxu0 %v2436
        %2778 = vmatprep.subr.bf16.mxu0 0
        %2779 = vmatpush1.bf16.msra.mxu0 %v2437
        %2780 = vmatprep.subr.bf16.mxu0 0
        %2781 = vmatpush1.bf16.msra.mxu0 %v2438
        %2782 = vmatprep.subr.bf16.mxu0 0
        %2783 = vmatpush1.bf16.msra.mxu0 %v2439
        %2784 = vmatprep.subr.bf16.mxu0 0
        %2785 = vmatpush1.bf16.msra.mxu0 %v2440
        %2786 = vmatprep.subr.bf16.mxu0 0
        %2787 = vmatpush1.bf16.msra.mxu0 %v2441
        %2788 = vmatprep.subr.bf16.mxu0 0
        %2789 = vmatpush1.bf16.msra.mxu0 %v2442
        %2790 = vmatprep.subr.bf16.mxu0 0
        %2791 = vmatpush1.bf16.msra.mxu0 %v2443
        %2792 = vmatprep.subr.bf16.mxu0 0
        %2793 = vmatpush1.bf16.msra.mxu0 %v2444
        %2794 = vmatprep.subr.bf16.mxu0 0
        %2795 = vmatpush1.bf16.msra.mxu0 %v2445
        %2796 = vmatprep.subr.bf16.mxu0 0
        %2797 = vmatpush1.bf16.msra.mxu0 %v2446
        %2798 = vmatprep.subr.bf16.mxu0 0
        %2799 = vmatpush1.bf16.msra.mxu0 %v2447
        %2800 = vmatprep.subr.bf16.mxu0 0
        %2801 = vmatpush1.bf16.msra.mxu0 %v2448
        %2802 = vmatprep.subr.bf16.mxu0 0
        %2803 = vmatpush1.bf16.msra.mxu0 %v2449
        %2804 = vmatprep.subr.bf16.mxu0 0
        %2805 = vmatpush1.bf16.msra.mxu0 %v2450
        %2806 = vmatprep.subr.bf16.mxu0 0
        %2807 = vmatpush1.bf16.msra.mxu0 %v2451
        %2808 = vmatprep.mubr.bf16.mxu0 %v1793
        %2809 = vmatmul.mubr.bf16.gmra.mrb[0].mxu0 %v1792
        %v2810 = vpop.f32.mrb[0].mxu0
        %v2811 = vadd.f32 %v2666, %v2810
        %v2812 = vpop.f32.mrb[0].mxu0
        %v2813 = vpop.f32.mrb[0].mxu0
        %v2814 = vadd.f32 %v2669, %v2813
        %v2815 = vpop.f32.mrb[0].mxu0
        %2816 = vmatprep.mubr.bf16.mxu0 %v1804
        %2817 = vmatmul.mubr.bf16.gmra.mrb[0].mxu0 %v1803
        %v2818 = vpop.f32.mrb[0].mxu0
        %v2819 = vadd.f32 %v2674, %v2818
        %v2820 = vpop.f32.mrb[0].mxu0
        %v2821 = vpop.f32.mrb[0].mxu0
        %v2822 = vadd.f32 %v2677, %v2821
        %v2823 = vpop.f32.mrb[0].mxu0
        %2824 = vmatprep.mubr.bf16.mxu0 %v1815
        %2825 = vmatmul.mubr.bf16.gmra.mrb[0].mxu0 %v1814
        %v2826 = vpop.f32.mrb[0].mxu0
        %v2827 = vadd.f32 %v2682, %v2826
        %v2828 = vpop.f32.mrb[0].mxu0
        %v2829 = vpop.f32.mrb[0].mxu0
        %v2830 = vadd.f32 %v2685, %v2829
        %v2831 = vpop.f32.mrb[0].mxu0
        %2832 = vmatprep.mubr.bf16.mxu0 %v1826
        %2833 = vmatmul.mubr.bf16.gmra.mrb[0].mxu0 %v1825
        %v2834 = vpop.f32.mrb[0].mxu0
        %v2835 = vadd.f32 %v2690, %v2834
        %v2836 = vpop.f32.mrb[0].mxu0
        %v2837 = vpop.f32.mrb[0].mxu0
        %v2838 = vadd.f32 %v2693, %v2837
        %v2839 = vpop.f32.mrb[0].mxu0
        %2840 = vmatprep.mubr.bf16.mxu0 %v1837
        %2841 = vmatmul.mubr.bf16.gmra.mrb[0].mxu0 %v1836
        %v2842 = vpop.f32.mrb[0].mxu0
        %v2843 = vadd.f32 %v2698, %v2842
        %v2844 = vpop.f32.mrb[0].mxu0
        %v2845 = vpop.f32.mrb[0].mxu0
        %v2846 = vadd.f32 %v2701, %v2845
        %v2847 = vpop.f32.mrb[0].mxu0
        %2848 = vmatprep.mubr.bf16.mxu0 %v1848
        %2849 = vmatmul.mubr.bf16.gmra.mrb[0].mxu0 %v1847
        %v2850 = vpop.f32.mrb[0].mxu0
        %v2851 = vadd.f32 %v2706, %v2850
        %v2852 = vpop.f32.mrb[0].mxu0
        %v2853 = vpop.f32.mrb[0].mxu0
        %v2854 = vadd.f32 %v2709, %v2853
        %v2855 = vpop.f32.mrb[0].mxu0
        %2856 = vmatprep.mubr.bf16.mxu0 %v1859
        %2857 = vmatmul.mubr.bf16.gmra.mrb[0].mxu0 %v1858
        %v2858 = vpop.f32.mrb[0].mxu0
        %v2859 = vadd.f32 %v2714, %v2858
        %v2860 = vpop.f32.mrb[0].mxu0
        %v2861 = vpop.f32.mrb[0].mxu0
        %v2862 = vadd.f32 %v2717, %v2861
        %v2863 = vpop.f32.mrb[0].mxu0
        %2864 = vmatprep.mubr.bf16.mxu0 %v1870
        %2865 = vmatmul.mubr.bf16.gmra.mrb[0].mxu0 %v1869
        %v2866 = vpop.f32.mrb[0].mxu0
        %v2867 = vadd.f32 %v2722, %v2866
        %v2868 = vpop.f32.mrb[0].mxu0
        %v2869 = vpop.f32.mrb[0].mxu0
        %v2870 = vadd.f32 %v2725, %v2869
        %v2871 = vpop.f32.mrb[0].mxu0
        %2872 = vmatprep.mubr.bf16.mxu0 %v1881
        %2873 = vmatmul.mubr.bf16.gmra.mrb[0].mxu0 %v1880
        %v2874 = vpop.f32.mrb[0].mxu0
        %v2875 = vadd.f32 %v2730, %v2874
        %v2876 = vpop.f32.mrb[0].mxu0
        %v2877 = vpop.f32.mrb[0].mxu0
        %v2878 = vadd.f32 %v2733, %v2877
        %v2879 = vpop.f32.mrb[0].mxu0
        %2880 = vmatprep.mubr.bf16.mxu0 %v1892
        %2881 = vmatmul.mubr.bf16.gmra.mrb[0].mxu0 %v1891
        %v2882 = vpop.f32.mrb[0].mxu0
        %v2883 = vadd.f32 %v2738, %v2882
        %v2884 = vpop.f32.mrb[0].mxu0
        %v2885 = vpop.f32.mrb[0].mxu0
        %v2886 = vadd.f32 %v2741, %v2885
        %v2887 = vpop.f32.mrb[0].mxu0
        %2888 = vmatprep.mubr.bf16.mxu0 %v1903
        %2889 = vmatmul.mubr.bf16.gmra.mrb[0].mxu0 %v1902
        %v2890 = vpop.f32.mrb[0].mxu0
        %v2891 = vadd.f32 %v2746, %v2890
        %v2892 = vpop.f32.mrb[0].mxu0
        %v2893 = vpop.f32.mrb[0].mxu0
        %v2894 = vadd.f32 %v2749, %v2893
        %v2895 = vpop.f32.mrb[0].mxu0
        %2896 = vmatprep.mubr.bf16.mxu0 %v1914
        %2897 = vmatmul.mubr.bf16.gmra.mrb[0].mxu0 %v1913
        %v2898 = vpop.f32.mrb[0].mxu0
        %v2899 = vadd.f32 %v2754, %v2898
        %v2900 = vpop.f32.mrb[0].mxu0
        %v2901 = vpop.f32.mrb[0].mxu0
        %v2902 = vadd.f32 %v2757, %v2901
        %v2903 = vpop.f32.mrb[0].mxu0
        %2904 = vmatprep.mubr.bf16.mxu0 %v1925
        %2905 = vmatmul.mubr.bf16.gmra.mrb[0].mxu0 %v1924
        %v2906 = vpop.f32.mrb[0].mxu0
        %v2907 = vadd.f32 %v2762, %v2906
        %v2908 = vpop.f32.mrb[0].mxu0
        %v2909 = vpop.f32.mrb[0].mxu0
        %v2910 = vadd.f32 %v2765, %v2909
        %v2911 = vpop.f32.mrb[0].mxu0
        %2912 = vmatprep.mubr.bf16.mxu0 %v1936
        %2913 = vmatmul.mubr.bf16.gmra.mrb[0].mxu0 %v1935
        %v2914 = vpop.f32.mrb[0].mxu0
        %v2915 = vadd.f32 %v2770, %v2914
        %v2916 = vpop.f32.mrb[0].mxu0
        %v2917 = vpop.f32.mrb[0].mxu0
        %v2918 = vadd.f32 %v2773, %v2917
        %v2919 = vpop.f32.mrb[0].mxu0
        %2920 = vdwg.mxu0
        %2921 = vmatprep.subr.bf16.mxu0 0
        %2922 = vmatpush1.bf16.msra.mxu0 %v2452
        %2923 = vmatprep.subr.bf16.mxu0 0
        %2924 = vmatpush1.bf16.msra.mxu0 %v2453
        %2925 = vmatprep.subr.bf16.mxu0 0
        %2926 = vmatpush1.bf16.msra.mxu0 %v2454
        %2927 = vmatprep.subr.bf16.mxu0 0
        %2928 = vmatpush1.bf16.msra.mxu0 %v2455
        %2929 = vmatprep.subr.bf16.mxu0 0
        %2930 = vmatpush1.bf16.msra.mxu0 %v2456
        %2931 = vmatprep.subr.bf16.mxu0 0
        %2932 = vmatpush1.bf16.msra.mxu0 %v2457
        %2933 = vmatprep.subr.bf16.mxu0 0
        %2934 = vmatpush1.bf16.msra.mxu0 %v2458
        %2935 = vmatprep.subr.bf16.mxu0 0
        %2936 = vmatpush1.bf16.msra.mxu0 %v2459
        %2937 = vmatprep.subr.bf16.mxu0 0
        %2938 = vmatpush1.bf16.msra.mxu0 %v2460
        %2939 = vmatprep.subr.bf16.mxu0 0
        %2940 = vmatpush1.bf16.msra.mxu0 %v2461
        %2941 = vmatprep.subr.bf16.mxu0 0
        %2942 = vmatpush1.bf16.msra.mxu0 %v2462
        %2943 = vmatprep.subr.bf16.mxu0 0
        %2944 = vmatpush1.bf16.msra.mxu0 %v2463
        %2945 = vmatprep.subr.bf16.mxu0 0
        %2946 = vmatpush1.bf16.msra.mxu0 %v2464
        %2947 = vmatprep.subr.bf16.mxu0 0
        %2948 = vmatpush1.bf16.msra.mxu0 %v2465
        %2949 = vmatprep.subr.bf16.mxu0 0
        %2950 = vmatpush1.bf16.msra.mxu0 %v2466
        %2951 = vmatprep.subr.bf16.mxu0 0
        %2952 = vmatpush1.bf16.msra.mxu0 %v2467
        %2953 = vmatprep.mubr.bf16.mxu0 %v1795
        %2954 = vmatmul.mubr.bf16.gmra.mrb[0].mxu0 %v1794
        %v2955 = vpop.f32.mrb[0].mxu0
        %v2956 = vadd.f32 %v2811, %v2955
        %v2957 = vpop.f32.mrb[0].mxu0
        %v2958 = vpop.f32.mrb[0].mxu0
        %v2959 = vadd.f32 %v2814, %v2958
        %v2960 = vpop.f32.mrb[0].mxu0
        %2961 = vmatprep.mubr.bf16.mxu0 %v1806
        %2962 = vmatmul.mubr.bf16.gmra.mrb[0].mxu0 %v1805
        %v2963 = vpop.f32.mrb[0].mxu0
        %v2964 = vadd.f32 %v2819, %v2963
        %v2965 = vpop.f32.mrb[0].mxu0
        %v2966 = vpop.f32.mrb[0].mxu0
        %v2967 = vadd.f32 %v2822, %v2966
        %v2968 = vpop.f32.mrb[0].mxu0
        %2969 = vmatprep.mubr.bf16.mxu0 %v1817
        %2970 = vmatmul.mubr.bf16.gmra.mrb[0].mxu0 %v1816
        %v2971 = vpop.f32.mrb[0].mxu0
        %v2972 = vadd.f32 %v2827, %v2971
        %v2973 = vpop.f32.mrb[0].mxu0
        %v2974 = vpop.f32.mrb[0].mxu0
        %v2975 = vadd.f32 %v2830, %v2974
        %v2976 = vpop.f32.mrb[0].mxu0
        %2977 = vmatprep.mubr.bf16.mxu0 %v1828
        %2978 = vmatmul.mubr.bf16.gmra.mrb[0].mxu0 %v1827
        %v2979 = vpop.f32.mrb[0].mxu0
        %v2980 = vadd.f32 %v2835, %v2979
        %v2981 = vpop.f32.mrb[0].mxu0
        %v2982 = vpop.f32.mrb[0].mxu0
        %v2983 = vadd.f32 %v2838, %v2982
        %v2984 = vpop.f32.mrb[0].mxu0
        %2985 = vmatprep.mubr.bf16.mxu0 %v1839
        %2986 = vmatmul.mubr.bf16.gmra.mrb[0].mxu0 %v1838
        %v2987 = vpop.f32.mrb[0].mxu0
        %v2988 = vadd.f32 %v2843, %v2987
        %v2989 = vpop.f32.mrb[0].mxu0
        %v2990 = vpop.f32.mrb[0].mxu0
        %v2991 = vadd.f32 %v2846, %v2990
        %v2992 = vpop.f32.mrb[0].mxu0
        %2993 = vmatprep.mubr.bf16.mxu0 %v1850
        %2994 = vmatmul.mubr.bf16.gmra.mrb[0].mxu0 %v1849
        %v2995 = vpop.f32.mrb[0].mxu0
        %v2996 = vadd.f32 %v2851, %v2995
        %v2997 = vpop.f32.mrb[0].mxu0
        %v2998 = vpop.f32.mrb[0].mxu0
        %v2999 = vadd.f32 %v2854, %v2998
        %v3000 = vpop.f32.mrb[0].mxu0
        %3001 = vmatprep.mubr.bf16.mxu0 %v1861
        %3002 = vmatmul.mubr.bf16.gmra.mrb[0].mxu0 %v1860
        %v3003 = vpop.f32.mrb[0].mxu0
        %v3004 = vadd.f32 %v2859, %v3003
        %v3005 = vpop.f32.mrb[0].mxu0
        %v3006 = vpop.f32.mrb[0].mxu0
        %v3007 = vadd.f32 %v2862, %v3006
        %v3008 = vpop.f32.mrb[0].mxu0
        %3009 = vmatprep.mubr.bf16.mxu0 %v1872
        %3010 = vmatmul.mubr.bf16.gmra.mrb[0].mxu0 %v1871
        %v3011 = vpop.f32.mrb[0].mxu0
        %v3012 = vadd.f32 %v2867, %v3011
        %v3013 = vpop.f32.mrb[0].mxu0
        %v3014 = vpop.f32.mrb[0].mxu0
        %v3015 = vadd.f32 %v2870, %v3014
        %v3016 = vpop.f32.mrb[0].mxu0
        %3017 = vmatprep.mubr.bf16.mxu0 %v1883
        %3018 = vmatmul.mubr.bf16.gmra.mrb[0].mxu0 %v1882
        %v3019 = vpop.f32.mrb[0].mxu0
        %v3020 = vadd.f32 %v2875, %v3019
        %v3021 = vpop.f32.mrb[0].mxu0
        %v3022 = vpop.f32.mrb[0].mxu0
        %v3023 = vadd.f32 %v2878, %v3022
        %v3024 = vpop.f32.mrb[0].mxu0
        %3025 = vmatprep.mubr.bf16.mxu0 %v1894
        %3026 = vmatmul.mubr.bf16.gmra.mrb[0].mxu0 %v1893
        %v3027 = vpop.f32.mrb[0].mxu0
        %v3028 = vadd.f32 %v2883, %v3027
        %v3029 = vpop.f32.mrb[0].mxu0
        %v3030 = vpop.f32.mrb[0].mxu0
        %v3031 = vadd.f32 %v2886, %v3030
        %v3032 = vpop.f32.mrb[0].mxu0
        %3033 = vmatprep.mubr.bf16.mxu0 %v1905
        %3034 = vmatmul.mubr.bf16.gmra.mrb[0].mxu0 %v1904
        %v3035 = vpop.f32.mrb[0].mxu0
        %v3036 = vadd.f32 %v2891, %v3035
        %v3037 = vpop.f32.mrb[0].mxu0
        %v3038 = vpop.f32.mrb[0].mxu0
        %v3039 = vadd.f32 %v2894, %v3038
        %v3040 = vpop.f32.mrb[0].mxu0
        %3041 = vmatprep.mubr.bf16.mxu0 %v1916
        %3042 = vmatmul.mubr.bf16.gmra.mrb[0].mxu0 %v1915
        %v3043 = vpop.f32.mrb[0].mxu0
        %v3044 = vadd.f32 %v2899, %v3043
        %v3045 = vpop.f32.mrb[0].mxu0
        %v3046 = vpop.f32.mrb[0].mxu0
        %v3047 = vadd.f32 %v2902, %v3046
        %v3048 = vpop.f32.mrb[0].mxu0
        %3049 = vmatprep.mubr.bf16.mxu0 %v1927
        %3050 = vmatmul.mubr.bf16.gmra.mrb[0].mxu0 %v1926
        %v3051 = vpop.f32.mrb[0].mxu0
        %v3052 = vadd.f32 %v2907, %v3051
        %v3053 = vpop.f32.mrb[0].mxu0
        %v3054 = vpop.f32.mrb[0].mxu0
        %v3055 = vadd.f32 %v2910, %v3054
        %v3056 = vpop.f32.mrb[0].mxu0
        %3057 = vmatprep.mubr.bf16.mxu0 %v1938
        %3058 = vmatmul.mubr.bf16.gmra.mrb[0].mxu0 %v1937
        %v3059 = vpop.f32.mrb[0].mxu0
        %v3060 = vadd.f32 %v2915, %v3059
        %v3061 = vpop.f32.mrb[0].mxu0
        %v3062 = vpop.f32.mrb[0].mxu0
        %v3063 = vadd.f32 %v2918, %v3062
        %v3064 = vpop.f32.mrb[0].mxu0
        %3065 = vdwg.mxu0
        %3066 = vmatprep.subr.bf16.mxu0 0
        %3067 = vmatpush1.bf16.msra.mxu0 %v2468
        %3068 = vmatprep.subr.bf16.mxu0 0
        %3069 = vmatpush1.bf16.msra.mxu0 %v2469
        %3070 = vmatprep.subr.bf16.mxu0 0
        %3071 = vmatpush1.bf16.msra.mxu0 %v2470
        %3072 = vmatprep.subr.bf16.mxu0 0
        %3073 = vmatpush1.bf16.msra.mxu0 %v2471
        %3074 = vmatprep.subr.bf16.mxu0 0
        %3075 = vmatpush1.bf16.msra.mxu0 %v2472
        %3076 = vmatprep.subr.bf16.mxu0 0
        %3077 = vmatpush1.bf16.msra.mxu0 %v2473
        %3078 = vmatprep.subr.bf16.mxu0 0
        %3079 = vmatpush1.bf16.msra.mxu0 %v2474
        %3080 = vmatprep.subr.bf16.mxu0 0
        %3081 = vmatpush1.bf16.msra.mxu0 %v2475
        %3082 = vmatprep.subr.bf16.mxu0 0
        %3083 = vmatpush1.bf16.msra.mxu0 %v2476
        %3084 = vmatprep.subr.bf16.mxu0 0
        %3085 = vmatpush1.bf16.msra.mxu0 %v2477
        %3086 = vmatprep.subr.bf16.mxu0 0
        %3087 = vmatpush1.bf16.msra.mxu0 %v2478
        %3088 = vmatprep.subr.bf16.mxu0 0
        %3089 = vmatpush1.bf16.msra.mxu0 %v2479
        %3090 = vmatprep.subr.bf16.mxu0 0
        %3091 = vmatpush1.bf16.msra.mxu0 %v2480
        %3092 = vmatprep.subr.bf16.mxu0 0
        %3093 = vmatpush1.bf16.msra.mxu0 %v2481
        %3094 = vmatprep.subr.bf16.mxu0 0
        %3095 = vmatpush1.bf16.msra.mxu0 %v2482
        %3096 = vmatprep.subr.bf16.mxu0 0
        %3097 = vmatpush1.bf16.msra.mxu0 %v2483
        %3098 = vmatprep.mubr.bf16.mxu0 %v1797
        %3099 = vmatmul.mubr.bf16.gmra.mrb[0].mxu0 %v1796
        %v3100 = vpop.f32.mrb[0].mxu0
        %v3101 = vadd.f32 %v2956, %v3100
        %v3102 = vpop.f32.mrb[0].mxu0
        %v3103 = vpop.f32.mrb[0].mxu0
        %v3104 = vadd.f32 %v2959, %v3103
        %v3105 = vpop.f32.mrb[0].mxu0
        %3106 = vmatprep.mubr.bf16.mxu0 %v1808
        %3107 = vmatmul.mubr.bf16.gmra.mrb[0].mxu0 %v1807
        %v3108 = vpop.f32.mrb[0].mxu0
        %v3109 = vadd.f32 %v2964, %v3108
        %v3110 = vpop.f32.mrb[0].mxu0
        %v3111 = vpop.f32.mrb[0].mxu0
        %v3112 = vadd.f32 %v2967, %v3111
        %v3113 = vpop.f32.mrb[0].mxu0
        %3114 = vmatprep.mubr.bf16.mxu0 %v1819
        %3115 = vmatmul.mubr.bf16.gmra.mrb[0].mxu0 %v1818
        %v3116 = vpop.f32.mrb[0].mxu0
        %v3117 = vadd.f32 %v2972, %v3116
        %v3118 = vpop.f32.mrb[0].mxu0
        %v3119 = vpop.f32.mrb[0].mxu0
        %v3120 = vadd.f32 %v2975, %v3119
        %v3121 = vpop.f32.mrb[0].mxu0
        %3122 = vmatprep.mubr.bf16.mxu0 %v1830
        %3123 = vmatmul.mubr.bf16.gmra.mrb[0].mxu0 %v1829
        %v3124 = vpop.f32.mrb[0].mxu0
        %v3125 = vadd.f32 %v2980, %v3124
        %v3126 = vpop.f32.mrb[0].mxu0
        %v3127 = vpop.f32.mrb[0].mxu0
        %v3128 = vadd.f32 %v2983, %v3127
        %v3129 = vpop.f32.mrb[0].mxu0
        %3130 = vmatprep.mubr.bf16.mxu0 %v1841
        %3131 = vmatmul.mubr.bf16.gmra.mrb[0].mxu0 %v1840
        %v3132 = vpop.f32.mrb[0].mxu0
        %v3133 = vadd.f32 %v2988, %v3132
        %v3134 = vpop.f32.mrb[0].mxu0
        %v3135 = vpop.f32.mrb[0].mxu0
        %v3136 = vadd.f32 %v2991, %v3135
        %v3137 = vpop.f32.mrb[0].mxu0
        %3138 = vmatprep.mubr.bf16.mxu0 %v1852
        %3139 = vmatmul.mubr.bf16.gmra.mrb[0].mxu0 %v1851
        %v3140 = vpop.f32.mrb[0].mxu0
        %v3141 = vadd.f32 %v2996, %v3140
        %v3142 = vpop.f32.mrb[0].mxu0
        %v3143 = vpop.f32.mrb[0].mxu0
        %v3144 = vadd.f32 %v2999, %v3143
        %v3145 = vpop.f32.mrb[0].mxu0
        %3146 = vmatprep.mubr.bf16.mxu0 %v1863
        %3147 = vmatmul.mubr.bf16.gmra.mrb[0].mxu0 %v1862
        %v3148 = vpop.f32.mrb[0].mxu0
        %v3149 = vadd.f32 %v3004, %v3148
        %v3150 = vpop.f32.mrb[0].mxu0
        %v3151 = vpop.f32.mrb[0].mxu0
        %v3152 = vadd.f32 %v3007, %v3151
        %v3153 = vpop.f32.mrb[0].mxu0
        %3154 = vmatprep.mubr.bf16.mxu0 %v1874
        %3155 = vmatmul.mubr.bf16.gmra.mrb[0].mxu0 %v1873
        %v3156 = vpop.f32.mrb[0].mxu0
        %v3157 = vadd.f32 %v3012, %v3156
        %v3158 = vpop.f32.mrb[0].mxu0
        %v3159 = vpop.f32.mrb[0].mxu0
        %v3160 = vadd.f32 %v3015, %v3159
        %v3161 = vpop.f32.mrb[0].mxu0
        %3162 = vmatprep.mubr.bf16.mxu0 %v1885
        %3163 = vmatmul.mubr.bf16.gmra.mrb[0].mxu0 %v1884
        %v3164 = vpop.f32.mrb[0].mxu0
        %v3165 = vadd.f32 %v3020, %v3164
        %v3166 = vpop.f32.mrb[0].mxu0
        %v3167 = vpop.f32.mrb[0].mxu0
        %v3168 = vadd.f32 %v3023, %v3167
        %v3169 = vpop.f32.mrb[0].mxu0
        %3170 = vmatprep.mubr.bf16.mxu0 %v1896
        %3171 = vmatmul.mubr.bf16.gmra.mrb[0].mxu0 %v1895
        %v3172 = vpop.f32.mrb[0].mxu0
        %v3173 = vadd.f32 %v3028, %v3172
        %v3174 = vpop.f32.mrb[0].mxu0
        %v3175 = vpop.f32.mrb[0].mxu0
        %v3176 = vadd.f32 %v3031, %v3175
        %v3177 = vpop.f32.mrb[0].mxu0
        %3178 = vmatprep.mubr.bf16.mxu0 %v1907
        %3179 = vmatmul.mubr.bf16.gmra.mrb[0].mxu0 %v1906
        %v3180 = vpop.f32.mrb[0].mxu0
        %v3181 = vadd.f32 %v3036, %v3180
        %v3182 = vpop.f32.mrb[0].mxu0
        %v3183 = vpop.f32.mrb[0].mxu0
        %v3184 = vadd.f32 %v3039, %v3183
        %v3185 = vpop.f32.mrb[0].mxu0
        %3186 = vmatprep.mubr.bf16.mxu0 %v1918
        %3187 = vmatmul.mubr.bf16.gmra.mrb[0].mxu0 %v1917
        %v3188 = vpop.f32.mrb[0].mxu0
        %v3189 = vadd.f32 %v3044, %v3188
        %v3190 = vpop.f32.mrb[0].mxu0
        %v3191 = vpop.f32.mrb[0].mxu0
        %v3192 = vadd.f32 %v3047, %v3191
        %v3193 = vpop.f32.mrb[0].mxu0
        %3194 = vmatprep.mubr.bf16.mxu0 %v1929
        %3195 = vmatmul.mubr.bf16.gmra.mrb[0].mxu0 %v1928
        %v3196 = vpop.f32.mrb[0].mxu0
        %v3197 = vadd.f32 %v3052, %v3196
        %v3198 = vpop.f32.mrb[0].mxu0
        %v3199 = vpop.f32.mrb[0].mxu0
        %v3200 = vadd.f32 %v3055, %v3199
        %v3201 = vpop.f32.mrb[0].mxu0
        %3202 = vmatprep.mubr.bf16.mxu0 %v1940
        %3203 = vmatmul.mubr.bf16.gmra.mrb[0].mxu0 %v1939
        %v3204 = vpop.f32.mrb[0].mxu0
        %v3205 = vadd.f32 %v3060, %v3204
        %v3206 = vpop.f32.mrb[0].mxu0
        %v3207 = vpop.f32.mrb[0].mxu0
        %v3208 = vadd.f32 %v3063, %v3207
        %v3209 = vpop.f32.mrb[0].mxu0
        %3210 = vdwg.mxu0
        %3211 = vmatprep.subr.bf16.mxu0 0
        %3212 = vmatpush1.bf16.msra.mxu0 %v2484
        %3213 = vmatprep.subr.bf16.mxu0 0
        %3214 = vmatpush1.bf16.msra.mxu0 %v2485
        %3215 = vmatprep.subr.bf16.mxu0 0
        %3216 = vmatpush1.bf16.msra.mxu0 %v2486
        %3217 = vmatprep.subr.bf16.mxu0 0
        %3218 = vmatpush1.bf16.msra.mxu0 %v2487
        %3219 = vmatprep.subr.bf16.mxu0 0
        %3220 = vmatpush1.bf16.msra.mxu0 %v2488
        %3221 = vmatprep.subr.bf16.mxu0 0
        %3222 = vmatpush1.bf16.msra.mxu0 %v2489
        %3223 = vmatprep.subr.bf16.mxu0 0
        %3224 = vmatpush1.bf16.msra.mxu0 %v2490
        %3225 = vmatprep.subr.bf16.mxu0 0
        %3226 = vmatpush1.bf16.msra.mxu0 %v2491
        %3227 = vmatprep.subr.bf16.mxu0 0
        %3228 = vmatpush1.bf16.msra.mxu0 %v2492
        %3229 = vmatprep.subr.bf16.mxu0 0
        %3230 = vmatpush1.bf16.msra.mxu0 %v2493
        %3231 = vmatprep.subr.bf16.mxu0 0
        %3232 = vmatpush1.bf16.msra.mxu0 %v2494
        %3233 = vmatprep.subr.bf16.mxu0 0
        %3234 = vmatpush1.bf16.msra.mxu0 %v2495
        %3235 = vmatprep.subr.bf16.mxu0 0
        %3236 = vmatpush1.bf16.msra.mxu0 %v2496
        %3237 = vmatprep.subr.bf16.mxu0 0
        %3238 = vmatpush1.bf16.msra.mxu0 %v2497
        %3239 = vmatprep.subr.bf16.mxu0 0
        %3240 = vmatpush1.bf16.msra.mxu0 %v2498
        %3241 = vmatprep.subr.bf16.mxu0 0
        %3242 = vmatpush1.bf16.msra.mxu0 %v2499
        %3243 = vmatprep.mubr.bf16.mxu0 %v1799
        %3244 = vmatmul.mubr.bf16.gmra.mrb[0].mxu0 %v1798
        %v3245 = vpop.f32.mrb[0].mxu0
        %v3246 = vadd.f32 %v3101, %v3245
        %v3247 = vpop.f32.mrb[0].mxu0
        %v3248 = vpop.f32.mrb[0].mxu0
        %v3249 = vadd.f32 %v3104, %v3248
        %v3250 = vpop.f32.mrb[0].mxu0
        %3251 = vmatprep.mubr.bf16.mxu0 %v1810
        %3252 = vmatmul.mubr.bf16.gmra.mrb[0].mxu0 %v1809
        %v3253 = vpop.f32.mrb[0].mxu0
        %v3254 = vadd.f32 %v3109, %v3253
        %v3255 = vpop.f32.mrb[0].mxu0
        %v3256 = vpop.f32.mrb[0].mxu0
        %v3257 = vadd.f32 %v3112, %v3256
        %v3258 = vpop.f32.mrb[0].mxu0
        %3259 = vmatprep.mubr.bf16.mxu0 %v1821
        %3260 = vmatmul.mubr.bf16.gmra.mrb[0].mxu0 %v1820
        %v3261 = vpop.f32.mrb[0].mxu0
        %v3262 = vadd.f32 %v3117, %v3261
        %v3263 = vpop.f32.mrb[0].mxu0
        %v3264 = vpop.f32.mrb[0].mxu0
        %v3265 = vadd.f32 %v3120, %v3264
        %v3266 = vpop.f32.mrb[0].mxu0
        %3267 = vmatprep.mubr.bf16.mxu0 %v1832
        %3268 = vmatmul.mubr.bf16.gmra.mrb[0].mxu0 %v1831
        %v3269 = vpop.f32.mrb[0].mxu0
        %v3270 = vadd.f32 %v3125, %v3269
        %v3271 = vpop.f32.mrb[0].mxu0
        %v3272 = vpop.f32.mrb[0].mxu0
        %v3273 = vadd.f32 %v3128, %v3272
        %v3274 = vpop.f32.mrb[0].mxu0
        %3275 = vmatprep.mubr.bf16.mxu0 %v1843
        %3276 = vmatmul.mubr.bf16.gmra.mrb[0].mxu0 %v1842
        %v3277 = vpop.f32.mrb[0].mxu0
        %v3278 = vadd.f32 %v3133, %v3277
        %v3279 = vpop.f32.mrb[0].mxu0
        %v3280 = vpop.f32.mrb[0].mxu0
        %v3281 = vadd.f32 %v3136, %v3280
        %v3282 = vpop.f32.mrb[0].mxu0
        %3283 = vmatprep.mubr.bf16.mxu0 %v1854
        %3284 = vmatmul.mubr.bf16.gmra.mrb[0].mxu0 %v1853
        %v3285 = vpop.f32.mrb[0].mxu0
        %v3286 = vadd.f32 %v3141, %v3285
        %v3287 = vpop.f32.mrb[0].mxu0
        %v3288 = vpop.f32.mrb[0].mxu0
        %v3289 = vadd.f32 %v3144, %v3288
        %v3290 = vpop.f32.mrb[0].mxu0
        %3291 = vmatprep.mubr.bf16.mxu0 %v1865
        %3292 = vmatmul.mubr.bf16.gmra.mrb[0].mxu0 %v1864
        %v3293 = vpop.f32.mrb[0].mxu0
        %v3294 = vadd.f32 %v3149, %v3293
        %v3295 = vpop.f32.mrb[0].mxu0
        %v3296 = vpop.f32.mrb[0].mxu0
        %v3297 = vadd.f32 %v3152, %v3296
        %v3298 = vpop.f32.mrb[0].mxu0
        %3299 = vmatprep.mubr.bf16.mxu0 %v1876
        %3300 = vmatmul.mubr.bf16.gmra.mrb[0].mxu0 %v1875
        %v3301 = vpop.f32.mrb[0].mxu0
        %v3302 = vadd.f32 %v3157, %v3301
        %v3303 = vpop.f32.mrb[0].mxu0
        %v3304 = vpop.f32.mrb[0].mxu0
        %v3305 = vadd.f32 %v3160, %v3304
        %v3306 = vpop.f32.mrb[0].mxu0
        %3307 = vmatprep.mubr.bf16.mxu0 %v1887
        %3308 = vmatmul.mubr.bf16.gmra.mrb[0].mxu0 %v1886
        %v3309 = vpop.f32.mrb[0].mxu0
        %v3310 = vadd.f32 %v3165, %v3309
        %v3311 = vpop.f32.mrb[0].mxu0
        %v3312 = vpop.f32.mrb[0].mxu0
        %v3313 = vadd.f32 %v3168, %v3312
        %v3314 = vpop.f32.mrb[0].mxu0
        %3315 = vmatprep.mubr.bf16.mxu0 %v1898
        %3316 = vmatmul.mubr.bf16.gmra.mrb[0].mxu0 %v1897
        %v3317 = vpop.f32.mrb[0].mxu0
        %v3318 = vadd.f32 %v3173, %v3317
        %v3319 = vpop.f32.mrb[0].mxu0
        %v3320 = vpop.f32.mrb[0].mxu0
        %v3321 = vadd.f32 %v3176, %v3320
        %v3322 = vpop.f32.mrb[0].mxu0
        %3323 = vmatprep.mubr.bf16.mxu0 %v1909
        %3324 = vmatmul.mubr.bf16.gmra.mrb[0].mxu0 %v1908
        %v3325 = vpop.f32.mrb[0].mxu0
        %v3326 = vadd.f32 %v3181, %v3325
        %v3327 = vpop.f32.mrb[0].mxu0
        %v3328 = vpop.f32.mrb[0].mxu0
        %v3329 = vadd.f32 %v3184, %v3328
        %v3330 = vpop.f32.mrb[0].mxu0
        %3331 = vmatprep.mubr.bf16.mxu0 %v1920
        %3332 = vmatmul.mubr.bf16.gmra.mrb[0].mxu0 %v1919
        %v3333 = vpop.f32.mrb[0].mxu0
        %v3334 = vadd.f32 %v3189, %v3333
        %v3335 = vpop.f32.mrb[0].mxu0
        %v3336 = vpop.f32.mrb[0].mxu0
        %v3337 = vadd.f32 %v3192, %v3336
        %v3338 = vpop.f32.mrb[0].mxu0
        %3339 = vmatprep.mubr.bf16.mxu0 %v1931
        %3340 = vmatmul.mubr.bf16.gmra.mrb[0].mxu0 %v1930
        %v3341 = vpop.f32.mrb[0].mxu0
        %v3342 = vadd.f32 %v3197, %v3341
        %v3343 = vpop.f32.mrb[0].mxu0
        %v3344 = vpop.f32.mrb[0].mxu0
        %v3345 = vadd.f32 %v3200, %v3344
        %v3346 = vpop.f32.mrb[0].mxu0
        %3347 = vmatprep.mubr.bf16.mxu0 %v1942
        %3348 = vmatmul.mubr.bf16.gmra.mrb[0].mxu0 %v1941
        %v3349 = vpop.f32.mrb[0].mxu0
        %v3350 = vadd.f32 %v3205, %v3349
        %v3351 = vpop.f32.mrb[0].mxu0
        %v3352 = vpop.f32.mrb[0].mxu0
        %v3353 = vadd.f32 %v3208, %v3352
        %v3354 = vpop.f32.mrb[0].mxu0
        %3355 = vdwg.mxu0
        %3356 = vmatprep.subr.bf16.mxu0 0
        %3357 = vmatpush1.bf16.msra.mxu0 %v2500
        %3358 = vmatprep.subr.bf16.mxu0 0
        %3359 = vmatpush1.bf16.msra.mxu0 %v2501
        %3360 = vmatprep.subr.bf16.mxu0 0
        %3361 = vmatpush1.bf16.msra.mxu0 %v2502
        %3362 = vmatprep.subr.bf16.mxu0 0
        %3363 = vmatpush1.bf16.msra.mxu0 %v2503
        %3364 = vmatprep.subr.bf16.mxu0 0
        %3365 = vmatpush1.bf16.msra.mxu0 0
        %3366 = vmatprep.subr.bf16.mxu0 0
        %3367 = vmatpush1.bf16.msra.mxu0 0
        %3368 = vmatprep.subr.bf16.mxu0 0
        %3369 = vmatpush1.bf16.msra.mxu0 0
        %3370 = vmatprep.subr.bf16.mxu0 0
        %3371 = vmatpush1.bf16.msra.mxu0 0
        %3372 = vmatprep.subr.bf16.mxu0 0
        %3373 = vmatpush1.bf16.msra.mxu0 0
        %3374 = vmatprep.subr.bf16.mxu0 0
        %3375 = vmatpush1.bf16.msra.mxu0 0
        %3376 = vmatprep.subr.bf16.mxu0 0
        %3377 = vmatpush1.bf16.msra.mxu0 0
        %3378 = vmatprep.subr.bf16.mxu0 0
        %3379 = vmatpush1.bf16.msra.mxu0 0
        %3380 = vmatprep.subr.bf16.mxu0 0
        %3381 = vmatpush1.bf16.msra.mxu0 0
        %3382 = vmatprep.subr.bf16.mxu0 0
        %3383 = vmatpush1.bf16.msra.mxu0 0
        %3384 = vmatprep.subr.bf16.mxu0 0
        %3385 = vmatpush1.bf16.msra.mxu0 0
        %3386 = vmatprep.subr.bf16.mxu0 0
        %3387 = vmatpush1.bf16.msra.mxu0 0
        %3388 = vmatprep.mubr.bf16.mxu0 0
        %3389 = vmatmul.mubr.bf16.gmra.mrb[0].mxu0 %v2590
        %v3390 = vpop.f32.mrb[0].mxu0
        %v3391 = vadd.f32 %v3246, %v3390
        %v3392 = vpop.f32.mrb[0].mxu0
        %v3393 = vpop.f32.mrb[0].mxu0
        %v3394 = vadd.f32 %v3249, %v3393
        %v3395 = vpop.f32.mrb[0].mxu0
        %3396 = vmatprep.mubr.bf16.mxu0 0
        %3397 = vmatmul.mubr.bf16.gmra.mrb[0].mxu0 %v2593
        %v3398 = vpop.f32.mrb[0].mxu0
        %v3399 = vadd.f32 %v3254, %v3398
        %v3400 = vpop.f32.mrb[0].mxu0
        %v3401 = vpop.f32.mrb[0].mxu0
        %v3402 = vadd.f32 %v3257, %v3401
        %v3403 = vpop.f32.mrb[0].mxu0
        %3404 = vmatprep.mubr.bf16.mxu0 0
        %3405 = vmatmul.mubr.bf16.gmra.mrb[0].mxu0 %v2596
        %v3406 = vpop.f32.mrb[0].mxu0
        %v3407 = vadd.f32 %v3262, %v3406
        %v3408 = vpop.f32.mrb[0].mxu0
        %v3409 = vpop.f32.mrb[0].mxu0
        %v3410 = vadd.f32 %v3265, %v3409
        %v3411 = vpop.f32.mrb[0].mxu0
        %3412 = vmatprep.mubr.bf16.mxu0 0
        %3413 = vmatmul.mubr.bf16.gmra.mrb[0].mxu0 %v2599
        %v3414 = vpop.f32.mrb[0].mxu0
        %v3415 = vadd.f32 %v3270, %v3414
        %v3416 = vpop.f32.mrb[0].mxu0
        %v3417 = vpop.f32.mrb[0].mxu0
        %v3418 = vadd.f32 %v3273, %v3417
        %v3419 = vpop.f32.mrb[0].mxu0
        %3420 = vmatprep.mubr.bf16.mxu0 0
        %3421 = vmatmul.mubr.bf16.gmra.mrb[0].mxu0 %v2602
        %v3422 = vpop.f32.mrb[0].mxu0
        %v3423 = vadd.f32 %v3278, %v3422
        %v3424 = vpop.f32.mrb[0].mxu0
        %v3425 = vpop.f32.mrb[0].mxu0
        %v3426 = vadd.f32 %v3281, %v3425
        %v3427 = vpop.f32.mrb[0].mxu0
        %3428 = vmatprep.mubr.bf16.mxu0 0
        %3429 = vmatmul.mubr.bf16.gmra.mrb[0].mxu0 %v2605
        %v3430 = vpop.f32.mrb[0].mxu0
        %v3431 = vadd.f32 %v3286, %v3430
        %v3432 = vpop.f32.mrb[0].mxu0
        %v3433 = vpop.f32.mrb[0].mxu0
        %v3434 = vadd.f32 %v3289, %v3433
        %v3435 = vpop.f32.mrb[0].mxu0
        %3436 = vmatprep.mubr.bf16.mxu0 0
        %3437 = vmatmul.mubr.bf16.gmra.mrb[0].mxu0 %v2608
        %v3438 = vpop.f32.mrb[0].mxu0
        %v3439 = vadd.f32 %v3294, %v3438
        %v3440 = vpop.f32.mrb[0].mxu0
        %v3441 = vpop.f32.mrb[0].mxu0
        %v3442 = vadd.f32 %v3297, %v3441
        %v3443 = vpop.f32.mrb[0].mxu0
        %3444 = vmatprep.mubr.bf16.mxu0 0
        %3445 = vmatmul.mubr.bf16.gmra.mrb[0].mxu0 %v2611
        %v3446 = vpop.f32.mrb[0].mxu0
        %v3447 = vadd.f32 %v3302, %v3446
        %v3448 = vpop.f32.mrb[0].mxu0
        %v3449 = vpop.f32.mrb[0].mxu0
        %v3450 = vadd.f32 %v3305, %v3449
        %v3451 = vpop.f32.mrb[0].mxu0
        %3452 = vmatprep.mubr.bf16.mxu0 0
        %3453 = vmatmul.mubr.bf16.gmra.mrb[0].mxu0 %v2614
        %v3454 = vpop.f32.mrb[0].mxu0
        %v3455 = vadd.f32 %v3310, %v3454
        %v3456 = vpop.f32.mrb[0].mxu0
        %v3457 = vpop.f32.mrb[0].mxu0
        %v3458 = vadd.f32 %v3313, %v3457
        %v3459 = vpop.f32.mrb[0].mxu0
        %3460 = vmatprep.mubr.bf16.mxu0 0
        %3461 = vmatmul.mubr.bf16.gmra.mrb[0].mxu0 %v2617
        %v3462 = vpop.f32.mrb[0].mxu0
        %v3463 = vadd.f32 %v3318, %v3462
        %v3464 = vpop.f32.mrb[0].mxu0
        %v3465 = vpop.f32.mrb[0].mxu0
        %v3466 = vadd.f32 %v3321, %v3465
        %v3467 = vpop.f32.mrb[0].mxu0
        %3468 = vmatprep.mubr.bf16.mxu0 0
        %3469 = vmatmul.mubr.bf16.gmra.mrb[0].mxu0 %v2620
        %v3470 = vpop.f32.mrb[0].mxu0
        %v3471 = vadd.f32 %v3326, %v3470
        %v3472 = vpop.f32.mrb[0].mxu0
        %v3473 = vpop.f32.mrb[0].mxu0
        %v3474 = vadd.f32 %v3329, %v3473
        %v3475 = vpop.f32.mrb[0].mxu0
        %3476 = vmatprep.mubr.bf16.mxu0 0
        %3477 = vmatmul.mubr.bf16.gmra.mrb[0].mxu0 %v2623
        %v3478 = vpop.f32.mrb[0].mxu0
        %v3479 = vadd.f32 %v3334, %v3478
        %v3480 = vpop.f32.mrb[0].mxu0
        %v3481 = vpop.f32.mrb[0].mxu0
        %v3482 = vadd.f32 %v3337, %v3481
        %v3483 = vpop.f32.mrb[0].mxu0
        %3484 = vmatprep.mubr.bf16.mxu0 0
        %3485 = vmatmul.mubr.bf16.gmra.mrb[0].mxu0 %v2626
        %v3486 = vpop.f32.mrb[0].mxu0
        %v3487 = vadd.f32 %v3342, %v3486
        %v3488 = vpop.f32.mrb[0].mxu0
        %v3489 = vpop.f32.mrb[0].mxu0
        %v3490 = vadd.f32 %v3345, %v3489
        %v3491 = vpop.f32.mrb[0].mxu0
        %3492 = vmatprep.mubr.bf16.mxu0 0
        %3493 = vmatmul.mubr.bf16.gmra.mrb[0].mxu0 %v2629
        %v3494 = vpop.f32.mrb[0].mxu0
        %v3495 = vadd.f32 %v3350, %v3494
        %v3496 = vpop.f32.mrb[0].mxu0
        %v3497 = vpop.f32.mrb[0].mxu0
        %v3498 = vadd.f32 %v3353, %v3497
        %v3499 = vpop.f32.mrb[0].mxu0
        %3500 = vdwg.mxu0
        %3501 = vst [vmem:[%s909] sm:$0xff] %v3391
        %3502 = vst [vmem:[%s909 + $0x8] sm:$0xff] %v3394
        %3503 = vst [vmem:[%s909 + $0x10] sm:$0xff] %v3399
        %3504 = vst [vmem:[%s909 + $0x18] sm:$0xff] %v3402
        %3505 = vst [vmem:[%s909 + $0x20] sm:$0xff] %v3407
        %3506 = vst [vmem:[%s909 + $0x28] sm:$0xff] %v3410
        %3507 = vst [vmem:[%s909 + $0x30] sm:$0xff] %v3415
        %3508 = vst [vmem:[%s909 + $0x38] sm:$0xff] %v3418
        %3509 = vst [vmem:[%s909 + $0x40] sm:$0xff] %v3423
        %3510 = vst [vmem:[%s909 + $0x48] sm:$0xff] %v3426
        %3511 = vst [vmem:[%s909 + $0x50] sm:$0xff] %v3431
        %3512 = vst [vmem:[%s909 + $0x58] sm:$0xff] %v3434
        %3513 = vst [vmem:[%s909 + $0x60] sm:$0xff] %v3439
        %3514 = vst [vmem:[%s909 + $0x68] sm:$0xff] %v3442
        %3515 = vst [vmem:[%s909 + $0x70] sm:$0xff] %v3447
        %3516 = vst [vmem:[%s909 + $0x78] sm:$0xff] %v3450
        %3517 = vst [vmem:[%s909 + $0x80] sm:$0xff] %v3455
        %3518 = vst [vmem:[%s909 + $0x88] sm:$0xff] %v3458
        %3519 = vst [vmem:[%s909 + $0x90] sm:$0xff] %v3463
        %3520 = vst [vmem:[%s909 + $0x98] sm:$0xff] %v3466
        %3521 = vst [vmem:[%s909 + $0xa0] sm:$0xff] %v3471
        %3522 = vst [vmem:[%s909 + $0xa8] sm:$0xff] %v3474
        %3523 = vst [vmem:[%s909 + $0xb0] sm:$0xff] %v3479
        %3524 = vst [vmem:[%s909 + $0xb8] sm:$0xff] %v3482
        %3525 = vst [vmem:[%s909 + $0xc0] sm:$0xff] %v3487
        %3526 = vst [vmem:[%s909 + $0xc8] sm:$0xff] %v3490
        %3527 = vst [vmem:[%s909 + $0xd0] sm:$0xff] %v3495
        %3528 = vst [vmem:[%s909 + $0xd8] sm:$0xff] %v3498
        %v3529 = vlaneseq
        %v3530 = vand.u32 %v3529, 127
        %s3531 = smul.u32 %s21, 128
        %v3532 = vstv %s3531
        %v3533 = vadd.s32 %v3530, %v3532
        %vm3534 = vcmp.lt.s32.totalorder %v3533, 196
        %v3535 = vsel %vm3534, %v3391, 0.0
        %v3536 = vsel %vm3534, %v3394, 0.0
        %v3537 = vsel %vm3534, %v3399, 0.0
        %v3538 = vsel %vm3534, %v3402, 0.0
        %v3539 = vsel %vm3534, %v3407, 0.0
        %v3540 = vsel %vm3534, %v3410, 0.0
        %v3541 = vsel %vm3534, %v3415, 0.0
        %v3542 = vsel %vm3534, %v3418, 0.0
        %v3543 = vsel %vm3534, %v3423, 0.0
        %v3544 = vsel %vm3534, %v3426, 0.0
        %v3545 = vsel %vm3534, %v3431, 0.0
        %v3546 = vsel %vm3534, %v3434, 0.0
        %v3547 = vsel %vm3534, %v3439, 0.0
        %v3548 = vsel %vm3534, %v3442, 0.0
        %v3549 = vsel %vm3534, %v3447, 0.0
        %v3550 = vsel %vm3534, %v3450, 0.0
        %v3551 = vsel %vm3534, %v3455, 0.0
        %v3552 = vsel %vm3534, %v3458, 0.0
        %v3553 = vsel %vm3534, %v3463, 0.0
        %v3554 = vsel %vm3534, %v3466, 0.0
        %v3555 = vsel %vm3534, %v3471, 0.0
        %v3556 = vsel %vm3534, %v3474, 0.0
        %v3557 = vsel %vm3534, %v3479, 0.0
        %v3558 = vsel %vm3534, %v3482, 0.0
        %v3559 = vsel %vm3534, %v3487, 0.0
        %v3560 = vsel %vm3534, %v3490, 0.0
        %v3561 = vsel %vm3534, %v3495, 0.0
        %v3562 = vsel %vm3534, %v3498, 0.0
        %v3563 = vld [vmem:[%s3] sm:$0xff]
        %v3564 = vld [vmem:[%s3 + $0x8] sm:$0xff]
        %v3565 = vld [vmem:[%s3 + $0x10] sm:$0xff]
        %v3566 = vld [vmem:[%s3 + $0x18] sm:$0xff]
        %v3567 = vld [vmem:[%s3 + $0x20] sm:$0xff]
        %v3568 = vld [vmem:[%s3 + $0x28] sm:$0xff]
        %v3569 = vld [vmem:[%s3 + $0x30] sm:$0xff]
        %v3570 = vld [vmem:[%s3 + $0x38] sm:$0xff]
        %v3571 = vld [vmem:[%s3 + $0x40] sm:$0xff]
        %v3572 = vld [vmem:[%s3 + $0x48] sm:$0xff]
        %v3573 = vld [vmem:[%s3 + $0x50] sm:$0xff]
        %v3574 = vld [vmem:[%s3 + $0x58] sm:$0xff]
        %v3575 = vld [vmem:[%s3 + $0x60] sm:$0xff]
        %v3576 = vld [vmem:[%s3 + $0x68] sm:$0xff]
        %v3577 = vld [vmem:[%s3 + $0x70] sm:$0xff]
        %v3578 = vld [vmem:[%s3 + $0x78] sm:$0xff]
        %v3579 = vld [vmem:[%s3 + $0x80] sm:$0xff]
        %v3580 = vld [vmem:[%s3 + $0x88] sm:$0xff]
        %v3581 = vld [vmem:[%s3 + $0x90] sm:$0xff]
        %v3582 = vld [vmem:[%s3 + $0x98] sm:$0xff]
        %v3583 = vld [vmem:[%s3 + $0xa0] sm:$0xff]
        %v3584 = vld [vmem:[%s3 + $0xa8] sm:$0xff]
        %v3585 = vld [vmem:[%s3 + $0xb0] sm:$0xff]
        %v3586 = vld [vmem:[%s3 + $0xb8] sm:$0xff]
        %v3587 = vld [vmem:[%s3 + $0xc0] sm:$0xff]
        %v3588 = vld [vmem:[%s3 + $0xc8] sm:$0xff]
        %v3589 = vld [vmem:[%s3 + $0xd0] sm:$0xff]
        %v3590 = vld [vmem:[%s3 + $0xd8] sm:$0xff]
        %3591 = vadd.xlane.f32.xlu0 %v3535
        %v3592 = vpop.xlane.xlu0 %3591
        %3593 = vadd.xlane.f32.xlu0 %v3536
        %v3594 = vpop.xlane.xlu0 %3593
        %3595 = vadd.xlane.f32.xlu0 %v3537
        %v3596 = vpop.xlane.xlu0 %3595
        %3597 = vadd.xlane.f32.xlu0 %v3538
        %v3598 = vpop.xlane.xlu0 %3597
        %3599 = vadd.xlane.f32.xlu0 %v3539
        %v3600 = vpop.xlane.xlu0 %3599
        %3601 = vadd.xlane.f32.xlu0 %v3540
        %v3602 = vpop.xlane.xlu0 %3601
        %3603 = vadd.xlane.f32.xlu0 %v3541
        %v3604 = vpop.xlane.xlu0 %3603
        %3605 = vadd.xlane.f32.xlu0 %v3542
        %v3606 = vpop.xlane.xlu0 %3605
        %3607 = vadd.xlane.f32.xlu0 %v3543
        %v3608 = vpop.xlane.xlu0 %3607
        %3609 = vadd.xlane.f32.xlu0 %v3544
        %v3610 = vpop.xlane.xlu0 %3609
        %3611 = vadd.xlane.f32.xlu0 %v3545
        %v3612 = vpop.xlane.xlu0 %3611
        %3613 = vadd.xlane.f32.xlu0 %v3546
        %v3614 = vpop.xlane.xlu0 %3613
        %3615 = vadd.xlane.f32.xlu0 %v3547
        %v3616 = vpop.xlane.xlu0 %3615
        %3617 = vadd.xlane.f32.xlu0 %v3548
        %v3618 = vpop.xlane.xlu0 %3617
        %3619 = vadd.xlane.f32.xlu0 %v3549
        %v3620 = vpop.xlane.xlu0 %3619
        %3621 = vadd.xlane.f32.xlu0 %v3550
        %v3622 = vpop.xlane.xlu0 %3621
        %3623 = vadd.xlane.f32.xlu0 %v3551
        %v3624 = vpop.xlane.xlu0 %3623
        %3625 = vadd.xlane.f32.xlu0 %v3552
        %v3626 = vpop.xlane.xlu0 %3625
        %3627 = vadd.xlane.f32.xlu0 %v3553
        %v3628 = vpop.xlane.xlu0 %3627
        %3629 = vadd.xlane.f32.xlu0 %v3554
        %v3630 = vpop.xlane.xlu0 %3629
        %3631 = vadd.xlane.f32.xlu0 %v3555
        %v3632 = vpop.xlane.xlu0 %3631
        %3633 = vadd.xlane.f32.xlu0 %v3556
        %v3634 = vpop.xlane.xlu0 %3633
        %3635 = vadd.xlane.f32.xlu0 %v3557
        %v3636 = vpop.xlane.xlu0 %3635
        %3637 = vadd.xlane.f32.xlu0 %v3558
        %v3638 = vpop.xlane.xlu0 %3637
        %3639 = vadd.xlane.f32.xlu0 %v3559
        %v3640 = vpop.xlane.xlu0 %3639
        %3641 = vadd.xlane.f32.xlu0 %v3560
        %v3642 = vpop.xlane.xlu0 %3641
        %3643 = vadd.xlane.f32.xlu0 %v3561
        %v3644 = vpop.xlane.xlu0 %3643
        %3645 = vadd.xlane.f32.xlu0 %v3562
        %v3646 = vpop.xlane.xlu0 %3645
        %v3647 = vadd.f32 %v3563, %v3592
        %v3648 = vadd.f32 %v3564, %v3594
        %v3649 = vadd.f32 %v3565, %v3596
        %v3650 = vadd.f32 %v3566, %v3598
        %v3651 = vadd.f32 %v3567, %v3600
        %v3652 = vadd.f32 %v3568, %v3602
        %v3653 = vadd.f32 %v3569, %v3604
        %v3654 = vadd.f32 %v3570, %v3606
        %v3655 = vadd.f32 %v3571, %v3608
        %v3656 = vadd.f32 %v3572, %v3610
        %v3657 = vadd.f32 %v3573, %v3612
        %v3658 = vadd.f32 %v3574, %v3614
        %v3659 = vadd.f32 %v3575, %v3616
        %v3660 = vadd.f32 %v3576, %v3618
        %v3661 = vadd.f32 %v3577, %v3620
        %v3662 = vadd.f32 %v3578, %v3622
        %v3663 = vadd.f32 %v3579, %v3624
        %v3664 = vadd.f32 %v3580, %v3626
        %v3665 = vadd.f32 %v3581, %v3628
        %v3666 = vadd.f32 %v3582, %v3630
        %v3667 = vadd.f32 %v3583, %v3632
        %v3668 = vadd.f32 %v3584, %v3634
        %v3669 = vadd.f32 %v3585, %v3636
        %v3670 = vadd.f32 %v3586, %v3638
        %v3671 = vadd.f32 %v3587, %v3640
        %v3672 = vadd.f32 %v3588, %v3642
        %v3673 = vadd.f32 %v3589, %v3644
        %v3674 = vadd.f32 %v3590, %v3646
        %vm3675 = vcmask 7168
        %3676 = vst.msk [vmem:[%s3] sm:$0xff] %vm3675, %v3647
        %3677 = vst.msk [vmem:[%s3 + $0x8] sm:$0xff] %vm3675, %v3648
        %3678 = vst.msk [vmem:[%s3 + $0x10] sm:$0xff] %vm3675, %v3649
        %3679 = vst.msk [vmem:[%s3 + $0x18] sm:$0xff] %vm3675, %v3650
        %3680 = vst.msk [vmem:[%s3 + $0x20] sm:$0xff] %vm3675, %v3651
        %3681 = vst.msk [vmem:[%s3 + $0x28] sm:$0xff] %vm3675, %v3652
        %3682 = vst.msk [vmem:[%s3 + $0x30] sm:$0xff] %vm3675, %v3653
        %3683 = vst.msk [vmem:[%s3 + $0x38] sm:$0xff] %vm3675, %v3654
        %3684 = vst.msk [vmem:[%s3 + $0x40] sm:$0xff] %vm3675, %v3655
        %3685 = vst.msk [vmem:[%s3 + $0x48] sm:$0xff] %vm3675, %v3656
        %3686 = vst.msk [vmem:[%s3 + $0x50] sm:$0xff] %vm3675, %v3657
        %3687 = vst.msk [vmem:[%s3 + $0x58] sm:$0xff] %vm3675, %v3658
        %3688 = vst.msk [vmem:[%s3 + $0x60] sm:$0xff] %vm3675, %v3659
        %3689 = vst.msk [vmem:[%s3 + $0x68] sm:$0xff] %vm3675, %v3660
        %3690 = vst.msk [vmem:[%s3 + $0x70] sm:$0xff] %vm3675, %v3661
        %3691 = vst.msk [vmem:[%s3 + $0x78] sm:$0xff] %vm3675, %v3662
        %3692 = vst.msk [vmem:[%s3 + $0x80] sm:$0xff] %vm3675, %v3663
        %3693 = vst.msk [vmem:[%s3 + $0x88] sm:$0xff] %vm3675, %v3664
        %3694 = vst.msk [vmem:[%s3 + $0x90] sm:$0xff] %vm3675, %v3665
        %3695 = vst.msk [vmem:[%s3 + $0x98] sm:$0xff] %vm3675, %v3666
        %3696 = vst.msk [vmem:[%s3 + $0xa0] sm:$0xff] %vm3675, %v3667
        %3697 = vst.msk [vmem:[%s3 + $0xa8] sm:$0xff] %vm3675, %v3668
        %3698 = vst.msk [vmem:[%s3 + $0xb0] sm:$0xff] %vm3675, %v3669
        %3699 = vst.msk [vmem:[%s3 + $0xb8] sm:$0xff] %vm3675, %v3670
        %3700 = vst.msk [vmem:[%s3 + $0xc0] sm:$0xff] %vm3675, %v3671
        %3701 = vst.msk [vmem:[%s3 + $0xc8] sm:$0xff] %vm3675, %v3672
        %3702 = vst.msk [vmem:[%s3 + $0xd0] sm:$0xff] %vm3675, %v3673
        %3703 = vst.msk [vmem:[%s3 + $0xd8] sm:$0xff] %vm3675, %v3674
        %v3704 = vld [vmem:[%s4] sm:$0xff]
        %v3705 = vld [vmem:[%s4 + $0x8] sm:$0xff]
        %v3706 = vld [vmem:[%s4 + $0x10] sm:$0xff]
        %v3707 = vld [vmem:[%s4 + $0x18] sm:$0xff]
        %v3708 = vld [vmem:[%s4 + $0x20] sm:$0xff]
        %v3709 = vld [vmem:[%s4 + $0x28] sm:$0xff]
        %v3710 = vld [vmem:[%s4 + $0x30] sm:$0xff]
        %v3711 = vld [vmem:[%s4 + $0x38] sm:$0xff]
        %v3712 = vld [vmem:[%s4 + $0x40] sm:$0xff]
        %v3713 = vld [vmem:[%s4 + $0x48] sm:$0xff]
        %v3714 = vld [vmem:[%s4 + $0x50] sm:$0xff]
        %v3715 = vld [vmem:[%s4 + $0x58] sm:$0xff]
        %v3716 = vld [vmem:[%s4 + $0x60] sm:$0xff]
        %v3717 = vld [vmem:[%s4 + $0x68] sm:$0xff]
        %v3718 = vld [vmem:[%s4 + $0x70] sm:$0xff]
        %v3719 = vld [vmem:[%s4 + $0x78] sm:$0xff]
        %v3720 = vld [vmem:[%s4 + $0x80] sm:$0xff]
        %v3721 = vld [vmem:[%s4 + $0x88] sm:$0xff]
        %v3722 = vld [vmem:[%s4 + $0x90] sm:$0xff]
        %v3723 = vld [vmem:[%s4 + $0x98] sm:$0xff]
        %v3724 = vld [vmem:[%s4 + $0xa0] sm:$0xff]
        %v3725 = vld [vmem:[%s4 + $0xa8] sm:$0xff]
        %v3726 = vld [vmem:[%s4 + $0xb0] sm:$0xff]
        %v3727 = vld [vmem:[%s4 + $0xb8] sm:$0xff]
        %v3728 = vld [vmem:[%s4 + $0xc0] sm:$0xff]
        %v3729 = vld [vmem:[%s4 + $0xc8] sm:$0xff]
        %v3730 = vld [vmem:[%s4 + $0xd0] sm:$0xff]
        %v3731 = vld [vmem:[%s4 + $0xd8] sm:$0xff]
        %v3732 = vmul.f32 %v3535, %v3535
        %v3733 = vmul.f32 %v3536, %v3536
        %v3734 = vmul.f32 %v3537, %v3537
        %v3735 = vmul.f32 %v3538, %v3538
        %v3736 = vmul.f32 %v3539, %v3539
        %v3737 = vmul.f32 %v3540, %v3540
        %v3738 = vmul.f32 %v3541, %v3541
        %v3739 = vmul.f32 %v3542, %v3542
        %v3740 = vmul.f32 %v3543, %v3543
        %v3741 = vmul.f32 %v3544, %v3544
        %v3742 = vmul.f32 %v3545, %v3545
        %v3743 = vmul.f32 %v3546, %v3546
        %v3744 = vmul.f32 %v3547, %v3547
        %v3745 = vmul.f32 %v3548, %v3548
        %v3746 = vmul.f32 %v3549, %v3549
        %v3747 = vmul.f32 %v3550, %v3550
        %v3748 = vmul.f32 %v3551, %v3551
        %v3749 = vmul.f32 %v3552, %v3552
        %v3750 = vmul.f32 %v3553, %v3553
        %v3751 = vmul.f32 %v3554, %v3554
        %v3752 = vmul.f32 %v3555, %v3555
        %v3753 = vmul.f32 %v3556, %v3556
        %v3754 = vmul.f32 %v3557, %v3557
        %v3755 = vmul.f32 %v3558, %v3558
        %v3756 = vmul.f32 %v3559, %v3559
        %v3757 = vmul.f32 %v3560, %v3560
        %v3758 = vmul.f32 %v3561, %v3561
        %v3759 = vmul.f32 %v3562, %v3562
        %3760 = vadd.xlane.f32.xlu0 %v3732
        %v3761 = vpop.xlane.xlu0 %3760
        %3762 = vadd.xlane.f32.xlu0 %v3733
        %v3763 = vpop.xlane.xlu0 %3762
        %3764 = vadd.xlane.f32.xlu0 %v3734
        %v3765 = vpop.xlane.xlu0 %3764
        %3766 = vadd.xlane.f32.xlu0 %v3735
        %v3767 = vpop.xlane.xlu0 %3766
        %3768 = vadd.xlane.f32.xlu0 %v3736
        %v3769 = vpop.xlane.xlu0 %3768
        %3770 = vadd.xlane.f32.xlu0 %v3737
        %v3771 = vpop.xlane.xlu0 %3770
        %3772 = vadd.xlane.f32.xlu0 %v3738
        %v3773 = vpop.xlane.xlu0 %3772
        %3774 = vadd.xlane.f32.xlu0 %v3739
        %v3775 = vpop.xlane.xlu0 %3774
        %3776 = vadd.xlane.f32.xlu0 %v3740
        %v3777 = vpop.xlane.xlu0 %3776
        %3778 = vadd.xlane.f32.xlu0 %v3741
        %v3779 = vpop.xlane.xlu0 %3778
        %3780 = vadd.xlane.f32.xlu0 %v3742
        %v3781 = vpop.xlane.xlu0 %3780
        %3782 = vadd.xlane.f32.xlu0 %v3743
        %v3783 = vpop.xlane.xlu0 %3782
        %3784 = vadd.xlane.f32.xlu0 %v3744
        %v3785 = vpop.xlane.xlu0 %3784
        %3786 = vadd.xlane.f32.xlu0 %v3745
        %v3787 = vpop.xlane.xlu0 %3786
        %3788 = vadd.xlane.f32.xlu0 %v3746
        %v3789 = vpop.xlane.xlu0 %3788
        %3790 = vadd.xlane.f32.xlu0 %v3747
        %v3791 = vpop.xlane.xlu0 %3790
        %3792 = vadd.xlane.f32.xlu0 %v3748
        %v3793 = vpop.xlane.xlu0 %3792
        %3794 = vadd.xlane.f32.xlu0 %v3749
        %v3795 = vpop.xlane.xlu0 %3794
        %3796 = vadd.xlane.f32.xlu0 %v3750
        %v3797 = vpop.xlane.xlu0 %3796
        %3798 = vadd.xlane.f32.xlu0 %v3751
        %v3799 = vpop.xlane.xlu0 %3798
        %3800 = vadd.xlane.f32.xlu0 %v3752
        %v3801 = vpop.xlane.xlu0 %3800
        %3802 = vadd.xlane.f32.xlu0 %v3753
        %v3803 = vpop.xlane.xlu0 %3802
        %3804 = vadd.xlane.f32.xlu0 %v3754
        %v3805 = vpop.xlane.xlu0 %3804
        %3806 = vadd.xlane.f32.xlu0 %v3755
        %v3807 = vpop.xlane.xlu0 %3806
        %3808 = vadd.xlane.f32.xlu0 %v3756
        %v3809 = vpop.xlane.xlu0 %3808
        %3810 = vadd.xlane.f32.xlu0 %v3757
        %v3811 = vpop.xlane.xlu0 %3810
        %3812 = vadd.xlane.f32.xlu0 %v3758
        %v3813 = vpop.xlane.xlu0 %3812
        %3814 = vadd.xlane.f32.xlu0 %v3759
        %v3815 = vpop.xlane.xlu0 %3814
        %v3816 = vadd.f32 %v3704, %v3761
        %v3817 = vadd.f32 %v3705, %v3763
        %v3818 = vadd.f32 %v3706, %v3765
        %v3819 = vadd.f32 %v3707, %v3767
        %v3820 = vadd.f32 %v3708, %v3769
        %v3821 = vadd.f32 %v3709, %v3771
        %v3822 = vadd.f32 %v3710, %v3773
        %v3823 = vadd.f32 %v3711, %v3775
        %v3824 = vadd.f32 %v3712, %v3777
        %v3825 = vadd.f32 %v3713, %v3779
        %v3826 = vadd.f32 %v3714, %v3781
        %v3827 = vadd.f32 %v3715, %v3783
        %v3828 = vadd.f32 %v3716, %v3785
        %v3829 = vadd.f32 %v3717, %v3787
        %v3830 = vadd.f32 %v3718, %v3789
        %v3831 = vadd.f32 %v3719, %v3791
        %v3832 = vadd.f32 %v3720, %v3793
        %v3833 = vadd.f32 %v3721, %v3795
        %v3834 = vadd.f32 %v3722, %v3797
        %v3835 = vadd.f32 %v3723, %v3799
        %v3836 = vadd.f32 %v3724, %v3801
        %v3837 = vadd.f32 %v3725, %v3803
        %v3838 = vadd.f32 %v3726, %v3805
        %v3839 = vadd.f32 %v3727, %v3807
        %v3840 = vadd.f32 %v3728, %v3809
        %v3841 = vadd.f32 %v3729, %v3811
        %v3842 = vadd.f32 %v3730, %v3813
        %v3843 = vadd.f32 %v3731, %v3815
        %3844 = vst.msk [vmem:[%s4] sm:$0xff] %vm3675, %v3816
        %3845 = vst.msk [vmem:[%s4 + $0x8] sm:$0xff] %vm3675, %v3817
        %3846 = vst.msk [vmem:[%s4 + $0x10] sm:$0xff] %vm3675, %v3818
        %3847 = vst.msk [vmem:[%s4 + $0x18] sm:$0xff] %vm3675, %v3819
        %3848 = vst.msk [vmem:[%s4 + $0x20] sm:$0xff] %vm3675, %v3820
        %3849 = vst.msk [vmem:[%s4 + $0x28] sm:$0xff] %vm3675, %v3821
        %3850 = vst.msk [vmem:[%s4 + $0x30] sm:$0xff] %vm3675, %v3822
        %3851 = vst.msk [vmem:[%s4 + $0x38] sm:$0xff] %vm3675, %v3823
        %3852 = vst.msk [vmem:[%s4 + $0x40] sm:$0xff] %vm3675, %v3824
        %3853 = vst.msk [vmem:[%s4 + $0x48] sm:$0xff] %vm3675, %v3825
        %3854 = vst.msk [vmem:[%s4 + $0x50] sm:$0xff] %vm3675, %v3826
        %3855 = vst.msk [vmem:[%s4 + $0x58] sm:$0xff] %vm3675, %v3827
        %3856 = vst.msk [vmem:[%s4 + $0x60] sm:$0xff] %vm3675, %v3828
        %3857 = vst.msk [vmem:[%s4 + $0x68] sm:$0xff] %vm3675, %v3829
        %3858 = vst.msk [vmem:[%s4 + $0x70] sm:$0xff] %vm3675, %v3830
        %3859 = vst.msk [vmem:[%s4 + $0x78] sm:$0xff] %vm3675, %v3831
        %3860 = vst.msk [vmem:[%s4 + $0x80] sm:$0xff] %vm3675, %v3832
        %3861 = vst.msk [vmem:[%s4 + $0x88] sm:$0xff] %vm3675, %v3833
        %3862 = vst.msk [vmem:[%s4 + $0x90] sm:$0xff] %vm3675, %v3834
        %3863 = vst.msk [vmem:[%s4 + $0x98] sm:$0xff] %vm3675, %v3835
        %3864 = vst.msk [vmem:[%s4 + $0xa0] sm:$0xff] %vm3675, %v3836
        %3865 = vst.msk [vmem:[%s4 + $0xa8] sm:$0xff] %vm3675, %v3837
        %3866 = vst.msk [vmem:[%s4 + $0xb0] sm:$0xff] %vm3675, %v3838
        %3867 = vst.msk [vmem:[%s4 + $0xb8] sm:$0xff] %vm3675, %v3839
        %3868 = vst.msk [vmem:[%s4 + $0xc0] sm:$0xff] %vm3675, %v3840
        %3869 = vst.msk [vmem:[%s4 + $0xc8] sm:$0xff] %vm3675, %v3841
        %3870 = vst.msk [vmem:[%s4 + $0xd0] sm:$0xff] %vm3675, %v3842
        %3871 = vst.msk [vmem:[%s4 + $0xd8] sm:$0xff] %vm3675, %v3843
        %s3872 = sand.u32 %s87, 1
        %s3873 = sand.u32 %s87, 1
        %s3874 = smul.addr %s3873, 224
        %s3875 = scalar_lea.vmem [#allocation3], %s3874
        // Predicated region
        $region74: #{conv1x1_bn.2} parent=64 // pred_check
          %p3876 = pneg %p97
        $region75: #{conv1x1_bn.2} parent=64 // pred_check_branch
          %3878 = sbr.rel (%p3876) target = $region77
        $region76: #{conv1x1_bn.2} parent=64 // pred_region
          %s3879 = smul.addr %s20, 56
          %s3880 = sadd.s32 %s21, %s3879
          %s3881 = smul.addr %s3880, 8
          %s3882 = scalar_lea.vmem %s2, %s3881
          // Predicated region
          $region78: #{conv1x1_bn.2} parent=76 // pred_check
            _
          $region79: #{conv1x1_bn.2} parent=76 // pred_check_branch
            %3884 = sbr.rel (0) target = $region81
          $region80: #{conv1x1_bn.2} parent=76 // pred_region
            // Predicated region
            $region82: #{conv1x1_bn.2} parent=80 // pred_check
              _
            $region83: #{conv1x1_bn.2} parent=80 // pred_check_branch
              %3886 = sbr.rel (0) target = $region85
            $region84: #{conv1x1_bn.2} parent=80 // pred_region
              // Predicated region
              $region97: #{conv1x1_bn.2} parent=84 // pred_check
                _
              $region98: #{conv1x1_bn.2} parent=84 // pred_check_branch
                %3955 = sbr.rel (0) target = $region100
              $region99: #{conv1x1_bn.2} parent=84 // pred_region
                loop: start=0, step=1, limit=1
                $region101: #{conv1x1_bn.2} parent=99 // loop_pre_header
                  _
                $region102: #{conv1x1_bn.2} parent=99 // loop_header
                  %s3957 = sphi 0, %s3961
                  %p3958 = scmp.ge.s32.totalorder %s3957, 1
                  %s3962 = sphi %s3875, %s3875
                  %s3963 = sphi %s3882, %s3882
                $region103: #{conv1x1_bn.2} parent=99 // loop_header_branch
                  %3960 = sbr.rel (%p3958) target = $region107
                $region104: #{conv1x1_bn.2} parent=99 // loop_body
                  %v3964 = vld [vmem:[%s3962] sm:$0xff]
                  %3965 = vst [vmem:[%s3963] sm:$0xff] %v3964
                  %v3966 = vld [vmem:[%s3962 + $0x8] sm:$0xff]
                  %3967 = vst [vmem:[%s3963 + $0x10] sm:$0xff] %v3966
                  %v3968 = vld [vmem:[%s3962 + $0x10] sm:$0xff]
                  %3969 = vst [vmem:[%s3963 + $0x20] sm:$0xff] %v3968
                  %v3970 = vld [vmem:[%s3962 + $0x18] sm:$0xff]
                  %3971 = vst [vmem:[%s3963 + $0x30] sm:$0xff] %v3970
                  %v3972 = vld [vmem:[%s3962 + $0x20] sm:$0xff]
                  %3973 = vst [vmem:[%s3963 + $0x40] sm:$0xff] %v3972
                  %v3974 = vld [vmem:[%s3962 + $0x28] sm:$0xff]
                  %3975 = vst [vmem:[%s3963 + $0x50] sm:$0xff] %v3974
                  %v3976 = vld [vmem:[%s3962 + $0x30] sm:$0xff]
                  %3977 = vst [vmem:[%s3963 + $0x60] sm:$0xff] %v3976
                  %v3978 = vld [vmem:[%s3962 + $0x38] sm:$0xff]
                  %3979 = vst [vmem:[%s3963 + $0x70] sm:$0xff] %v3978
                  %v3980 = vld [vmem:[%s3962 + $0x40] sm:$0xff]
                  %3981 = vst [vmem:[%s3963 + $0x80] sm:$0xff] %v3980
                  %v3982 = vld [vmem:[%s3962 + $0x48] sm:$0xff]
                  %3983 = vst [vmem:[%s3963 + $0x90] sm:$0xff] %v3982
                  %v3984 = vld [vmem:[%s3962 + $0x50] sm:$0xff]
                  %3985 = vst [vmem:[%s3963 + $0xa0] sm:$0xff] %v3984
                  %v3986 = vld [vmem:[%s3962 + $0x58] sm:$0xff]
                  %3987 = vst [vmem:[%s3963 + $0xb0] sm:$0xff] %v3986
                  %v3988 = vld [vmem:[%s3962 + $0x60] sm:$0xff]
                  %3989 = vst [vmem:[%s3963 + $0xc0] sm:$0xff] %v3988
                  %v3990 = vld [vmem:[%s3962 + $0x68] sm:$0xff]
                  %3991 = vst [vmem:[%s3963 + $0xd0] sm:$0xff] %v3990
                  %v3992 = vld [vmem:[%s3962 + $0x70] sm:$0xff]
                  %3993 = vst [vmem:[%s3963 + $0xe0] sm:$0xff] %v3992
                  %v3994 = vld [vmem:[%s3962 + $0x78] sm:$0xff]
                  %3995 = vst [vmem:[%s3963 + $0xf0] sm:$0xff] %v3994
                  %v3996 = vld [vmem:[%s3962 + $0x80] sm:$0xff]
                  %3997 = vst [vmem:[%s3963 + $0x100] sm:$0xff] %v3996
                  %v3998 = vld [vmem:[%s3962 + $0x88] sm:$0xff]
                  %3999 = vst [vmem:[%s3963 + $0x110] sm:$0xff] %v3998
                  %v4000 = vld [vmem:[%s3962 + $0x90] sm:$0xff]
                  %4001 = vst [vmem:[%s3963 + $0x120] sm:$0xff] %v4000
                  %v4002 = vld [vmem:[%s3962 + $0x98] sm:$0xff]
                  %4003 = vst [vmem:[%s3963 + $0x130] sm:$0xff] %v4002
                  %v4004 = vld [vmem:[%s3962 + $0xa0] sm:$0xff]
                  %4005 = vst [vmem:[%s3963 + $0x140] sm:$0xff] %v4004
                  %v4006 = vld [vmem:[%s3962 + $0xa8] sm:$0xff]
                  %4007 = vst [vmem:[%s3963 + $0x150] sm:$0xff] %v4006
                  %v4008 = vld [vmem:[%s3962 + $0xb0] sm:$0xff]
                  %4009 = vst [vmem:[%s3963 + $0x160] sm:$0xff] %v4008
                  %v4010 = vld [vmem:[%s3962 + $0xb8] sm:$0xff]
                  %4011 = vst [vmem:[%s3963 + $0x170] sm:$0xff] %v4010
                  %v4012 = vld [vmem:[%s3962 + $0xc0] sm:$0xff]
                  %4013 = vst [vmem:[%s3963 + $0x180] sm:$0xff] %v4012
                  %v4014 = vld [vmem:[%s3962 + $0xc8] sm:$0xff]
                  %4015 = vst [vmem:[%s3963 + $0x190] sm:$0xff] %v4014
                  %v4016 = vld [vmem:[%s3962 + $0xd0] sm:$0xff]
                  %4017 = vst [vmem:[%s3963 + $0x1a0] sm:$0xff] %v4016
                  %v4018 = vld [vmem:[%s3962 + $0xd8] sm:$0xff]
                  %4019 = vst [vmem:[%s3963 + $0x1b0] sm:$0xff] %v4018
                $region105: #{conv1x1_bn.2} parent=99 // loop_footer
                  %s3961 = sadd.s32 1, %s3957
                $region106: #{conv1x1_bn.2} parent=99 // loop_footer_branch
                  %3956 = sbr.rel target = $region102
                $region107: #{conv1x1_bn.2} parent=99 // loop_exit
                  _
              $region100: #{conv1x1_bn.2} parent=84 // pred_fallthru
                _
              // Predicated region
              $region108: #{conv1x1_bn.2} parent=84 // pred_check
                _
              $region109: #{conv1x1_bn.2} parent=84 // pred_check_branch
                %4021 = sbr.rel target = $region111
              $region110: #{conv1x1_bn.2} parent=84 // pred_region
                _
              $region111: #{conv1x1_bn.2} parent=84 // pred_fallthru
                _
            $region85: #{conv1x1_bn.2} parent=80 // pred_fallthru
              _
            // Predicated region
            $region86: #{conv1x1_bn.2} parent=80 // pred_check
              _
            $region87: #{conv1x1_bn.2} parent=80 // pred_check_branch
              %3888 = sbr.rel target = $region89
            $region88: #{conv1x1_bn.2} parent=80 // pred_region
              loop: start=0, step=1, limit=1
              $region90: #{conv1x1_bn.2} parent=88 // loop_pre_header
                _
              $region91: #{conv1x1_bn.2} parent=88 // loop_header
                %s3891 = sphi 0, %s3895
                %p3892 = scmp.ge.s32.totalorder %s3891, 1
                %s3896 = sphi %s3875, %s3875
                %s3897 = sphi %s3882, %s3882
              $region92: #{conv1x1_bn.2} parent=88 // loop_header_branch
                %3894 = sbr.rel (%p3892) target = $region96
              $region93: #{conv1x1_bn.2} parent=88 // loop_body
                %v3898 = vld [vmem:[%s3896] sm:$0xff]
                %3899 = vst [vmem:[%s3897] sm:$0xff] %v3898
                %v3900 = vld [vmem:[%s3896 + $0x8] sm:$0xff]
                %3901 = vst [vmem:[%s3897 + $0x10] sm:$0xff] %v3900
                %v3902 = vld [vmem:[%s3896 + $0x10] sm:$0xff]
                %3903 = vst [vmem:[%s3897 + $0x20] sm:$0xff] %v3902
                %v3904 = vld [vmem:[%s3896 + $0x18] sm:$0xff]
                %3905 = vst [vmem:[%s3897 + $0x30] sm:$0xff] %v3904
                %v3906 = vld [vmem:[%s3896 + $0x20] sm:$0xff]
                %3907 = vst [vmem:[%s3897 + $0x40] sm:$0xff] %v3906
                %v3908 = vld [vmem:[%s3896 + $0x28] sm:$0xff]
                %3909 = vst [vmem:[%s3897 + $0x50] sm:$0xff] %v3908
                %v3910 = vld [vmem:[%s3896 + $0x30] sm:$0xff]
                %3911 = vst [vmem:[%s3897 + $0x60] sm:$0xff] %v3910
                %v3912 = vld [vmem:[%s3896 + $0x38] sm:$0xff]
                %3913 = vst [vmem:[%s3897 + $0x70] sm:$0xff] %v3912
                %v3914 = vld [vmem:[%s3896 + $0x40] sm:$0xff]
                %3915 = vst [vmem:[%s3897 + $0x80] sm:$0xff] %v3914
                %v3916 = vld [vmem:[%s3896 + $0x48] sm:$0xff]
                %3917 = vst [vmem:[%s3897 + $0x90] sm:$0xff] %v3916
                %v3918 = vld [vmem:[%s3896 + $0x50] sm:$0xff]
                %3919 = vst [vmem:[%s3897 + $0xa0] sm:$0xff] %v3918
                %v3920 = vld [vmem:[%s3896 + $0x58] sm:$0xff]
                %3921 = vst [vmem:[%s3897 + $0xb0] sm:$0xff] %v3920
                %v3922 = vld [vmem:[%s3896 + $0x60] sm:$0xff]
                %3923 = vst [vmem:[%s3897 + $0xc0] sm:$0xff] %v3922
                %v3924 = vld [vmem:[%s3896 + $0x68] sm:$0xff]
                %3925 = vst [vmem:[%s3897 + $0xd0] sm:$0xff] %v3924
                %v3926 = vld [vmem:[%s3896 + $0x70] sm:$0xff]
                %3927 = vst [vmem:[%s3897 + $0xe0] sm:$0xff] %v3926
                %v3928 = vld [vmem:[%s3896 + $0x78] sm:$0xff]
                %3929 = vst [vmem:[%s3897 + $0xf0] sm:$0xff] %v3928
                %v3930 = vld [vmem:[%s3896 + $0x80] sm:$0xff]
                %3931 = vst [vmem:[%s3897 + $0x100] sm:$0xff] %v3930
                %v3932 = vld [vmem:[%s3896 + $0x88] sm:$0xff]
                %3933 = vst [vmem:[%s3897 + $0x110] sm:$0xff] %v3932
                %v3934 = vld [vmem:[%s3896 + $0x90] sm:$0xff]
                %3935 = vst [vmem:[%s3897 + $0x120] sm:$0xff] %v3934
                %v3936 = vld [vmem:[%s3896 + $0x98] sm:$0xff]
                %3937 = vst [vmem:[%s3897 + $0x130] sm:$0xff] %v3936
                %v3938 = vld [vmem:[%s3896 + $0xa0] sm:$0xff]
                %3939 = vst [vmem:[%s3897 + $0x140] sm:$0xff] %v3938
                %v3940 = vld [vmem:[%s3896 + $0xa8] sm:$0xff]
                %3941 = vst [vmem:[%s3897 + $0x150] sm:$0xff] %v3940
                %v3942 = vld [vmem:[%s3896 + $0xb0] sm:$0xff]
                %3943 = vst [vmem:[%s3897 + $0x160] sm:$0xff] %v3942
                %v3944 = vld [vmem:[%s3896 + $0xb8] sm:$0xff]
                %3945 = vst [vmem:[%s3897 + $0x170] sm:$0xff] %v3944
                %v3946 = vld [vmem:[%s3896 + $0xc0] sm:$0xff]
                %3947 = vst [vmem:[%s3897 + $0x180] sm:$0xff] %v3946
                %v3948 = vld [vmem:[%s3896 + $0xc8] sm:$0xff]
                %3949 = vst [vmem:[%s3897 + $0x190] sm:$0xff] %v3948
                %v3950 = vld [vmem:[%s3896 + $0xd0] sm:$0xff]
                %3951 = vst [vmem:[%s3897 + $0x1a0] sm:$0xff] %v3950
                %v3952 = vld [vmem:[%s3896 + $0xd8] sm:$0xff]
                %3953 = vst [vmem:[%s3897 + $0x1b0] sm:$0xff] %v3952
              $region94: #{conv1x1_bn.2} parent=88 // loop_footer
                %s3895 = sadd.s32 1, %s3891
              $region95: #{conv1x1_bn.2} parent=88 // loop_footer_branch
                %3890 = sbr.rel target = $region91
              $region96: #{conv1x1_bn.2} parent=88 // loop_exit
                _
            $region89: #{conv1x1_bn.2} parent=80 // pred_fallthru
              _
          $region81: #{conv1x1_bn.2} parent=76 // pred_fallthru
            _
          %4022 = vnop
        $region77: #{conv1x1_bn.2} parent=64 // pred_fallthru
          _
        // Predicated region
        $region112: #{conv1x1_bn.2} parent=64 // pred_check
          %p4023 = pneg %p118
        $region113: #{conv1x1_bn.2} parent=64 // pred_check_branch
          %4025 = sbr.rel (%p4023) target = $region115
        $region114: #{conv1x1_bn.2} parent=64 // pred_region
          _
        $region115: #{conv1x1_bn.2} parent=64 // pred_fallthru
          _
        // Predicated region
        $region116: #{conv1x1_bn.2} parent=64 // pred_check
          %p4026 = pneg %p139
        $region117: #{conv1x1_bn.2} parent=64 // pred_check_branch
          %4028 = sbr.rel (%p4026) target = $region119
        $region118: #{conv1x1_bn.2} parent=64 // pred_region
          _
        $region119: #{conv1x1_bn.2} parent=64 // pred_fallthru
          _
        // Predicated region
        $region120: #{conv1x1_bn.2} parent=64 // pred_check
          %p4029 = pneg %p118
        $region121: #{conv1x1_bn.2} parent=64 // pred_check_branch
          %4031 = sbr.rel (%p4029) target = $region123
        $region122: #{conv1x1_bn.2} parent=64 // pred_region
          _
        $region123: #{conv1x1_bn.2} parent=64 // pred_fallthru
          _
        // Predicated region
        $region124: #{conv1x1_bn.2} parent=64 // pred_check
          %p4032 = pneg %p139
        $region125: #{conv1x1_bn.2} parent=64 // pred_check_branch
          %4034 = sbr.rel (%p4032) target = $region127
        $region126: #{conv1x1_bn.2} parent=64 // pred_region
          _
        $region127: #{conv1x1_bn.2} parent=64 // pred_fallthru
          _
      $region65: #{conv1x1_bn.2} parent=5 // pred_fallthru
        _
      %p4035 = scmp.le.s32.totalorder 2, %s11
      // Predicated region
      $region128: #{conv1x1_bn.2} parent=5 // pred_check
        %p4036 = pneg %p4035
      $region129: #{conv1x1_bn.2} parent=5 // pred_check_branch
        %4038 = sbr.rel (%p4036) target = $region131
      $region130: #{conv1x1_bn.2} parent=5 // pred_region
        %s4039 = ssub.s32 %s11, 2
        // Predicated region
        $region132: #{conv1x1_bn.2} parent=130 // pred_check
          %p4040 = pneg %p103
        $region133: #{conv1x1_bn.2} parent=130 // pred_check_branch
          %4042 = sbr.rel (%p4040) target = $region135
        $region134: #{conv1x1_bn.2} parent=130 // pred_region
          %s4043 = sand.u32 %s88, 1
          %s4044 = sand.u32 %s88, 1
          %s4045 = smul.addr %s4044, 224
          %s4046 = scalar_lea.vmem [#allocation3], %s4045
        $region135: #{conv1x1_bn.2} parent=130 // pred_fallthru
          _
      $region131: #{conv1x1_bn.2} parent=5 // pred_fallthru
        _
    $region6: #{conv1x1_bn.2} parent=1 // loop_footer
      %s15 = sadd.s32 1, %s11
    $region7: #{conv1x1_bn.2} parent=1 // loop_footer_branch
      %10 = sbr.rel target = $region3
    $region8: #{conv1x1_bn.2} parent=1 // loop_exit
      _

</llo_original>
